<compile_context>
chip_gen: v7x
topology: tpu7x:2x2x1
jax: 0.10.0
libtpu: 0.0.40
codegen_flags: <defaults>
</compile_context>

<pallas_src>
import jax
import jax.numpy as jnp
import numpy as np
from jax.experimental import pallas as pl
from jax.experimental.pallas import tpu as pltpu


# --------------------------------------------------------------------------
# Kernel
# --------------------------------------------------------------------------
def _bottleneck_kernel(xm_ref, xt_ref, xb_ref,
                       w1_ref, b1_ref, w2_ref, b2_ref, w3_ref, b3_ref,
                       o_ref, h1_ref, col_ref):
    j = pl.program_id(1)
    n_row_tiles = pl.num_programs(1)

    _, TH, W, Cin = xm_ref.shape
    P = w1_ref.shape[1]
    Cout = w3_ref.shape[1]

    w1 = w1_ref[...]
    b1 = b1_ref[...]

    # ---- conv1 (1x1, BN scale folded into w1) + bias + ReLU on main rows ----
    xm = xm_ref[...].reshape(TH * W, Cin)                      # bf16
    h1m = jnp.dot(xm, w1, preferred_element_type=jnp.float32) + b1
    h1m = jnp.maximum(h1m, 0.0).astype(h1_ref.dtype)

    # conv1 on the 1-row halo neighbours.  At the true image top/bottom the
    # halo must equal conv2's zero padding of the post-ReLU h1, so it is
    # zeroed there (the clamped row fetched by the index_map is discarded).
    xt = xt_ref[...].reshape(W, Cin)
    xb = xb_ref[...].reshape(W, Cin)
    ht = jnp.maximum(jnp.dot(xt, w1, preferred_element_type=jnp.float32) + b1, 0.0)
    hb = jnp.maximum(jnp.dot(xb, w1, preferred_element_type=jnp.float32) + b1, 0.0)
    ht = jnp.where(j == 0, 0.0, ht).astype(h1_ref.dtype)
    hb = jnp.where(j == n_row_tiles - 1, 0.0, hb).astype(h1_ref.dtype)

    # ---- stage h1 into (TH+2, W+2, P) with zeroed border columns ----
    zero_col = jnp.zeros((TH + 2, 1, P), h1_ref.dtype)
    h1_ref[pl.ds(0, TH + 2), pl.ds(0, 1), :] = zero_col
    h1_ref[pl.ds(0, TH + 2), pl.ds(W + 1, 1), :] = zero_col
    h1_ref[pl.ds(1, TH), pl.ds(1, W), :] = h1m.reshape(TH, W, P)
    h1_ref[pl.ds(0, 1), pl.ds(1, W), :] = ht.reshape(1, W, P)
    h1_ref[pl.ds(TH + 1, 1), pl.ds(1, W), :] = hb.reshape(1, W, P)

    # ---- conv2 (3x3, pad 1, BN folded) as one im2col matmul, K = 9*P ----
    for dy in range(3):
        for dx in range(3):
            tap = dy * 3 + dx
            v = h1_ref[pl.ds(dy, TH), pl.ds(dx, W), :]
            col_ref[:, pl.ds(tap * P, P)] = v.reshape(TH * W, P)
    h2 = jnp.dot(col_ref[...], w2_ref[...], preferred_element_type=jnp.float32)
    h2 = jnp.maximum(h2 + b2_ref[...], 0.0).astype(jnp.bfloat16)

    # ---- conv3 (1x1, BN folded) + bias, identity residual, ReLU ----
    h3 = jnp.dot(h2, w3_ref[...], preferred_element_type=jnp.float32) + b3_ref[...]
    out = jnp.maximum(h3 + xm.astype(jnp.float32), 0.0)
    o_ref[...] = out.reshape(1, TH, W, Cout)


# --------------------------------------------------------------------------
# Parameter prep
# --------------------------------------------------------------------------
def _fold_bn(gamma, beta, mean, var, eps=1e-5):
    scale = gamma / jnp.sqrt(var + eps)
    bias = beta - mean * scale
    return (scale.reshape(1, -1).astype(jnp.float32),
            bias.reshape(1, -1).astype(jnp.float32))


def _fold_and_cast(params, mxu_dtype=jnp.bfloat16):
    """Fold BN scales into conv weights and cast matmul operands to bf16."""
    w1, s1, b1, w2, s2, b2, w3, s3, b3 = params
    P = w1.shape[1]
    w1f = (w1 * s1).astype(mxu_dtype)                     # (Cin, P)
    w2f = (w2 * s2.reshape(1, 1, P)).astype(mxu_dtype)    # (9, P, P)
    w2f = w2f.reshape(9 * P, P)                           # K index = tap*P + cin
    w3f = (w3 * s3).astype(mxu_dtype)                     # (P, 4P)
    return (w1f, b1.astype(jnp.float32), w2f, b2.astype(jnp.float32),
            w3f, b3.astype(jnp.float32))


def _pick_row_tile(H, W, Cin, P, Cout, budget_bytes=20 << 20):
    """Largest row tile (divisor of H) whose per-step VMEM estimate fits the
    budget; prefers >=2 row tiles (keeps both v7x TensorCores busy at N=1)."""
    def est(th):
        b2, f4 = 2, 4
        m = th * W
        x_in = 2 * m * Cin * b2                   # main block, double buffered
        halo = 2 * 2 * W * Cin * b2               # 1-row halos, double buffered
        out_b = 2 * m * Cout * f4                 # output block, double buffered
        h1 = (th + 2) * (W + 2) * P * b2          # scratch (staged h1)
        col = m * 9 * P * b2                      # scratch (im2col)
        live = m * (3 * P + 2 * Cout) * f4        # f32 temporaries headroom
        wts = 2 * ((Cin * P + 9 * P * P + P * Cout) * b2 + (2 * P + Cout) * f4)
        return x_in + halo + out_b + h1 + col + live + wts

    divs = [d for d in range(1, H + 1) if H % d == 0]
    fitting = [d for d in divs if d <= 64 and est(d) <= budget_bytes] or [1]
    multi = [d for d in fitting if H // d >= 2]
    th = max(multi) if (multi and 2 * max(multi) >= max(fitting)) else max(fitting)
    return th, est(th)


# --------------------------------------------------------------------------
# Wrappers
# --------------------------------------------------------------------------
@jax.jit
def bottleneck_forward_nhwc(x_nhwc, params):
    """Preferred entry point: x is (N, H, W, Cin); returns (N, H, W, Cin) f32."""
    N, H, W, Cin = x_nhwc.shape
    w1f, b1, w2f, b2, w3f, b3 = _fold_and_cast(params)
    P = w1f.shape[1]
    Cout = w3f.shape[1]
    assert Cout == Cin, "identity residual requires inplanes == planes * 4"

    TH, vmem_est = _pick_row_tile(H, W, Cin, P, Cout)
    n_row_tiles = H // TH
    x16 = x_nhwc.astype(jnp.bfloat16)

    def const_spec(a):
        return pl.BlockSpec(a.shape, lambda n, j: (0,) * a.ndim)

    in_specs = [
        # TH-row main band of one image
        pl.BlockSpec((1, TH, W, Cin), lambda n, j: (n, j, 0, 0)),
        # 1-row halo above / below the band (row index clamped at the edges;
        # the kernel zeroes their h1 there -> conv2 zero padding).
        pl.BlockSpec((1, 1, W, Cin),
                     lambda n, j: (n, jnp.maximum(j * TH - 1, 0), 0, 0)),
        pl.BlockSpec((1, 1, W, Cin),
                     lambda n, j: (n, jnp.minimum(j * TH + TH, H - 1), 0, 0)),
        const_spec(w1f), const_spec(b1),
        const_spec(w2f), const_spec(b2),
        const_spec(w3f), const_spec(b3),
    ]

    return pl.pallas_call(
        _bottleneck_kernel,
        out_shape=jax.ShapeDtypeStruct((N, H, W, Cout), jnp.float32),
        grid=(N, n_row_tiles),
        in_specs=in_specs,
        out_specs=pl.BlockSpec((1, TH, W, Cout), lambda n, j: (n, j, 0, 0)),
        scratch_shapes=[
            pltpu.VMEM((TH + 2, W + 2, P), jnp.bfloat16),   # staged h1 (+halo)
            pltpu.VMEM((TH * W, 9 * P), jnp.bfloat16),      # im2col buffer
        ],
        compiler_params=pltpu.CompilerParams(
            dimension_semantics=("parallel", "parallel"),
            vmem_limit_bytes=int(min(2 * vmem_est + (8 << 20), 48 << 20))),
    )(x16, x16, x16, w1f, b1, w2f, b2, w3f, b3)


@jax.jit
def bottleneck_forward(x_nchw, params):
    """NCHW wrapper for PyTorch interface parity.  Prefer the NHWC entry point:
    each transpose here is an extra full HBM pass over the activation."""
    x = jnp.transpose(x_nchw, (0, 2, 3, 1))
    y = bottleneck_forward_nhwc(x, params)
    return jnp.transpose(y, (0, 3, 1, 2))


# --------------------------------------------------------------------------
# Synthetic params + reference
# --------------------------------------------------------------------------
def make_params(key, inplanes, planes):
    """Synthetic weights mirroring the PyTorch layer shapes, stored
    matmul-friendly: w1 (Cin,P), w2 (9,P,P) indexed dy*3+dx, w3 (P,4P)."""
    exp = 4
    k = jax.random.split(key, 6)
    w1 = jax.random.normal(k[0], (inplanes, planes), jnp.float32) * 0.1
    w2 = jax.random.normal(k[1], (9, planes, planes), jnp.float32) * 0.1
    w3 = jax.random.normal(k[2], (planes, planes * exp), jnp.float32) * 0.1

    def bn(ki, c):
        kk = jax.random.split(ki, 4)
        g = 1.0 + 0.1 * jax.random.normal(kk[0], (c,), jnp.float32)
        b = 0.1 * jax.random.normal(kk[1], (c,), jnp.float32)
        m = 0.1 * jax.random.normal(kk[2], (c,), jnp.float32)
        v = jnp.abs(1.0 + 0.1 * jax.random.normal(kk[3], (c,), jnp.float32))
        return _fold_bn(g, b, m, v)

    s1, b1 = bn(k[3], planes)
    s2, b2 = bn(k[4], planes)
    s3, b3 = bn(k[5], planes * exp)
    return (w1, s1, b1, w2, s2, b2, w3, s3, b3)


def reference_forward_nhwc(x_nhwc, params):
    """Pure-JAX reference (lax.conv, NHWC) mirroring the kernel's bf16
    quantization points so the comparison is tight."""
    w1f, b1, w2f, b2, w3f, b3 = _fold_and_cast(params)
    Cin, P = params[0].shape
    Cout = w3f.shape[1]
    dn = ("NHWC", "HWIO", "NHWC")

    def conv(x, w, pad):
        return jax.lax.conv_general_dilated(
            x, w, (1, 1), pad, dimension_numbers=dn,
            preferred_element_type=jnp.float32)

    x16 = x_nhwc.astype(jnp.bfloat16)
    h = conv(x16, w1f.reshape(1, 1, Cin, P), "VALID") + b1.reshape(1, 1, 1, P)
    h = jnp.maximum(h, 0.0).astype(jnp.bfloat16)
    h = conv(h, w2f.reshape(3, 3, P, P), ((1, 1), (1, 1))) + b2.reshape(1, 1, 1, P)
    h = jnp.maximum(h, 0.0).astype(jnp.bfloat16)
    h = conv(h, w3f.reshape(1, 1, P, Cout), "VALID") + b3.reshape(1, 1, 1, Cout)
    return jnp.maximum(h + x16.astype(jnp.float32), 0.0)


# --------------------------------------------------------------------------
if __name__ == "__main__":
    # Small demo shapes; inplanes == planes * expansion so the identity
    # residual is valid.  (Real ResNet stages use C in {256,...,2048}, which
    # keeps the output lane dimension 128-aligned.)
    N, planes, H, W = 2, 4, 16, 16
    inplanes = planes * 4  # 16

    key = jax.random.PRNGKey(0)
    kx, kp = jax.random.split(key)
    x = jax.random.normal(kx, (N, inplanes, H, W), jnp.float32)
    params = make_params(kp, inplanes, planes)

    out = jax.block_until_ready(bottleneck_forward(x, params))

    ref = jnp.transpose(
        reference_forward_nhwc(jnp.transpose(x, (0, 2, 3, 1)), params),
        (0, 3, 1, 2))
    ref = jax.block_until_ready(ref)
    np.testing.assert_allclose(np.asarray(out), np.asarray(ref),
                               rtol=1e-2, atol=1e-2)
    print("KERNEL_OK")
</pallas_src>

<mosaic_0001>
module attributes {stable_mosaic.version = 11 : i64} {
  func.func @_bottleneck_kernel(%arg0: i32, %arg1: i32, %arg2: memref<1x8x16x16xbf16, #tpu.memory_space<vmem>>, %arg3: memref<1x1x16x16xbf16, #tpu.memory_space<vmem>>, %arg4: memref<1x1x16x16xbf16, #tpu.memory_space<vmem>>, %arg5: memref<16x4xbf16, #tpu.memory_space<vmem>>, %arg6: memref<1x4xf32, #tpu.memory_space<vmem>>, %arg7: memref<36x4xbf16, #tpu.memory_space<vmem>>, %arg8: memref<1x4xf32, #tpu.memory_space<vmem>>, %arg9: memref<4x16xbf16, #tpu.memory_space<vmem>>, %arg10: memref<1x16xf32, #tpu.memory_space<vmem>>, %arg11: memref<1x8x16x16xf32, #tpu.memory_space<vmem>>, %arg12: memref<10x18x4xbf16, #tpu.memory_space<vmem>>, %arg13: memref<128x36xbf16, #tpu.memory_space<vmem>>) attributes {dimension_semantics = [#tpu.dimension_semantics<parallel>, #tpu.dimension_semantics<parallel>], iteration_bounds = array<i64: 2, 2>, scalar_prefetch = 0 : i64, scratch_operands = 2 : i64, tpu.core_type = #tpu.core_type<tc>, window_params = [{transform_indices = @transform_0, window_bounds = array<i64: 1, 8, 16, 16>}, {transform_indices = @transform_1, window_bounds = array<i64: 1, 1, 16, 16>}, {transform_indices = @transform_2, window_bounds = array<i64: 1, 1, 16, 16>}, {pipeline_mode = #tpu.pipeline_mode<synchronous>, transform_indices = @transform_3, window_bounds = array<i64: 16, 4>}, {pipeline_mode = #tpu.pipeline_mode<synchronous>, transform_indices = @transform_4, window_bounds = array<i64: 1, 4>}, {pipeline_mode = #tpu.pipeline_mode<synchronous>, transform_indices = @transform_5, window_bounds = array<i64: 36, 4>}, {pipeline_mode = #tpu.pipeline_mode<synchronous>, transform_indices = @transform_6, window_bounds = array<i64: 1, 4>}, {pipeline_mode = #tpu.pipeline_mode<synchronous>, transform_indices = @transform_7, window_bounds = array<i64: 4, 16>}, {pipeline_mode = #tpu.pipeline_mode<synchronous>, transform_indices = @transform_8, window_bounds = array<i64: 1, 16>}, {transform_indices = @transform_9, window_bounds = array<i64: 1, 8, 16, 16>}]} {
    %c0 = arith.constant 0 : index
    %c0_0 = arith.constant 0 : index
    %0 = vector.load %arg5[%c0, %c0_0] : memref<16x4xbf16, #tpu.memory_space<vmem>>, vector<16x4xbf16>
    %c0_1 = arith.constant 0 : index
    %c0_2 = arith.constant 0 : index
    %1 = vector.load %arg6[%c0_1, %c0_2] : memref<1x4xf32, #tpu.memory_space<vmem>>, vector<1x4xf32>
    %c0_3 = arith.constant 0 : index
    %c0_4 = arith.constant 0 : index
    %c0_5 = arith.constant 0 : index
    %c0_6 = arith.constant 0 : index
    %2 = vector.load %arg2[%c0_3, %c0_4, %c0_5, %c0_6] : memref<1x8x16x16xbf16, #tpu.memory_space<vmem>>, vector<1x8x16x16xbf16>
    %3 = vector.shape_cast %2 : vector<1x8x16x16xbf16> to vector<128x16xbf16>
    %cst = arith.constant dense<0.000000e+00> : vector<128x4xf32>
    %4 = tpu.matmul %3, %0, %cst {dimension_numbers = #tpu.dot_dimension_numbers<[1], [0], [0], [1], [0, 0, 1, 1], [], []>} : vector<128x16xbf16>, vector<16x4xbf16>, vector<128x4xf32> -> vector<128x4xf32>
    %5 = vector.broadcast %1 : vector<1x4xf32> to vector<128x4xf32>
    %6 = arith.addf %4, %5 : vector<128x4xf32>
    %cst_7 = arith.constant 0.000000e+00 : f32
    %7 = vector.broadcast %cst_7 : f32 to vector<128x4xf32>
    %8 = arith.maximumf %6, %7 : vector<128x4xf32>
    %9 = arith.truncf %8 : vector<128x4xf32> to vector<128x4xbf16>
    %c0_8 = arith.constant 0 : index
    %c0_9 = arith.constant 0 : index
    %c0_10 = arith.constant 0 : index
    %c0_11 = arith.constant 0 : index
    %10 = vector.load %arg3[%c0_8, %c0_9, %c0_10, %c0_11] : memref<1x1x16x16xbf16, #tpu.memory_space<vmem>>, vector<1x1x16x16xbf16>
    %11 = vector.shape_cast %10 : vector<1x1x16x16xbf16> to vector<16x16xbf16>
    %c0_12 = arith.constant 0 : index
    %c0_13 = arith.constant 0 : index
    %c0_14 = arith.constant 0 : index
    %c0_15 = arith.constant 0 : index
    %12 = vector.load %arg4[%c0_12, %c0_13, %c0_14, %c0_15] : memref<1x1x16x16xbf16, #tpu.memory_space<vmem>>, vector<1x1x16x16xbf16>
    %13 = vector.shape_cast %12 : vector<1x1x16x16xbf16> to vector<16x16xbf16>
    %cst_16 = arith.constant dense<0.000000e+00> : vector<16x4xf32>
    %14 = tpu.matmul %11, %0, %cst_16 {dimension_numbers = #tpu.dot_dimension_numbers<[1], [0], [0], [1], [0, 0, 1, 1], [], []>} : vector<16x16xbf16>, vector<16x4xbf16>, vector<16x4xf32> -> vector<16x4xf32>
    %15 = vector.broadcast %1 : vector<1x4xf32> to vector<16x4xf32>
    %16 = arith.addf %14, %15 : vector<16x4xf32>
    %cst_17 = arith.constant 0.000000e+00 : f32
    %17 = vector.broadcast %cst_17 : f32 to vector<16x4xf32>
    %18 = arith.maximumf %16, %17 : vector<16x4xf32>
    %cst_18 = arith.constant dense<0.000000e+00> : vector<16x4xf32>
    %19 = tpu.matmul %13, %0, %cst_18 {dimension_numbers = #tpu.dot_dimension_numbers<[1], [0], [0], [1], [0, 0, 1, 1], [], []>} : vector<16x16xbf16>, vector<16x4xbf16>, vector<16x4xf32> -> vector<16x4xf32>
    %20 = vector.broadcast %1 : vector<1x4xf32> to vector<16x4xf32>
    %21 = arith.addf %19, %20 : vector<16x4xf32>
    %cst_19 = arith.constant 0.000000e+00 : f32
    %22 = vector.broadcast %cst_19 : f32 to vector<16x4xf32>
    %23 = arith.maximumf %21, %22 : vector<16x4xf32>
    %c0_i32 = arith.constant 0 : i32
    %24 = arith.cmpi eq, %arg1, %c0_i32 : i32
    %cst_20 = arith.constant 0.000000e+00 : f32
    %25 = vector.broadcast %cst_20 : f32 to vector<16x4xf32>
    %26 = arith.select %24, %25, %18 : vector<16x4xf32>
    %27 = arith.truncf %26 : vector<16x4xf32> to vector<16x4xbf16>
    %c1_i32 = arith.constant 1 : i32
    %28 = arith.cmpi eq, %arg1, %c1_i32 : i32
    %cst_21 = arith.constant 0.000000e+00 : f32
    %29 = vector.broadcast %cst_21 : f32 to vector<16x4xf32>
    %30 = arith.select %28, %29, %23 : vector<16x4xf32>
    %31 = arith.truncf %30 : vector<16x4xf32> to vector<16x4xbf16>
    %cst_22 = arith.constant 0.000000e+00 : bf16
    %32 = vector.broadcast %cst_22 : bf16 to vector<10x1x4xbf16>
    %c0_23 = arith.constant 0 : index
    %c0_24 = arith.constant 0 : index
    %c0_25 = arith.constant 0 : index
    %33 = vector.load %arg12[%c0_23, %c0_24, %c0_25] : memref<10x18x4xbf16, #tpu.memory_space<vmem>>, vector<10x1x4xbf16>
    tpu.vector_store %arg12[%c0_23, %c0_24, %c0_25], %32 {strides = array<i32>} : memref<10x18x4xbf16, #tpu.memory_space<vmem>>, vector<10x1x4xbf16>,
    %c0_26 = arith.constant 0 : index
    %c17 = arith.constant 17 : index
    %c0_27 = arith.constant 0 : index
    %34 = vector.load %arg12[%c0_26, %c17, %c0_27] : memref<10x18x4xbf16, #tpu.memory_space<vmem>>, vector<10x1x4xbf16>
    tpu.vector_store %arg12[%c0_26, %c17, %c0_27], %32 {strides = array<i32>} : memref<10x18x4xbf16, #tpu.memory_space<vmem>>, vector<10x1x4xbf16>,
    %35 = vector.shape_cast %9 : vector<128x4xbf16> to vector<8x16x4xbf16>
    %c1 = arith.constant 1 : index
    %c1_28 = arith.constant 1 : index
    %c0_29 = arith.constant 0 : index
    %36 = vector.load %arg12[%c1, %c1_28, %c0_29] : memref<10x18x4xbf16, #tpu.memory_space<vmem>>, vector<8x16x4xbf16>
    tpu.vector_store %arg12[%c1, %c1_28, %c0_29], %35 {strides = array<i32>} : memref<10x18x4xbf16, #tpu.memory_space<vmem>>, vector<8x16x4xbf16>,
    %37 = vector.shape_cast %27 : vector<16x4xbf16> to vector<1x16x4xbf16>
    %c0_30 = arith.constant 0 : index
    %c1_31 = arith.constant 1 : index
    %c0_32 = arith.constant 0 : index
    %38 = vector.load %arg12[%c0_30, %c1_31, %c0_32] : memref<10x18x4xbf16, #tpu.memory_space<vmem>>, vector<1x16x4xbf16>
    tpu.vector_store %arg12[%c0_30, %c1_31, %c0_32], %37 {strides = array<i32>} : memref<10x18x4xbf16, #tpu.memory_space<vmem>>, vector<1x16x4xbf16>,
    %39 = vector.shape_cast %31 : vector<16x4xbf16> to vector<1x16x4xbf16>
    %c9 = arith.constant 9 : index
    %c1_33 = arith.constant 1 : index
    %c0_34 = arith.constant 0 : index
    %40 = vector.load %arg12[%c9, %c1_33, %c0_34] : memref<10x18x4xbf16, #tpu.memory_space<vmem>>, vector<1x16x4xbf16>
    tpu.vector_store %arg12[%c9, %c1_33, %c0_34], %39 {strides = array<i32>} : memref<10x18x4xbf16, #tpu.memory_space<vmem>>, vector<1x16x4xbf16>,
    %c0_35 = arith.constant 0 : index
    %c0_36 = arith.constant 0 : index
    %c0_37 = arith.constant 0 : index
    %41 = vector.load %arg12[%c0_35, %c0_36, %c0_37] : memref<10x18x4xbf16, #tpu.memory_space<vmem>>, vector<8x16x4xbf16>
    %42 = vector.shape_cast %41 : vector<8x16x4xbf16> to vector<128x4xbf16>
    %c0_38 = arith.constant 0 : index
    %c0_39 = arith.constant 0 : index
    %43 = vector.load %arg13[%c0_38, %c0_39] : memref<128x36xbf16, #tpu.memory_space<vmem>>, vector<128x4xbf16>
    tpu.vector_store %arg13[%c0_38, %c0_39], %42 {strides = array<i32>} : memref<128x36xbf16, #tpu.memory_space<vmem>>, vector<128x4xbf16>,
    %c0_40 = arith.constant 0 : index
    %c1_41 = arith.constant 1 : index
    %c0_42 = arith.constant 0 : index
    %44 = vector.load %arg12[%c0_40, %c1_41, %c0_42] : memref<10x18x4xbf16, #tpu.memory_space<vmem>>, vector<8x16x4xbf16>
    %45 = vector.shape_cast %44 : vector<8x16x4xbf16> to vector<128x4xbf16>
    %c0_43 = arith.constant 0 : index
    %c4 = arith.constant 4 : index
    %46 = vector.load %arg13[%c0_43, %c4] : memref<128x36xbf16, #tpu.memory_space<vmem>>, vector<128x4xbf16>
    tpu.vector_store %arg13[%c0_43, %c4], %45 {strides = array<i32>} : memref<128x36xbf16, #tpu.memory_space<vmem>>, vector<128x4xbf16>,
    %c0_44 = arith.constant 0 : index
    %c2 = arith.constant 2 : index
    %c0_45 = arith.constant 0 : index
    %47 = vector.load %arg12[%c0_44, %c2, %c0_45] : memref<10x18x4xbf16, #tpu.memory_space<vmem>>, vector<8x16x4xbf16>
    %48 = vector.shape_cast %47 : vector<8x16x4xbf16> to vector<128x4xbf16>
    %c0_46 = arith.constant 0 : index
    %c8 = arith.constant 8 : index
    %49 = vector.load %arg13[%c0_46, %c8] : memref<128x36xbf16, #tpu.memory_space<vmem>>, vector<128x4xbf16>
    tpu.vector_store %arg13[%c0_46, %c8], %48 {strides = array<i32>} : memref<128x36xbf16, #tpu.memory_space<vmem>>, vector<128x4xbf16>,
    %c1_47 = arith.constant 1 : index
    %c0_48 = arith.constant 0 : index
    %c0_49 = arith.constant 0 : index
    %50 = vector.load %arg12[%c1_47, %c0_48, %c0_49] : memref<10x18x4xbf16, #tpu.memory_space<vmem>>, vector<8x16x4xbf16>
    %51 = vector.shape_cast %50 : vector<8x16x4xbf16> to vector<128x4xbf16>
    %c0_50 = arith.constant 0 : index
    %c12 = arith.constant 12 : index
    %52 = vector.load %arg13[%c0_50, %c12] : memref<128x36xbf16, #tpu.memory_space<vmem>>, vector<128x4xbf16>
    tpu.vector_store %arg13[%c0_50, %c12], %51 {strides = array<i32>} : memref<128x36xbf16, #tpu.memory_space<vmem>>, vector<128x4xbf16>,
    %c1_51 = arith.constant 1 : index
    %c1_52 = arith.constant 1 : index
    %c0_53 = arith.constant 0 : index
    %53 = vector.load %arg12[%c1_51, %c1_52, %c0_53] : memref<10x18x4xbf16, #tpu.memory_space<vmem>>, vector<8x16x4xbf16>
    %54 = vector.shape_cast %53 : vector<8x16x4xbf16> to vector<128x4xbf16>
    %c0_54 = arith.constant 0 : index
    %c16 = arith.constant 16 : index
    %55 = vector.load %arg13[%c0_54, %c16] : memref<128x36xbf16, #tpu.memory_space<vmem>>, vector<128x4xbf16>
    tpu.vector_store %arg13[%c0_54, %c16], %54 {strides = array<i32>} : memref<128x36xbf16, #tpu.memory_space<vmem>>, vector<128x4xbf16>,
    %c1_55 = arith.constant 1 : index
    %c2_56 = arith.constant 2 : index
    %c0_57 = arith.constant 0 : index
    %56 = vector.load %arg12[%c1_55, %c2_56, %c0_57] : memref<10x18x4xbf16, #tpu.memory_space<vmem>>, vector<8x16x4xbf16>
    %57 = vector.shape_cast %56 : vector<8x16x4xbf16> to vector<128x4xbf16>
    %c0_58 = arith.constant 0 : index
    %c20 = arith.constant 20 : index
    %58 = vector.load %arg13[%c0_58, %c20] : memref<128x36xbf16, #tpu.memory_space<vmem>>, vector<128x4xbf16>
    tpu.vector_store %arg13[%c0_58, %c20], %57 {strides = array<i32>} : memref<128x36xbf16, #tpu.memory_space<vmem>>, vector<128x4xbf16>,
    %c2_59 = arith.constant 2 : index
    %c0_60 = arith.constant 0 : index
    %c0_61 = arith.constant 0 : index
    %59 = vector.load %arg12[%c2_59, %c0_60, %c0_61] : memref<10x18x4xbf16, #tpu.memory_space<vmem>>, vector<8x16x4xbf16>
    %60 = vector.shape_cast %59 : vector<8x16x4xbf16> to vector<128x4xbf16>
    %c0_62 = arith.constant 0 : index
    %c24 = arith.constant 24 : index
    %61 = vector.load %arg13[%c0_62, %c24] : memref<128x36xbf16, #tpu.memory_space<vmem>>, vector<128x4xbf16>
    tpu.vector_store %arg13[%c0_62, %c24], %60 {strides = array<i32>} : memref<128x36xbf16, #tpu.memory_space<vmem>>, vector<128x4xbf16>,
    %c2_63 = arith.constant 2 : index
    %c1_64 = arith.constant 1 : index
    %c0_65 = arith.constant 0 : index
    %62 = vector.load %arg12[%c2_63, %c1_64, %c0_65] : memref<10x18x4xbf16, #tpu.memory_space<vmem>>, vector<8x16x4xbf16>
    %63 = vector.shape_cast %62 : vector<8x16x4xbf16> to vector<128x4xbf16>
    %c0_66 = arith.constant 0 : index
    %c28 = arith.constant 28 : index
    %64 = vector.load %arg13[%c0_66, %c28] : memref<128x36xbf16, #tpu.memory_space<vmem>>, vector<128x4xbf16>
    tpu.vector_store %arg13[%c0_66, %c28], %63 {strides = array<i32>} : memref<128x36xbf16, #tpu.memory_space<vmem>>, vector<128x4xbf16>,
    %c2_67 = arith.constant 2 : index
    %c2_68 = arith.constant 2 : index
    %c0_69 = arith.constant 0 : index
    %65 = vector.load %arg12[%c2_67, %c2_68, %c0_69] : memref<10x18x4xbf16, #tpu.memory_space<vmem>>, vector<8x16x4xbf16>
    %66 = vector.shape_cast %65 : vector<8x16x4xbf16> to vector<128x4xbf16>
    %c0_70 = arith.constant 0 : index
    %c32 = arith.constant 32 : index
    %67 = vector.load %arg13[%c0_70, %c32] : memref<128x36xbf16, #tpu.memory_space<vmem>>, vector<128x4xbf16>
    tpu.vector_store %arg13[%c0_70, %c32], %66 {strides = array<i32>} : memref<128x36xbf16, #tpu.memory_space<vmem>>, vector<128x4xbf16>,
    %c0_71 = arith.constant 0 : index
    %c0_72 = arith.constant 0 : index
    %68 = vector.load %arg13[%c0_71, %c0_72] : memref<128x36xbf16, #tpu.memory_space<vmem>>, vector<128x36xbf16>
    %c0_73 = arith.constant 0 : index
    %c0_74 = arith.constant 0 : index
    %69 = vector.load %arg7[%c0_73, %c0_74] : memref<36x4xbf16, #tpu.memory_space<vmem>>, vector<36x4xbf16>
    %cst_75 = arith.constant dense<0.000000e+00> : vector<128x4xf32>
    %70 = tpu.matmul %68, %69, %cst_75 {dimension_numbers = #tpu.dot_dimension_numbers<[1], [0], [0], [1], [0, 0, 1, 1], [], []>} : vector<128x36xbf16>, vector<36x4xbf16>, vector<128x4xf32> -> vector<128x4xf32>
    %c0_76 = arith.constant 0 : index
    %c0_77 = arith.constant 0 : index
    %71 = vector.load %arg8[%c0_76, %c0_77] : memref<1x4xf32, #tpu.memory_space<vmem>>, vector<1x4xf32>
    %72 = vector.broadcast %71 : vector<1x4xf32> to vector<128x4xf32>
    %73 = arith.addf %70, %72 : vector<128x4xf32>
    %cst_78 = arith.constant 0.000000e+00 : f32
    %74 = vector.broadcast %cst_78 : f32 to vector<128x4xf32>
    %75 = arith.maximumf %73, %74 : vector<128x4xf32>
    %76 = arith.truncf %75 : vector<128x4xf32> to vector<128x4xbf16>
    %c0_79 = arith.constant 0 : index
    %c0_80 = arith.constant 0 : index
    %77 = vector.load %arg9[%c0_79, %c0_80] : memref<4x16xbf16, #tpu.memory_space<vmem>>, vector<4x16xbf16>
    %cst_81 = arith.constant dense<0.000000e+00> : vector<128x16xf32>
    %78 = tpu.matmul %76, %77, %cst_81 {dimension_numbers = #tpu.dot_dimension_numbers<[1], [0], [0], [1], [0, 0, 1, 1], [], []>} : vector<128x4xbf16>, vector<4x16xbf16>, vector<128x16xf32> -> vector<128x16xf32>
    %c0_82 = arith.constant 0 : index
    %c0_83 = arith.constant 0 : index
    %79 = vector.load %arg10[%c0_82, %c0_83] : memref<1x16xf32, #tpu.memory_space<vmem>>, vector<1x16xf32>
    %80 = vector.broadcast %79 : vector<1x16xf32> to vector<128x16xf32>
    %81 = arith.addf %78, %80 : vector<128x16xf32>
    %82 = arith.extf %3 : vector<128x16xbf16> to vector<128x16xf32>
    %83 = arith.addf %81, %82 : vector<128x16xf32>
    %cst_84 = arith.constant 0.000000e+00 : f32
    %84 = vector.broadcast %cst_84 : f32 to vector<128x16xf32>
    %85 = arith.maximumf %83, %84 : vector<128x16xf32>
    %86 = vector.shape_cast %85 : vector<128x16xf32> to vector<1x8x16x16xf32>
    %c0_85 = arith.constant 0 : index
    %c0_86 = arith.constant 0 : index
    %c0_87 = arith.constant 0 : index
    %c0_88 = arith.constant 0 : index
    %87 = vector.load %arg11[%c0_85, %c0_86, %c0_87, %c0_88] : memref<1x8x16x16xf32, #tpu.memory_space<vmem>>, vector<1x8x16x16xf32>
    tpu.vector_store %arg11[%c0_85, %c0_86, %c0_87, %c0_88], %86 {strides = array<i32>} : memref<1x8x16x16xf32, #tpu.memory_space<vmem>>, vector<1x8x16x16xf32>,
    return
  }
  func.func @transform_0(%arg0: i32, %arg1: i32) -> (i32, i32, i32, i32) {
    %c0_i32 = arith.constant 0 : i32
    %c0_i32_0 = arith.constant 0 : i32
    %c0_i32_1 = arith.constant 0 : i32
    return %arg0, %arg1, %c0_i32, %c0_i32_0 : i32, i32, i32, i32
  }
  func.func @transform_1(%arg0: i32, %arg1: i32) -> (i32, i32, i32, i32) {
    %c8_i32 = arith.constant 8 : i32
    %0 = arith.muli %arg1, %c8_i32 : i32
    %c1_i32 = arith.constant 1 : i32
    %1 = arith.subi %0, %c1_i32 : i32
    %c0_i32 = arith.constant 0 : i32
    %2 = arith.maxsi %1, %c0_i32 : i32
    %c0_i32_0 = arith.constant 0 : i32
    %c0_i32_1 = arith.constant 0 : i32
    %c0_i32_2 = arith.constant 0 : i32
    return %arg0, %2, %c0_i32_0, %c0_i32_1 : i32, i32, i32, i32
  }
  func.func @transform_2(%arg0: i32, %arg1: i32) -> (i32, i32, i32, i32) {
    %c8_i32 = arith.constant 8 : i32
    %0 = arith.muli %arg1, %c8_i32 : i32
    %c8_i32_0 = arith.constant 8 : i32
    %1 = arith.addi %0, %c8_i32_0 : i32
    %c15_i32 = arith.constant 15 : i32
    %2 = arith.minsi %1, %c15_i32 : i32
    %c0_i32 = arith.constant 0 : i32
    %c0_i32_1 = arith.constant 0 : i32
    %c0_i32_2 = arith.constant 0 : i32
    return %arg0, %2, %c0_i32, %c0_i32_1 : i32, i32, i32, i32
  }
  func.func @transform_3(%arg0: i32, %arg1: i32) -> (i32, i32) {
    %c0_i32 = arith.constant 0 : i32
    %c0_i32_0 = arith.constant 0 : i32
    %c0_i32_1 = arith.constant 0 : i32
    return %c0_i32, %c0_i32_0 : i32, i32
  }
  func.func @transform_4(%arg0: i32, %arg1: i32) -> (i32, i32) {
    %c0_i32 = arith.constant 0 : i32
    %c0_i32_0 = arith.constant 0 : i32
    %c0_i32_1 = arith.constant 0 : i32
    return %c0_i32, %c0_i32_0 : i32, i32
  }
  func.func @transform_5(%arg0: i32, %arg1: i32) -> (i32, i32) {
    %c0_i32 = arith.constant 0 : i32
    %c0_i32_0 = arith.constant 0 : i32
    %c0_i32_1 = arith.constant 0 : i32
    return %c0_i32, %c0_i32_0 : i32, i32
  }
  func.func @transform_6(%arg0: i32, %arg1: i32) -> (i32, i32) {
    %c0_i32 = arith.constant 0 : i32
    %c0_i32_0 = arith.constant 0 : i32
    %c0_i32_1 = arith.constant 0 : i32
    return %c0_i32, %c0_i32_0 : i32, i32
  }
  func.func @transform_7(%arg0: i32, %arg1: i32) -> (i32, i32) {
    %c0_i32 = arith.constant 0 : i32
    %c0_i32_0 = arith.constant 0 : i32
    %c0_i32_1 = arith.constant 0 : i32
    return %c0_i32, %c0_i32_0 : i32, i32
  }
  func.func @transform_8(%arg0: i32, %arg1: i32) -> (i32, i32) {
    %c0_i32 = arith.constant 0 : i32
    %c0_i32_0 = arith.constant 0 : i32
    %c0_i32_1 = arith.constant 0 : i32
    return %c0_i32, %c0_i32_0 : i32, i32
  }
  func.func @transform_9(%arg0: i32, %arg1: i32) -> (i32, i32, i32, i32) {
    %c0_i32 = arith.constant 0 : i32
    %c0_i32_0 = arith.constant 0 : i32
    %c0_i32_1 = arith.constant 0 : i32
    return %arg0, %arg1, %c0_i32, %c0_i32_0 : i32, i32, i32, i32
  }
}

</mosaic_0001>

<llo_original>
// kernel: bottleneck_forward_nhwc.1
$region0: #{bottleneck_forward_nhwc.1}
  #allocation0 [shape = 'u32[]', space=smem, size = 0x4, offset = 0x4, fixed_abs, tag = 'smem constant byte address 0x4 - core index']
  #allocation1 [shape = 'u32[144,128]{1,0:T(1,128)}', space=vmem, size = 0x12000, scoped, tag = 'internal scratch']
  #allocation2 [shape = 'bf16[10,18,4]{2,1,0:T(8,128)(2,1)}', space=vmem, size = 0xf000, scoped, tag = 'scratch operand']
  #allocation3 [shape = 'bf16[128,36]{1,0:T(16,128)(2,1)}', space=vmem, size = 0x8000, scoped, tag = 'scratch operand']
  %s0 = inlined_call_operand.vmem [shape: bf16[2,16,16,16], index: 0, kind: input, shape index: {}, may-alias: {0,1,2}]
  %s1 = inlined_call_operand.vmem [shape: bf16[2,16,16,16], index: 1, kind: input, shape index: {}, may-alias: {0,1,2}]
  %s2 = inlined_call_operand.vmem [shape: bf16[2,16,16,16], index: 2, kind: input, shape index: {}, may-alias: {0,1,2}]
  %s3 = inlined_call_operand.vmem [shape: bf16[16,4], index: 3, kind: input, shape index: {}]
  %s4 = inlined_call_operand.vmem [shape: f32[1,4], index: 4, kind: input, shape index: {}]
  %s5 = inlined_call_operand.vmem [shape: bf16[36,4], index: 5, kind: input, shape index: {}]
  %s6 = inlined_call_operand.vmem [shape: f32[1,4], index: 6, kind: input, shape index: {}]
  %s7 = inlined_call_operand.vmem [shape: bf16[4,16], index: 7, kind: input, shape index: {}]
  %s8 = inlined_call_operand.vmem [shape: f32[1,16], index: 8, kind: input, shape index: {}]
  %s9 = inlined_call_operand.hbm [shape: f32[2,16,16,16], index: 9, kind: output, shape index: {}]
  %s10 = sld [smem:[#allocation0]]
  $region69: #{bottleneck_forward_nhwc.1} parent=0
    _
  %s12 = ssub.s32 1, %s10
  %s13 = scalar_select 0, %s12, %s10
  $region1: #{bottleneck_forward_nhwc.1} parent=0
    #allocation4 [shape = 'u8[131072]{0}', space=vmem, size = 0x20000, scoped, tag = 'output window, operand 0']
    #allocation5 [shape = 's32[2]{0}', space=sflag, size = 0x8, scoped, tag = 'scoped memory for bottleneck_forward_nhwc.1']
    %14 = vsyncpa [#allocation5], 0
    %s15 = scalar_lea.sflag [#allocation5], 1
    %16 = vsyncpa %s15, 0
    loop: start=0, step=1, limit=6
    $region2: #{bottleneck_forward_nhwc.1} parent=1 // loop_pre_header
      _
    $region3: #{bottleneck_forward_nhwc.1} parent=1 // loop_header
      %s18 = sphi 0, %s22
      %p19 = scmp.ge.s32.totalorder %s18, 6
      %s25 = sphi 0, %s37
      %s26 = sphi 0, %s33
      %s27 = sphi 0, %s25
      %s28 = sphi 0, %s26
      %s29 = sphi 0, %s27
      %s30 = sphi 0, %s28
      %s42 = sphi 0, %s44
      %s45 = sphi 0, %s42
      %s46 = sphi 0, %s45
      %s62 = sphi 0, %s46
      %s78 = sphi 0, %s80
      %s81 = sphi 0, %s78
      %s82 = sphi 0, %s81
      %s98 = sphi 0, %s82
      %s114 = sphi 0, %s116
      %s117 = sphi 0, %s114
      %s118 = sphi 0, %s117
      %s134 = sphi 0, %s118
      %s138 = sphi 0, %s138
      %s140 = sphi 0, %s138
      %s141 = sphi 0, %s140
      %s155 = sphi 0, %s141
      %s159 = sphi 0, %s159
      %s161 = sphi 0, %s159
      %s162 = sphi 0, %s161
      %s176 = sphi 0, %s162
      %s180 = sphi 0, %s180
      %s182 = sphi 0, %s180
      %s183 = sphi 0, %s182
      %s197 = sphi 0, %s183
      %s201 = sphi 0, %s201
      %s203 = sphi 0, %s201
      %s204 = sphi 0, %s203
      %s218 = sphi 0, %s204
      %s222 = sphi 0, %s222
      %s224 = sphi 0, %s222
      %s225 = sphi 0, %s224
      %s239 = sphi 0, %s225
      %s243 = sphi 0, %s243
      %s245 = sphi 0, %s243
      %s246 = sphi 0, %s245
      %s260 = sphi 0, %s246
      %s268 = sphi 0, %s270
      %s271 = sphi 0, %s268
      %s272 = sphi 0, %s271
      %s288 = sphi 0, %s272
    $region4: #{bottleneck_forward_nhwc.1} parent=1 // loop_header_branch
      %21 = sbr.rel (%p19) target = $region8
    $region5: #{bottleneck_forward_nhwc.1} parent=1 // loop_body
      %s23 = ssub.s32 %s18, 1
      %s24 = ssub.s32 %s18, 2
      %s31 = sadd.s32 1, %s26
      %p32 = scmp.ge.s32.totalorder %s31, 2
      %s33 = scalar_select %p32, 0, %s31
      %s34 = sadd.s32 1, %s25
      %s35 = scalar_select %p32, %s34, %s25
      %p36 = scmp.ge.s32.totalorder %s35, 2
      %s37 = scalar_select %p36, 0, %s35
      %s38 = ssub.s32 %s25, %s37
      %s39 = ssub.s32 %s26, %s33
      %s40 = sor.u32 %s38, %s39
      %p41 = scmp.eq.s32.totalorder %s40, 0
      %s43 = sadd.s32 %s42, 1
      %s44 = scalar_select %p41, %s42, %s43
      %p47 = pneg %p41
      %p48 = scmp.eq.s32.totalorder %s18, 3
      %p49 = por %p47, %p48
      %p50 = scmp.ne.s32.totalorder %s42, %s45
      %p51 = scmp.eq.s32.totalorder %s18, 0
      %p52 = por %p50, %p51
      %p53 = scmp.ne.s32.totalorder %s42, %s45
      %p54 = scmp.eq.s32.totalorder %s23, 3
      %p55 = por %p53, %p54
      %p56 = scmp.ne.s32.totalorder %s45, %s46
      %p57 = scmp.eq.s32.totalorder %s23, 0
      %p58 = por %p56, %p57
      %p59 = scmp.ne.s32.totalorder %s45, %s46
      %p60 = scmp.eq.s32.totalorder %s24, 3
      %p61 = por %p59, %p60
      %p63 = scmp.ne.s32.totalorder %s46, %s62
      %p64 = scmp.eq.s32.totalorder %s24, 0
      %p65 = por %p63, %p64
      %s66 = smul.u32 %s26, 8
      %s67 = ssub.s32 %s66, 1
      %p68 = scmp.gt.s32.totalorder %s67, 0
      %s69 = scalar_select %p68, %s67, 0
      %s70 = smul.u32 %s33, 8
      %s71 = ssub.s32 %s70, 1
      %p72 = scmp.gt.s32.totalorder %s71, 0
      %s73 = scalar_select %p72, %s71, 0
      %s74 = ssub.s32 %s25, %s37
      %s75 = ssub.s32 %s69, %s73
      %s76 = sor.u32 %s74, %s75
      %p77 = scmp.eq.s32.totalorder %s76, 0
      %s79 = sadd.s32 %s78, 1
      %s80 = scalar_select %p77, %s78, %s79
      %p83 = pneg %p77
      %p84 = scmp.eq.s32.totalorder %s18, 3
      %p85 = por %p83, %p84
      %p86 = scmp.ne.s32.totalorder %s78, %s81
      %p87 = scmp.eq.s32.totalorder %s18, 0
      %p88 = por %p86, %p87
      %p89 = scmp.ne.s32.totalorder %s78, %s81
      %p90 = scmp.eq.s32.totalorder %s23, 3
      %p91 = por %p89, %p90
      %p92 = scmp.ne.s32.totalorder %s81, %s82
      %p93 = scmp.eq.s32.totalorder %s23, 0
      %p94 = por %p92, %p93
      %p95 = scmp.ne.s32.totalorder %s81, %s82
      %p96 = scmp.eq.s32.totalorder %s24, 3
      %p97 = por %p95, %p96
      %p99 = scmp.ne.s32.totalorder %s82, %s98
      %p100 = scmp.eq.s32.totalorder %s24, 0
      %p101 = por %p99, %p100
      %s102 = smul.u32 %s26, 8
      %s103 = sadd.s32 %s102, 8
      %p104 = scmp.lt.s32.totalorder %s103, 15
      %s105 = scalar_select %p104, %s103, 15
      %s106 = smul.u32 %s33, 8
      %s107 = sadd.s32 %s106, 8
      %p108 = scmp.lt.s32.totalorder %s107, 15
      %s109 = scalar_select %p108, %s107, 15
      %s110 = ssub.s32 %s25, %s37
      %s111 = ssub.s32 %s105, %s109
      %s112 = sor.u32 %s110, %s111
      %p113 = scmp.eq.s32.totalorder %s112, 0
      %s115 = sadd.s32 %s114, 1
      %s116 = scalar_select %p113, %s114, %s115
      %p119 = pneg %p113
      %p120 = scmp.eq.s32.totalorder %s18, 3
      %p121 = por %p119, %p120
      %p122 = scmp.ne.s32.totalorder %s114, %s117
      %p123 = scmp.eq.s32.totalorder %s18, 0
      %p124 = por %p122, %p123
      %p125 = scmp.ne.s32.totalorder %s114, %s117
      %p126 = scmp.eq.s32.totalorder %s23, 3
      %p127 = por %p125, %p126
      %p128 = scmp.ne.s32.totalorder %s117, %s118
      %p129 = scmp.eq.s32.totalorder %s23, 0
      %p130 = por %p128, %p129
      %p131 = scmp.ne.s32.totalorder %s117, %s118
      %p132 = scmp.eq.s32.totalorder %s24, 3
      %p133 = por %p131, %p132
      %p135 = scmp.ne.s32.totalorder %s118, %s134
      %p136 = scmp.eq.s32.totalorder %s24, 0
      %p137 = por %p135, %p136
      %s139 = sadd.s32 %s138, 1
      %p142 = scmp.eq.s32.totalorder %s18, 3
      %p143 = scmp.ne.s32.totalorder %s138, %s140
      %p144 = scmp.eq.s32.totalorder %s18, 0
      %p145 = por %p143, %p144
      %p146 = scmp.ne.s32.totalorder %s138, %s140
      %p147 = scmp.eq.s32.totalorder %s23, 3
      %p148 = por %p146, %p147
      %p149 = scmp.ne.s32.totalorder %s140, %s141
      %p150 = scmp.eq.s32.totalorder %s23, 0
      %p151 = por %p149, %p150
      %p152 = scmp.ne.s32.totalorder %s140, %s141
      %p153 = scmp.eq.s32.totalorder %s24, 3
      %p154 = por %p152, %p153
      %p156 = scmp.ne.s32.totalorder %s141, %s155
      %p157 = scmp.eq.s32.totalorder %s24, 0
      %p158 = por %p156, %p157
      %s160 = sadd.s32 %s159, 1
      %p163 = scmp.eq.s32.totalorder %s18, 3
      %p164 = scmp.ne.s32.totalorder %s159, %s161
      %p165 = scmp.eq.s32.totalorder %s18, 0
      %p166 = por %p164, %p165
      %p167 = scmp.ne.s32.totalorder %s159, %s161
      %p168 = scmp.eq.s32.totalorder %s23, 3
      %p169 = por %p167, %p168
      %p170 = scmp.ne.s32.totalorder %s161, %s162
      %p171 = scmp.eq.s32.totalorder %s23, 0
      %p172 = por %p170, %p171
      %p173 = scmp.ne.s32.totalorder %s161, %s162
      %p174 = scmp.eq.s32.totalorder %s24, 3
      %p175 = por %p173, %p174
      %p177 = scmp.ne.s32.totalorder %s162, %s176
      %p178 = scmp.eq.s32.totalorder %s24, 0
      %p179 = por %p177, %p178
      %s181 = sadd.s32 %s180, 1
      %p184 = scmp.eq.s32.totalorder %s18, 3
      %p185 = scmp.ne.s32.totalorder %s180, %s182
      %p186 = scmp.eq.s32.totalorder %s18, 0
      %p187 = por %p185, %p186
      %p188 = scmp.ne.s32.totalorder %s180, %s182
      %p189 = scmp.eq.s32.totalorder %s23, 3
      %p190 = por %p188, %p189
      %p191 = scmp.ne.s32.totalorder %s182, %s183
      %p192 = scmp.eq.s32.totalorder %s23, 0
      %p193 = por %p191, %p192
      %p194 = scmp.ne.s32.totalorder %s182, %s183
      %p195 = scmp.eq.s32.totalorder %s24, 3
      %p196 = por %p194, %p195
      %p198 = scmp.ne.s32.totalorder %s183, %s197
      %p199 = scmp.eq.s32.totalorder %s24, 0
      %p200 = por %p198, %p199
      %s202 = sadd.s32 %s201, 1
      %p205 = scmp.eq.s32.totalorder %s18, 3
      %p206 = scmp.ne.s32.totalorder %s201, %s203
      %p207 = scmp.eq.s32.totalorder %s18, 0
      %p208 = por %p206, %p207
      %p209 = scmp.ne.s32.totalorder %s201, %s203
      %p210 = scmp.eq.s32.totalorder %s23, 3
      %p211 = por %p209, %p210
      %p212 = scmp.ne.s32.totalorder %s203, %s204
      %p213 = scmp.eq.s32.totalorder %s23, 0
      %p214 = por %p212, %p213
      %p215 = scmp.ne.s32.totalorder %s203, %s204
      %p216 = scmp.eq.s32.totalorder %s24, 3
      %p217 = por %p215, %p216
      %p219 = scmp.ne.s32.totalorder %s204, %s218
      %p220 = scmp.eq.s32.totalorder %s24, 0
      %p221 = por %p219, %p220
      %s223 = sadd.s32 %s222, 1
      %p226 = scmp.eq.s32.totalorder %s18, 3
      %p227 = scmp.ne.s32.totalorder %s222, %s224
      %p228 = scmp.eq.s32.totalorder %s18, 0
      %p229 = por %p227, %p228
      %p230 = scmp.ne.s32.totalorder %s222, %s224
      %p231 = scmp.eq.s32.totalorder %s23, 3
      %p232 = por %p230, %p231
      %p233 = scmp.ne.s32.totalorder %s224, %s225
      %p234 = scmp.eq.s32.totalorder %s23, 0
      %p235 = por %p233, %p234
      %p236 = scmp.ne.s32.totalorder %s224, %s225
      %p237 = scmp.eq.s32.totalorder %s24, 3
      %p238 = por %p236, %p237
      %p240 = scmp.ne.s32.totalorder %s225, %s239
      %p241 = scmp.eq.s32.totalorder %s24, 0
      %p242 = por %p240, %p241
      %s244 = sadd.s32 %s243, 1
      %p247 = scmp.eq.s32.totalorder %s18, 3
      %p248 = scmp.ne.s32.totalorder %s243, %s245
      %p249 = scmp.eq.s32.totalorder %s18, 0
      %p250 = por %p248, %p249
      %p251 = scmp.ne.s32.totalorder %s243, %s245
      %p252 = scmp.eq.s32.totalorder %s23, 3
      %p253 = por %p251, %p252
      %p254 = scmp.ne.s32.totalorder %s245, %s246
      %p255 = scmp.eq.s32.totalorder %s23, 0
      %p256 = por %p254, %p255
      %p257 = scmp.ne.s32.totalorder %s245, %s246
      %p258 = scmp.eq.s32.totalorder %s24, 3
      %p259 = por %p257, %p258
      %p261 = scmp.ne.s32.totalorder %s246, %s260
      %p262 = scmp.eq.s32.totalorder %s24, 0
      %p263 = por %p261, %p262
      %s264 = ssub.s32 %s25, %s37
      %s265 = ssub.s32 %s26, %s33
      %s266 = sor.u32 %s264, %s265
      %p267 = scmp.eq.s32.totalorder %s266, 0
      %s269 = sadd.s32 %s268, 1
      %s270 = scalar_select %p267, %s268, %s269
      %p273 = pneg %p267
      %p274 = scmp.eq.s32.totalorder %s18, 3
      %p275 = por %p273, %p274
      %p276 = scmp.ne.s32.totalorder %s268, %s271
      %p277 = scmp.eq.s32.totalorder %s18, 0
      %p278 = por %p276, %p277
      %p279 = scmp.ne.s32.totalorder %s268, %s271
      %p280 = scmp.eq.s32.totalorder %s23, 3
      %p281 = por %p279, %p280
      %p282 = scmp.ne.s32.totalorder %s271, %s272
      %p283 = scmp.eq.s32.totalorder %s23, 0
      %p284 = por %p282, %p283
      %p285 = scmp.ne.s32.totalorder %s271, %s272
      %p286 = scmp.eq.s32.totalorder %s24, 3
      %p287 = por %p285, %p286
      %p289 = scmp.ne.s32.totalorder %s272, %s288
      %p290 = scmp.eq.s32.totalorder %s24, 0
      %p291 = por %p289, %p290
      %p292 = scmp.le.s32.totalorder 1, %s18
      %p293 = scmp.lt.s32.totalorder %s18, 5
      %p294 = pnand %p292, %p293
      %p295 = pneg %p294
      // Predicated region
      $region9: #{bottleneck_forward_nhwc.1} parent=5 // pred_check
        _
      $region10: #{bottleneck_forward_nhwc.1} parent=5 // pred_check_branch
        %297 = sbr.rel (%p294) target = $region12
      $region11: #{bottleneck_forward_nhwc.1} parent=5 // pred_region
        %s298 = ssub.s32 %s18, 1
        // Predicated region
        $region13: #{bottleneck_forward_nhwc.1} parent=11 // pred_check
          %p299 = pneg %p151
        $region14: #{bottleneck_forward_nhwc.1} parent=11 // pred_check_branch
          %301 = sbr.rel (%p299) target = $region16
        $region15: #{bottleneck_forward_nhwc.1} parent=11 // pred_region
          _
        $region16: #{bottleneck_forward_nhwc.1} parent=11 // pred_fallthru
          _
        // Predicated region
        $region17: #{bottleneck_forward_nhwc.1} parent=11 // pred_check
          %p302 = pneg %p172
        $region18: #{bottleneck_forward_nhwc.1} parent=11 // pred_check_branch
          %304 = sbr.rel (%p302) target = $region20
        $region19: #{bottleneck_forward_nhwc.1} parent=11 // pred_region
          _
        $region20: #{bottleneck_forward_nhwc.1} parent=11 // pred_fallthru
          _
        // Predicated region
        $region21: #{bottleneck_forward_nhwc.1} parent=11 // pred_check
          %p305 = pneg %p193
        $region22: #{bottleneck_forward_nhwc.1} parent=11 // pred_check_branch
          %307 = sbr.rel (%p305) target = $region24
        $region23: #{bottleneck_forward_nhwc.1} parent=11 // pred_region
          _
        $region24: #{bottleneck_forward_nhwc.1} parent=11 // pred_fallthru
          _
        // Predicated region
        $region25: #{bottleneck_forward_nhwc.1} parent=11 // pred_check
          %p308 = pneg %p214
        $region26: #{bottleneck_forward_nhwc.1} parent=11 // pred_check_branch
          %310 = sbr.rel (%p308) target = $region28
        $region27: #{bottleneck_forward_nhwc.1} parent=11 // pred_region
          _
        $region28: #{bottleneck_forward_nhwc.1} parent=11 // pred_fallthru
          _
        // Predicated region
        $region29: #{bottleneck_forward_nhwc.1} parent=11 // pred_check
          %p311 = pneg %p235
        $region30: #{bottleneck_forward_nhwc.1} parent=11 // pred_check_branch
          %313 = sbr.rel (%p311) target = $region32
        $region31: #{bottleneck_forward_nhwc.1} parent=11 // pred_region
          _
        $region32: #{bottleneck_forward_nhwc.1} parent=11 // pred_fallthru
          _
        // Predicated region
        $region33: #{bottleneck_forward_nhwc.1} parent=11 // pred_check
          %p314 = pneg %p256
        $region34: #{bottleneck_forward_nhwc.1} parent=11 // pred_check_branch
          %316 = sbr.rel (%p314) target = $region36
        $region35: #{bottleneck_forward_nhwc.1} parent=11 // pred_region
          _
        $region36: #{bottleneck_forward_nhwc.1} parent=11 // pred_fallthru
          _
      $region12: #{bottleneck_forward_nhwc.1} parent=5 // pred_fallthru
        _
      %p317 = scmp.lt.s32.totalorder %s18, 4
      // Predicated region
      $region37: #{bottleneck_forward_nhwc.1} parent=5 // pred_check
        %p318 = pneg %p317
      $region38: #{bottleneck_forward_nhwc.1} parent=5 // pred_check_branch
        %320 = sbr.rel (%p318) target = $region40
      $region39: #{bottleneck_forward_nhwc.1} parent=5 // pred_region
        // Predicated region
        $region41: #{bottleneck_forward_nhwc.1} parent=39 // pred_check
          %p321 = pneg %p52
        $region42: #{bottleneck_forward_nhwc.1} parent=39 // pred_check_branch
          %323 = sbr.rel (%p321) target = $region44
        $region43: #{bottleneck_forward_nhwc.1} parent=39 // pred_region
          %s324 = smul.u32 8, %s26
          %p325 = scmp.lt.s32.totalorder %s25, 1
          %s326 = scalar_select %p325, %s25, 1
          %p327 = scmp.lt.s32.totalorder %s324, 15
          %s328 = scalar_select %p327, %s324, 15
          %s329 = smul.addr %s328, 2
          %s330 = smul.addr %s326, 32
          %s331 = sadd.s32 %s329, %s330
          %s332 = smul.addr %s331, 4
          %s333 = scalar_lea.vmem %s0, %s332
          %s334 = smul.u32 8, %s26
        $region44: #{bottleneck_forward_nhwc.1} parent=39 // pred_fallthru
          _
        // Predicated region
        $region45: #{bottleneck_forward_nhwc.1} parent=39 // pred_check
          %p335 = pneg %p88
        $region46: #{bottleneck_forward_nhwc.1} parent=39 // pred_check_branch
          %337 = sbr.rel (%p335) target = $region48
        $region47: #{bottleneck_forward_nhwc.1} parent=39 // pred_region
          %s338 = smul.u32 %s26, 8
          %s339 = ssub.s32 %s338, 1
          %p340 = scmp.gt.s32.totalorder %s339, 0
          %s341 = scalar_select %p340, %s339, 0
          %p342 = scmp.lt.s32.totalorder %s25, 1
          %s343 = scalar_select %p342, %s25, 1
          %p344 = scmp.lt.s32.totalorder %s341, 15
          %s345 = scalar_select %p344, %s341, 15
          %s346 = smul.addr %s345, 2
          %s347 = smul.addr %s343, 32
          %s348 = sadd.s32 %s346, %s347
          %s349 = smul.addr %s348, 4
          %s350 = scalar_lea.vmem %s1, %s349
          %s351 = smul.u32 %s26, 8
          %s352 = ssub.s32 %s351, 1
          %p353 = scmp.gt.s32.totalorder %s352, 0
          %s354 = scalar_select %p353, %s352, 0
        $region48: #{bottleneck_forward_nhwc.1} parent=39 // pred_fallthru
          _
        // Predicated region
        $region49: #{bottleneck_forward_nhwc.1} parent=39 // pred_check
          %p355 = pneg %p124
        $region50: #{bottleneck_forward_nhwc.1} parent=39 // pred_check_branch
          %357 = sbr.rel (%p355) target = $region52
        $region51: #{bottleneck_forward_nhwc.1} parent=39 // pred_region
          %s358 = smul.u32 %s26, 8
          %s359 = sadd.s32 %s358, 8
          %p360 = scmp.lt.s32.totalorder %s359, 15
          %s361 = scalar_select %p360, %s359, 15
          %p362 = scmp.lt.s32.totalorder %s25, 1
          %s363 = scalar_select %p362, %s25, 1
          %p364 = scmp.lt.s32.totalorder %s361, 15
          %s365 = scalar_select %p364, %s361, 15
          %s366 = smul.addr %s365, 2
          %s367 = smul.addr %s363, 32
          %s368 = sadd.s32 %s366, %s367
          %s369 = smul.addr %s368, 4
          %s370 = scalar_lea.vmem %s2, %s369
          %s371 = smul.u32 %s26, 8
          %s372 = sadd.s32 %s371, 8
          %p373 = scmp.lt.s32.totalorder %s372, 15
          %s374 = scalar_select %p373, %s372, 15
        $region52: #{bottleneck_forward_nhwc.1} parent=39 // pred_fallthru
          _
      $region40: #{bottleneck_forward_nhwc.1} parent=5 // pred_fallthru
        _
      %p375 = scmp.le.s32.totalorder 1, %s18
      %p376 = scmp.lt.s32.totalorder %s18, 5
      %p377 = pnand %p375, %p376
      %p378 = pneg %p377
      // Predicated region
      $region53: #{bottleneck_forward_nhwc.1} parent=5 // pred_check
        _
      $region54: #{bottleneck_forward_nhwc.1} parent=5 // pred_check_branch
        %380 = sbr.rel (%p377) target = $region56
      $region55: #{bottleneck_forward_nhwc.1} parent=5 // pred_region
        %s381 = ssub.s32 %s18, 1
        %s382 = smul.u32 8, %s28
        %p383 = scmp.lt.s32.totalorder %s27, 1
        %s384 = scalar_select %p383, %s27, 1
        %p385 = scmp.lt.s32.totalorder %s382, 15
        %s386 = scalar_select %p385, %s382, 15
        %s387 = smul.addr %s386, 2
        %s388 = smul.addr %s384, 32
        %s389 = sadd.s32 %s387, %s388
        %s390 = smul.addr %s389, 4
        %s391 = scalar_lea.vmem %s0, %s390
        %p392 = pneg %p58
        %p393 = pneg %p55
        %s394 = smul.u32 %s28, 8
        %s395 = ssub.s32 %s394, 1
        %p396 = scmp.gt.s32.totalorder %s395, 0
        %s397 = scalar_select %p396, %s395, 0
        %p398 = scmp.lt.s32.totalorder %s27, 1
        %s399 = scalar_select %p398, %s27, 1
        %p400 = scmp.lt.s32.totalorder %s397, 15
        %s401 = scalar_select %p400, %s397, 15
        %s402 = smul.addr %s401, 2
        %s403 = smul.addr %s399, 32
        %s404 = sadd.s32 %s402, %s403
        %s405 = smul.addr %s404, 4
        %s406 = scalar_lea.vmem %s1, %s405
        %p407 = pneg %p94
        %p408 = pneg %p91
        %s409 = smul.u32 %s28, 8
        %s410 = sadd.s32 %s409, 8
        %p411 = scmp.lt.s32.totalorder %s410, 15
        %s412 = scalar_select %p411, %s410, 15
        %p413 = scmp.lt.s32.totalorder %s27, 1
        %s414 = scalar_select %p413, %s27, 1
        %p415 = scmp.lt.s32.totalorder %s412, 15
        %s416 = scalar_select %p415, %s412, 15
        %s417 = smul.addr %s416, 2
        %s418 = smul.addr %s414, 32
        %s419 = sadd.s32 %s417, %s418
        %s420 = smul.addr %s419, 4
        %s421 = scalar_lea.vmem %s2, %s420
        %p422 = pneg %p130
        %p423 = pneg %p127
        %p424 = pneg %p151
        %p425 = pneg %p148
        %p426 = pneg %p172
        %p427 = pneg %p169
        %p428 = pneg %p193
        %p429 = pneg %p190
        %p430 = pneg %p214
        %p431 = pneg %p211
        %p432 = pneg %p235
        %p433 = pneg %p232
        %p434 = pneg %p256
        %p435 = pneg %p253
        %p436 = pneg %p284
        %p437 = pneg %p281
        %s438 = sand.u32 %s271, 1
        %s439 = scalar_lea.sflag [#allocation5], %s438
        %s440 = sand.u32 %s271, 1
        %s441 = smul.addr %s440, 128
        %s442 = scalar_lea.vmem [#allocation4], %s441
        %s443 = smul.u32 8, %s28
        %p444 = scmp.lt.s32.totalorder %s27, 1
        %s445 = scalar_select %p444, %s27, 1
        %p446 = scmp.lt.s32.totalorder %s443, 15
        %s447 = scalar_select %p446, %s443, 15
        %s448 = smul.addr %s447, 2
        %s449 = smul.addr %s445, 32
        %s450 = sadd.s32 %s448, %s449
        %s451 = smul.addr %s450, 4
        %s452 = scalar_lea.vmem %s0, %s451
        %s453 = smul.u32 8, %s28
        %s454 = smul.u32 %s28, 8
        %s455 = ssub.s32 %s454, 1
        %p456 = scmp.gt.s32.totalorder %s455, 0
        %s457 = scalar_select %p456, %s455, 0
        %p458 = scmp.lt.s32.totalorder %s27, 1
        %s459 = scalar_select %p458, %s27, 1
        %p460 = scmp.lt.s32.totalorder %s457, 15
        %s461 = scalar_select %p460, %s457, 15
        %s462 = smul.addr %s461, 2
        %s463 = smul.addr %s459, 32
        %s464 = sadd.s32 %s462, %s463
        %s465 = smul.addr %s464, 4
        %s466 = scalar_lea.vmem %s1, %s465
        %s467 = smul.u32 %s28, 8
        %s468 = ssub.s32 %s467, 1
        %p469 = scmp.gt.s32.totalorder %s468, 0
        %s470 = scalar_select %p469, %s468, 0
        %s471 = smul.u32 %s28, 8
        %s472 = sadd.s32 %s471, 8
        %p473 = scmp.lt.s32.totalorder %s472, 15
        %s474 = scalar_select %p473, %s472, 15
        %p475 = scmp.lt.s32.totalorder %s27, 1
        %s476 = scalar_select %p475, %s27, 1
        %p477 = scmp.lt.s32.totalorder %s474, 15
        %s478 = scalar_select %p477, %s474, 15
        %s479 = smul.addr %s478, 2
        %s480 = smul.addr %s476, 32
        %s481 = sadd.s32 %s479, %s480
        %s482 = smul.addr %s481, 4
        %s483 = scalar_lea.vmem %s2, %s482
        %s484 = smul.u32 %s28, 8
        %s485 = sadd.s32 %s484, 8
        %p486 = scmp.lt.s32.totalorder %s485, 15
        %s487 = scalar_select %p486, %s485, 15
        %s488 = smul.u32 8, %s28
        %v490 = vld [vmem:[%s3] sm:$0xf]
        %v491 = vld [vmem:[%s3 + $0x4] sm:$0xf]
        %v492 = vld [vmem:[%s4] sm:$0x1]
        %v493 = vld [vmem:[%s452] sm:$0xf]
        %v494 = vld [vmem:[%s452 + $0x4] sm:$0xf]
        %v495 = vld [vmem:[%s452 + $0x8] sm:$0xf]
        %v496 = vld [vmem:[%s452 + $0xc] sm:$0xf]
        %v497 = vld [vmem:[%s452 + $0x10] sm:$0xf]
        %v498 = vld [vmem:[%s452 + $0x14] sm:$0xf]
        %v499 = vld [vmem:[%s452 + $0x18] sm:$0xf]
        %v500 = vld [vmem:[%s452 + $0x1c] sm:$0xf]
        %v501 = vld [vmem:[%s452 + $0x20] sm:$0xf]
        %v502 = vld [vmem:[%s452 + $0x24] sm:$0xf]
        %v503 = vld [vmem:[%s452 + $0x28] sm:$0xf]
        %v504 = vld [vmem:[%s452 + $0x2c] sm:$0xf]
        %v505 = vld [vmem:[%s452 + $0x30] sm:$0xf]
        %v506 = vld [vmem:[%s452 + $0x34] sm:$0xf]
        %v507 = vld [vmem:[%s452 + $0x38] sm:$0xf]
        %v508 = vld [vmem:[%s452 + $0x3c] sm:$0xf]
        %v510 = vlaneseq
        %v511 = vshrl.u32 %v510, 7
        %v512 = vsub.s32 0, %v511
        %v513 = vrot.slane %v492, %v512
        %v531 = vunpack.c.l.b16 %v493
        %v532 = vunpack.c.l.b16 %v494
        %v533 = vunpack.c.l.b16 %v495
        %v534 = vunpack.c.l.b16 %v496
        %v535 = vunpack.c.l.b16 %v497
        %v536 = vunpack.c.l.b16 %v498
        %v537 = vunpack.c.l.b16 %v499
        %v538 = vunpack.c.l.b16 %v500
        %v539 = vunpack.c.l.b16 %v501
        %v540 = vunpack.c.l.b16 %v502
        %v541 = vunpack.c.l.b16 %v503
        %v542 = vunpack.c.l.b16 %v504
        %v543 = vunpack.c.l.b16 %v505
        %v544 = vunpack.c.l.b16 %v506
        %v545 = vunpack.c.l.b16 %v507
        %v546 = vunpack.c.l.b16 %v508
        %v547 = vpack.c.b16 %v532, %v531
        %v548 = vpack.c.b16 %v534, %v533
        %v549 = vpack.c.b16 %v536, %v535
        %v550 = vpack.c.b16 %v538, %v537
        %v551 = vpack.c.b16 %v540, %v539
        %v552 = vpack.c.b16 %v542, %v541
        %v553 = vpack.c.b16 %v544, %v543
        %v554 = vpack.c.b16 %v546, %v545
        %v557 = vunpack.c.l.b16 %v490
        %v558 = vunpack.c.l.b16 %v491
        %v559 = vpack.c.b16 %v558, %v557
        %vm561 = vcmask 130048
        %v563 = vsel %vm561, %v547, 0
        %v566 = vsel %vm561, %v548, 0
        %v569 = vsel %vm561, %v549, 0
        %v572 = vsel %vm561, %v550, 0
        %v575 = vsel %vm561, %v551, 0
        %v578 = vsel %vm561, %v552, 0
        %v581 = vsel %vm561, %v553, 0
        %v584 = vsel %vm561, %v554, 0
        %586 = vmatprep.subr.bf16.mxu0 0
        %587 = vmatpush1.bf16.msra.mxu0 %v559
        %588 = vmatprep.subr.bf16.mxu0 0
        %589 = vmatpush1.bf16.msra.mxu0 0
        %590 = vmatprep.subr.bf16.mxu0 0
        %591 = vmatpush1.bf16.msra.mxu0 0
        %592 = vmatprep.subr.bf16.mxu0 0
        %593 = vmatpush1.bf16.msra.mxu0 0
        %594 = vmatprep.subr.bf16.mxu0 0
        %595 = vmatpush1.bf16.msra.mxu0 0
        %596 = vmatprep.subr.bf16.mxu0 0
        %597 = vmatpush1.bf16.msra.mxu0 0
        %598 = vmatprep.subr.bf16.mxu0 0
        %599 = vmatpush1.bf16.msra.mxu0 0
        %600 = vmatprep.subr.bf16.mxu0 0
        %601 = vmatpush1.bf16.msra.mxu0 0
        %602 = vmatprep.subr.bf16.mxu0 0
        %603 = vmatpush1.bf16.msra.mxu0 0
        %604 = vmatprep.subr.bf16.mxu0 0
        %605 = vmatpush1.bf16.msra.mxu0 0
        %606 = vmatprep.subr.bf16.mxu0 0
        %607 = vmatpush1.bf16.msra.mxu0 0
        %608 = vmatprep.subr.bf16.mxu0 0
        %609 = vmatpush1.bf16.msra.mxu0 0
        %610 = vmatprep.subr.bf16.mxu0 0
        %611 = vmatpush1.bf16.msra.mxu0 0
        %612 = vmatprep.subr.bf16.mxu0 0
        %613 = vmatpush1.bf16.msra.mxu0 0
        %614 = vmatprep.subr.bf16.mxu0 0
        %615 = vmatpush1.bf16.msra.mxu0 0
        %616 = vmatprep.subr.bf16.mxu0 0
        %617 = vmatpush1.bf16.msra.mxu0 0
        %618 = vmatprep.mubr.bf16.mxu0 0
        %619 = vmatmul.mubr.bf16.gmra.mrb[0].mxu0 %v563
        %v620 = vpop.f32.mrb[0].mxu0
        %v621 = vadd.f32 %v513, %v620
        %v622 = vpop.f32.mrb[0].mxu0
        %v623 = vpop.f32.mrb[0].mxu0
        %v624 = vadd.f32 %v513, %v623
        %v625 = vpop.f32.mrb[0].mxu0
        %626 = vmatprep.mubr.bf16.mxu0 0
        %627 = vmatmul.mubr.bf16.gmra.mrb[0].mxu0 %v566
        %v628 = vpop.f32.mrb[0].mxu0
        %v629 = vadd.f32 %v513, %v628
        %v630 = vpop.f32.mrb[0].mxu0
        %v631 = vpop.f32.mrb[0].mxu0
        %v632 = vadd.f32 %v513, %v631
        %v633 = vpop.f32.mrb[0].mxu0
        %634 = vmatprep.mubr.bf16.mxu0 0
        %635 = vmatmul.mubr.bf16.gmra.mrb[0].mxu0 %v569
        %v636 = vpop.f32.mrb[0].mxu0
        %v637 = vadd.f32 %v513, %v636
        %v638 = vpop.f32.mrb[0].mxu0
        %v639 = vpop.f32.mrb[0].mxu0
        %v640 = vadd.f32 %v513, %v639
        %v641 = vpop.f32.mrb[0].mxu0
        %642 = vmatprep.mubr.bf16.mxu0 0
        %643 = vmatmul.mubr.bf16.gmra.mrb[0].mxu0 %v572
        %v644 = vpop.f32.mrb[0].mxu0
        %v645 = vadd.f32 %v513, %v644
        %v646 = vpop.f32.mrb[0].mxu0
        %v647 = vpop.f32.mrb[0].mxu0
        %v648 = vadd.f32 %v513, %v647
        %v649 = vpop.f32.mrb[0].mxu0
        %650 = vmatprep.mubr.bf16.mxu0 0
        %651 = vmatmul.mubr.bf16.gmra.mrb[0].mxu0 %v575
        %v652 = vpop.f32.mrb[0].mxu0
        %v653 = vadd.f32 %v513, %v652
        %v654 = vpop.f32.mrb[0].mxu0
        %v655 = vpop.f32.mrb[0].mxu0
        %v656 = vadd.f32 %v513, %v655
        %v657 = vpop.f32.mrb[0].mxu0
        %658 = vmatprep.mubr.bf16.mxu0 0
        %659 = vmatmul.mubr.bf16.gmra.mrb[0].mxu0 %v578
        %v660 = vpop.f32.mrb[0].mxu0
        %v661 = vadd.f32 %v513, %v660
        %v662 = vpop.f32.mrb[0].mxu0
        %v663 = vpop.f32.mrb[0].mxu0
        %v664 = vadd.f32 %v513, %v663
        %v665 = vpop.f32.mrb[0].mxu0
        %666 = vmatprep.mubr.bf16.mxu0 0
        %667 = vmatmul.mubr.bf16.gmra.mrb[0].mxu0 %v581
        %v668 = vpop.f32.mrb[0].mxu0
        %v669 = vadd.f32 %v513, %v668
        %v670 = vpop.f32.mrb[0].mxu0
        %v671 = vpop.f32.mrb[0].mxu0
        %v672 = vadd.f32 %v513, %v671
        %v673 = vpop.f32.mrb[0].mxu0
        %674 = vmatprep.mubr.bf16.mxu0 0
        %675 = vmatmul.mubr.bf16.gmra.mrb[0].mxu0 %v584
        %v676 = vpop.f32.mrb[0].mxu0
        %v677 = vadd.f32 %v513, %v676
        %v678 = vpop.f32.mrb[0].mxu0
        %v679 = vpop.f32.mrb[0].mxu0
        %v680 = vadd.f32 %v513, %v679
        %v681 = vpop.f32.mrb[0].mxu0
        %682 = vdwg.mxu0
        %v683 = vmax.f32 %v621, 0.0
        %v684 = vmax.f32 %v624, 0.0
        %v685 = vmax.f32 %v629, 0.0
        %v686 = vmax.f32 %v632, 0.0
        %v687 = vmax.f32 %v637, 0.0
        %v688 = vmax.f32 %v640, 0.0
        %v689 = vmax.f32 %v645, 0.0
        %v690 = vmax.f32 %v648, 0.0
        %v691 = vmax.f32 %v653, 0.0
        %v692 = vmax.f32 %v656, 0.0
        %v693 = vmax.f32 %v661, 0.0
        %v694 = vmax.f32 %v664, 0.0
        %v695 = vmax.f32 %v669, 0.0
        %v696 = vmax.f32 %v672, 0.0
        %v697 = vmax.f32 %v677, 0.0
        %v698 = vmax.f32 %v680, 0.0
        %v699 = vpack.c.bf16 %v684, %v683
        %v700 = vpack.c.bf16 %v686, %v685
        %v701 = vpack.c.bf16 %v688, %v687
        %v702 = vpack.c.bf16 %v690, %v689
        %v703 = vpack.c.bf16 %v692, %v691
        %v704 = vpack.c.bf16 %v694, %v693
        %v705 = vpack.c.bf16 %v696, %v695
        %v706 = vpack.c.bf16 %v698, %v697
        %v707 = vld [vmem:[%s466] sm:$0xf]
        %v708 = vld [vmem:[%s466 + $0x4] sm:$0xf]
        %v709 = vld [vmem:[%s483] sm:$0xf]
        %v710 = vld [vmem:[%s483 + $0x4] sm:$0xf]
        %v713 = vunpack.c.l.b16 %v707
        %v714 = vunpack.c.l.b16 %v708
        %v715 = vpack.c.b16 %v714, %v713
        %v717 = vsel %vm561, %v715, 0
        %719 = vmatprep.subr.bf16.mxu0 0
        %720 = vmatpush1.bf16.msra.mxu0 %v559
        %721 = vmatprep.subr.bf16.mxu0 0
        %722 = vmatpush1.bf16.msra.mxu0 0
        %723 = vmatprep.subr.bf16.mxu0 0
        %724 = vmatpush1.bf16.msra.mxu0 0
        %725 = vmatprep.subr.bf16.mxu0 0
        %726 = vmatpush1.bf16.msra.mxu0 0
        %727 = vmatprep.subr.bf16.mxu0 0
        %728 = vmatpush1.bf16.msra.mxu0 0
        %729 = vmatprep.subr.bf16.mxu0 0
        %730 = vmatpush1.bf16.msra.mxu0 0
        %731 = vmatprep.subr.bf16.mxu0 0
        %732 = vmatpush1.bf16.msra.mxu0 0
        %733 = vmatprep.subr.bf16.mxu0 0
        %734 = vmatpush1.bf16.msra.mxu0 0
        %735 = vmatprep.subr.bf16.mxu0 0
        %736 = vmatpush1.bf16.msra.mxu0 0
        %737 = vmatprep.subr.bf16.mxu0 0
        %738 = vmatpush1.bf16.msra.mxu0 0
        %739 = vmatprep.subr.bf16.mxu0 0
        %740 = vmatpush1.bf16.msra.mxu0 0
        %741 = vmatprep.subr.bf16.mxu0 0
        %742 = vmatpush1.bf16.msra.mxu0 0
        %743 = vmatprep.subr.bf16.mxu0 0
        %744 = vmatpush1.bf16.msra.mxu0 0
        %745 = vmatprep.subr.bf16.mxu0 0
        %746 = vmatpush1.bf16.msra.mxu0 0
        %747 = vmatprep.subr.bf16.mxu0 0
        %748 = vmatpush1.bf16.msra.mxu0 0
        %749 = vmatprep.subr.bf16.mxu0 0
        %750 = vmatpush1.bf16.msra.mxu0 0
        %751 = vmatprep.mubr.bf16.mxu0 0
        %752 = vmatmul.mubr.bf16.gmra.mrb[0].mxu0 %v717
        %v753 = vpop.f32.mrb[0].mxu0
        %v754 = vadd.f32 %v513, %v753
        %v755 = vpop.f32.mrb[0].mxu0
        %v756 = vpop.f32.mrb[0].mxu0
        %v757 = vadd.f32 %v513, %v756
        %v758 = vpop.f32.mrb[0].mxu0
        %759 = vdwg.mxu0
        %v760 = vmax.f32 %v754, 0.0
        %v761 = vmax.f32 %v757, 0.0
        %v764 = vunpack.c.l.b16 %v709
        %v765 = vunpack.c.l.b16 %v710
        %v766 = vpack.c.b16 %v765, %v764
        %v768 = vsel %vm561, %v766, 0
        %770 = vmatprep.subr.bf16.mxu0 0
        %771 = vmatpush1.bf16.msra.mxu0 %v559
        %772 = vmatprep.subr.bf16.mxu0 0
        %773 = vmatpush1.bf16.msra.mxu0 0
        %774 = vmatprep.subr.bf16.mxu0 0
        %775 = vmatpush1.bf16.msra.mxu0 0
        %776 = vmatprep.subr.bf16.mxu0 0
        %777 = vmatpush1.bf16.msra.mxu0 0
        %778 = vmatprep.subr.bf16.mxu0 0
        %779 = vmatpush1.bf16.msra.mxu0 0
        %780 = vmatprep.subr.bf16.mxu0 0
        %781 = vmatpush1.bf16.msra.mxu0 0
        %782 = vmatprep.subr.bf16.mxu0 0
        %783 = vmatpush1.bf16.msra.mxu0 0
        %784 = vmatprep.subr.bf16.mxu0 0
        %785 = vmatpush1.bf16.msra.mxu0 0
        %786 = vmatprep.subr.bf16.mxu0 0
        %787 = vmatpush1.bf16.msra.mxu0 0
        %788 = vmatprep.subr.bf16.mxu0 0
        %789 = vmatpush1.bf16.msra.mxu0 0
        %790 = vmatprep.subr.bf16.mxu0 0
        %791 = vmatpush1.bf16.msra.mxu0 0
        %792 = vmatprep.subr.bf16.mxu0 0
        %793 = vmatpush1.bf16.msra.mxu0 0
        %794 = vmatprep.subr.bf16.mxu0 0
        %795 = vmatpush1.bf16.msra.mxu0 0
        %796 = vmatprep.subr.bf16.mxu0 0
        %797 = vmatpush1.bf16.msra.mxu0 0
        %798 = vmatprep.subr.bf16.mxu0 0
        %799 = vmatpush1.bf16.msra.mxu0 0
        %800 = vmatprep.subr.bf16.mxu0 0
        %801 = vmatpush1.bf16.msra.mxu0 0
        %802 = vmatprep.mubr.bf16.mxu0 0
        %803 = vmatmul.mubr.bf16.gmra.mrb[0].mxu0 %v768
        %v804 = vpop.f32.mrb[0].mxu0
        %v805 = vadd.f32 %v513, %v804
        %v806 = vpop.f32.mrb[0].mxu0
        %v807 = vpop.f32.mrb[0].mxu0
        %v808 = vadd.f32 %v513, %v807
        %v809 = vpop.f32.mrb[0].mxu0
        %810 = vdwg.mxu0
        %v811 = vmax.f32 %v805, 0.0
        %v812 = vmax.f32 %v808, 0.0
        %p813 = scmp.eq.s32.totalorder %s28, 0
        %s814 = scalar_select %p813, 1, 0
        %v815 = vstv %s814
        %vm816 = vcmp.eq.s32.totalorder %v815, 1
        %v817 = vsel %vm816, 0.0, %v760
        %v818 = vsel %vm816, 0.0, %v761
        %v819 = vpack.c.bf16 %v818, %v817
        %p820 = scmp.eq.s32.totalorder %s28, 1
        %s821 = scalar_select %p820, 1, 0
        %v822 = vstv %s821
        %vm823 = vcmp.eq.s32.totalorder %v822, 1
        %v824 = vsel %vm823, 0.0, %v811
        %v825 = vsel %vm823, 0.0, %v812
        %v826 = vpack.c.bf16 %v825, %v824
        %vm827 = vcmask 24576
        %vm828 = vsmask.f32 256
        %vm829 = vmand %vm827, %vm828
        %v830 = vld [vmem:[#allocation2] sm:$0x1]
        %v831 = vsel %vm829, 0, %v830
        %832 = vst [vmem:[#allocation2] sm:$0x1] %v831
        %v833 = vld [vmem:[#allocation2 + $0xc] sm:$0x1]
        %v834 = vsel %vm829, 0, %v833
        %835 = vst [vmem:[#allocation2 + $0xc] sm:$0x1] %v834
        %v836 = vld [vmem:[#allocation2 + $0x18] sm:$0x1]
        %v837 = vsel %vm829, 0, %v836
        %838 = vst [vmem:[#allocation2 + $0x18] sm:$0x1] %v837
        %v839 = vld [vmem:[#allocation2 + $0x24] sm:$0x1]
        %v840 = vsel %vm829, 0, %v839
        %841 = vst [vmem:[#allocation2 + $0x24] sm:$0x1] %v840
        %v842 = vld [vmem:[#allocation2 + $0x30] sm:$0x1]
        %v843 = vsel %vm829, 0, %v842
        %844 = vst [vmem:[#allocation2 + $0x30] sm:$0x1] %v843
        %v845 = vld [vmem:[#allocation2 + $0x3c] sm:$0x1]
        %v846 = vsel %vm829, 0, %v845
        %847 = vst [vmem:[#allocation2 + $0x3c] sm:$0x1] %v846
        %v848 = vld [vmem:[#allocation2 + $0x48] sm:$0x1]
        %v849 = vsel %vm829, 0, %v848
        %850 = vst [vmem:[#allocation2 + $0x48] sm:$0x1] %v849
        %v851 = vld [vmem:[#allocation2 + $0x54] sm:$0x1]
        %v852 = vsel %vm829, 0, %v851
        %853 = vst [vmem:[#allocation2 + $0x54] sm:$0x1] %v852
        %v854 = vld [vmem:[#allocation2 + $0x60] sm:$0x1]
        %v855 = vsel %vm829, 0, %v854
        %856 = vst [vmem:[#allocation2 + $0x60] sm:$0x1] %v855
        %v857 = vld [vmem:[#allocation2 + $0x6c] sm:$0x1]
        %v858 = vsel %vm829, 0, %v857
        %859 = vst [vmem:[#allocation2 + $0x6c] sm:$0x1] %v858
        %vm860 = vsmask.f32 7938
        %vm861 = vmand %vm827, %vm860
        %v862 = vld [vmem:[#allocation2 + $0x8] sm:$0x1]
        %v863 = vsel %vm861, 0, %v862
        %864 = vst [vmem:[#allocation2 + $0x8] sm:$0x1] %v863
        %v865 = vld [vmem:[#allocation2 + $0x14] sm:$0x1]
        %v866 = vsel %vm861, 0, %v865
        %867 = vst [vmem:[#allocation2 + $0x14] sm:$0x1] %v866
        %v868 = vld [vmem:[#allocation2 + $0x20] sm:$0x1]
        %v869 = vsel %vm861, 0, %v868
        %870 = vst [vmem:[#allocation2 + $0x20] sm:$0x1] %v869
        %v871 = vld [vmem:[#allocation2 + $0x2c] sm:$0x1]
        %v872 = vsel %vm861, 0, %v871
        %873 = vst [vmem:[#allocation2 + $0x2c] sm:$0x1] %v872
        %v874 = vld [vmem:[#allocation2 + $0x38] sm:$0x1]
        %v875 = vsel %vm861, 0, %v874
        %876 = vst [vmem:[#allocation2 + $0x38] sm:$0x1] %v875
        %v877 = vld [vmem:[#allocation2 + $0x44] sm:$0x1]
        %v878 = vsel %vm861, 0, %v877
        %879 = vst [vmem:[#allocation2 + $0x44] sm:$0x1] %v878
        %v880 = vld [vmem:[#allocation2 + $0x50] sm:$0x1]
        %v881 = vsel %vm861, 0, %v880
        %882 = vst [vmem:[#allocation2 + $0x50] sm:$0x1] %v881
        %v883 = vld [vmem:[#allocation2 + $0x5c] sm:$0x1]
        %v884 = vsel %vm861, 0, %v883
        %885 = vst [vmem:[#allocation2 + $0x5c] sm:$0x1] %v884
        %v886 = vld [vmem:[#allocation2 + $0x68] sm:$0x1]
        %v887 = vsel %vm861, 0, %v886
        %888 = vst [vmem:[#allocation2 + $0x68] sm:$0x1] %v887
        %v889 = vld [vmem:[#allocation2 + $0x74] sm:$0x1]
        %v890 = vsel %vm861, 0, %v889
        %891 = vst [vmem:[#allocation2 + $0x74] sm:$0x1] %v890
        %v900 = vunpack.c.l.b16 %v699
        %v901 = vunpack.c.h.b16 %v699
        %v902 = vunpack.c.l.b16 %v700
        %v903 = vunpack.c.h.b16 %v700
        %v904 = vunpack.c.l.b16 %v701
        %v905 = vunpack.c.h.b16 %v701
        %v906 = vunpack.c.l.b16 %v702
        %v907 = vunpack.c.h.b16 %v702
        %v908 = vunpack.c.l.b16 %v703
        %v909 = vunpack.c.h.b16 %v703
        %v910 = vunpack.c.l.b16 %v704
        %v911 = vunpack.c.h.b16 %v704
        %v912 = vunpack.c.l.b16 %v705
        %v913 = vunpack.c.h.b16 %v705
        %v914 = vunpack.c.l.b16 %v706
        %v915 = vunpack.c.h.b16 %v706
        %v916 = vpack.c.b16 %v900, %v900
        %v917 = vpack.c.b16 %v901, %v901
        %v918 = vpack.c.b16 %v902, %v902
        %v919 = vpack.c.b16 %v903, %v903
        %v920 = vpack.c.b16 %v904, %v904
        %v921 = vpack.c.b16 %v905, %v905
        %v922 = vpack.c.b16 %v906, %v906
        %v923 = vpack.c.b16 %v907, %v907
        %v924 = vpack.c.b16 %v908, %v908
        %v925 = vpack.c.b16 %v909, %v909
        %v926 = vpack.c.b16 %v910, %v910
        %v927 = vpack.c.b16 %v911, %v911
        %v928 = vpack.c.b16 %v912, %v912
        %v929 = vpack.c.b16 %v913, %v913
        %v930 = vpack.c.b16 %v914, %v914
        %v931 = vpack.c.b16 %v915, %v915
        %vm932 = vsmask.f32 4368
        %vm933 = vmor %vm828, %vm932
        %v935 = vshrl.u32 %v916, 16
        %v937 = vrot.slane %v935, 7
        %v938 = vshll.u32 %v916, 16
        %v940 = vor.u32 %v937, %v938
        %v941 = vrot.slane %v937, 4
        %v943 = vshrl.u32 %v917, 16
        %v945 = vrot.slane %v943, 7
        %v946 = vshll.u32 %v917, 16
        %v948 = vor.u32 %v945, %v946
        %v949 = vsel %vm933, %v941, %v948
        %v950 = vrot.slane %v945, 4
        %v952 = vshrl.u32 %v918, 16
        %v954 = vrot.slane %v952, 7
        %v955 = vshll.u32 %v918, 16
        %v957 = vor.u32 %v954, %v955
        %v958 = vrot.slane %v954, 4
        %v960 = vshrl.u32 %v919, 16
        %v962 = vrot.slane %v960, 7
        %v963 = vshll.u32 %v919, 16
        %v965 = vor.u32 %v962, %v963
        %v966 = vsel %vm933, %v958, %v965
        %v967 = vrot.slane %v962, 4
        %v969 = vshrl.u32 %v920, 16
        %v971 = vrot.slane %v969, 7
        %v972 = vshll.u32 %v920, 16
        %v974 = vor.u32 %v971, %v972
        %v975 = vrot.slane %v971, 4
        %v977 = vshrl.u32 %v921, 16
        %v979 = vrot.slane %v977, 7
        %v980 = vshll.u32 %v921, 16
        %v982 = vor.u32 %v979, %v980
        %v983 = vsel %vm933, %v975, %v982
        %v984 = vrot.slane %v979, 4
        %v986 = vshrl.u32 %v922, 16
        %v988 = vrot.slane %v986, 7
        %v989 = vshll.u32 %v922, 16
        %v991 = vor.u32 %v988, %v989
        %v992 = vrot.slane %v988, 4
        %v994 = vshrl.u32 %v923, 16
        %v996 = vrot.slane %v994, 7
        %v997 = vshll.u32 %v923, 16
        %v999 = vor.u32 %v996, %v997
        %v1000 = vsel %vm933, %v992, %v999
        %v1001 = vrot.slane %v996, 4
        %v1003 = vshrl.u32 %v924, 16
        %v1005 = vrot.slane %v1003, 7
        %v1006 = vshll.u32 %v924, 16
        %v1008 = vor.u32 %v1005, %v1006
        %v1009 = vrot.slane %v1005, 4
        %v1011 = vshrl.u32 %v925, 16
        %v1013 = vrot.slane %v1011, 7
        %v1014 = vshll.u32 %v925, 16
        %v1016 = vor.u32 %v1013, %v1014
        %v1017 = vsel %vm933, %v1009, %v1016
        %v1018 = vrot.slane %v1013, 4
        %v1020 = vshrl.u32 %v926, 16
        %v1022 = vrot.slane %v1020, 7
        %v1023 = vshll.u32 %v926, 16
        %v1025 = vor.u32 %v1022, %v1023
        %v1026 = vrot.slane %v1022, 4
        %v1028 = vshrl.u32 %v927, 16
        %v1030 = vrot.slane %v1028, 7
        %v1031 = vshll.u32 %v927, 16
        %v1033 = vor.u32 %v1030, %v1031
        %v1034 = vsel %vm933, %v1026, %v1033
        %v1035 = vrot.slane %v1030, 4
        %v1037 = vshrl.u32 %v928, 16
        %v1039 = vrot.slane %v1037, 7
        %v1040 = vshll.u32 %v928, 16
        %v1042 = vor.u32 %v1039, %v1040
        %v1043 = vrot.slane %v1039, 4
        %v1045 = vshrl.u32 %v929, 16
        %v1047 = vrot.slane %v1045, 7
        %v1048 = vshll.u32 %v929, 16
        %v1050 = vor.u32 %v1047, %v1048
        %v1051 = vsel %vm933, %v1043, %v1050
        %v1052 = vrot.slane %v1047, 4
        %v1054 = vshrl.u32 %v930, 16
        %v1056 = vrot.slane %v1054, 7
        %v1057 = vshll.u32 %v930, 16
        %v1059 = vor.u32 %v1056, %v1057
        %v1060 = vrot.slane %v1056, 4
        %v1062 = vshrl.u32 %v931, 16
        %v1064 = vrot.slane %v1062, 7
        %v1065 = vshll.u32 %v931, 16
        %v1067 = vor.u32 %v1064, %v1065
        %v1068 = vsel %vm933, %v1060, %v1067
        %v1069 = vrot.slane %v1064, 4
        %s1094 = scalar_lea.vmem [#allocation2], 12
        %vm1095 = vcmask 27648
        %vm1096 = vmand %vm1095, %vm860
        %v1097 = vld [vmem:[%s1094] sm:$0xf]
        %v1098 = vsel %vm1096, %v940, %v1097
        %1099 = vst [vmem:[%s1094] sm:$0xf] %v1098
        %vm1100 = vcmask 27648
        %1101 = vst.msk [vmem:[%s1094 + $0x4] sm:$0xf] %vm1100, %v949
        %v1102 = vld [vmem:[%s1094 + $0x8] sm:$0x1]
        %v1103 = vsel %vm829, %v950, %v1102
        %1104 = vst [vmem:[%s1094 + $0x8] sm:$0x1] %v1103
        %v1105 = vld [vmem:[%s1094 + $0xc] sm:$0xf]
        %v1106 = vsel %vm1096, %v957, %v1105
        %1107 = vst [vmem:[%s1094 + $0xc] sm:$0xf] %v1106
        %1108 = vst.msk [vmem:[%s1094 + $0x10] sm:$0xf] %vm1100, %v966
        %v1109 = vld [vmem:[%s1094 + $0x14] sm:$0x1]
        %v1110 = vsel %vm829, %v967, %v1109
        %1111 = vst [vmem:[%s1094 + $0x14] sm:$0x1] %v1110
        %v1112 = vld [vmem:[%s1094 + $0x18] sm:$0xf]
        %v1113 = vsel %vm1096, %v974, %v1112
        %1114 = vst [vmem:[%s1094 + $0x18] sm:$0xf] %v1113
        %1115 = vst.msk [vmem:[%s1094 + $0x1c] sm:$0xf] %vm1100, %v983
        %v1116 = vld [vmem:[%s1094 + $0x20] sm:$0x1]
        %v1117 = vsel %vm829, %v984, %v1116
        %1118 = vst [vmem:[%s1094 + $0x20] sm:$0x1] %v1117
        %v1119 = vld [vmem:[%s1094 + $0x24] sm:$0xf]
        %v1120 = vsel %vm1096, %v991, %v1119
        %1121 = vst [vmem:[%s1094 + $0x24] sm:$0xf] %v1120
        %1122 = vst.msk [vmem:[%s1094 + $0x28] sm:$0xf] %vm1100, %v1000
        %v1123 = vld [vmem:[%s1094 + $0x2c] sm:$0x1]
        %v1124 = vsel %vm829, %v1001, %v1123
        %1125 = vst [vmem:[%s1094 + $0x2c] sm:$0x1] %v1124
        %v1126 = vld [vmem:[%s1094 + $0x30] sm:$0xf]
        %v1127 = vsel %vm1096, %v1008, %v1126
        %1128 = vst [vmem:[%s1094 + $0x30] sm:$0xf] %v1127
        %1129 = vst.msk [vmem:[%s1094 + $0x34] sm:$0xf] %vm1100, %v1017
        %v1130 = vld [vmem:[%s1094 + $0x38] sm:$0x1]
        %v1131 = vsel %vm829, %v1018, %v1130
        %1132 = vst [vmem:[%s1094 + $0x38] sm:$0x1] %v1131
        %v1133 = vld [vmem:[%s1094 + $0x3c] sm:$0xf]
        %v1134 = vsel %vm1096, %v1025, %v1133
        %1135 = vst [vmem:[%s1094 + $0x3c] sm:$0xf] %v1134
        %1136 = vst.msk [vmem:[%s1094 + $0x40] sm:$0xf] %vm1100, %v1034
        %v1137 = vld [vmem:[%s1094 + $0x44] sm:$0x1]
        %v1138 = vsel %vm829, %v1035, %v1137
        %1139 = vst [vmem:[%s1094 + $0x44] sm:$0x1] %v1138
        %v1140 = vld [vmem:[%s1094 + $0x48] sm:$0xf]
        %v1141 = vsel %vm1096, %v1042, %v1140
        %1142 = vst [vmem:[%s1094 + $0x48] sm:$0xf] %v1141
        %1143 = vst.msk [vmem:[%s1094 + $0x4c] sm:$0xf] %vm1100, %v1051
        %v1144 = vld [vmem:[%s1094 + $0x50] sm:$0x1]
        %v1145 = vsel %vm829, %v1052, %v1144
        %1146 = vst [vmem:[%s1094 + $0x50] sm:$0x1] %v1145
        %v1147 = vld [vmem:[%s1094 + $0x54] sm:$0xf]
        %v1148 = vsel %vm1096, %v1059, %v1147
        %1149 = vst [vmem:[%s1094 + $0x54] sm:$0xf] %v1148
        %1150 = vst.msk [vmem:[%s1094 + $0x58] sm:$0xf] %vm1100, %v1068
        %v1151 = vld [vmem:[%s1094 + $0x5c] sm:$0x1]
        %v1152 = vsel %vm829, %v1069, %v1151
        %1153 = vst [vmem:[%s1094 + $0x5c] sm:$0x1] %v1152
        %v1155 = vunpack.c.l.b16 %v819
        %v1156 = vunpack.c.h.b16 %v819
        %v1157 = vpack.c.b16 %v1155, %v1155
        %v1158 = vpack.c.b16 %v1156, %v1156
        %v1160 = vshrl.u32 %v1157, 16
        %v1162 = vrot.slane %v1160, 7
        %v1163 = vshll.u32 %v1157, 16
        %v1165 = vor.u32 %v1162, %v1163
        %v1166 = vrot.slane %v1162, 4
        %v1168 = vshrl.u32 %v1158, 16
        %v1170 = vrot.slane %v1168, 7
        %v1171 = vshll.u32 %v1158, 16
        %v1173 = vor.u32 %v1170, %v1171
        %v1174 = vsel %vm933, %v1166, %v1173
        %v1175 = vrot.slane %v1170, 4
        %v1179 = vld [vmem:[#allocation2] sm:$0xf]
        %v1180 = vsel %vm1096, %v1165, %v1179
        %1181 = vst [vmem:[#allocation2] sm:$0xf] %v1180
        %1182 = vst.msk [vmem:[#allocation2 + $0x4] sm:$0xf] %vm1100, %v1174
        %v1183 = vld [vmem:[#allocation2 + $0x8] sm:$0x1]
        %v1184 = vsel %vm829, %v1175, %v1183
        %1185 = vst [vmem:[#allocation2 + $0x8] sm:$0x1] %v1184
        %v1187 = vunpack.c.l.b16 %v826
        %v1188 = vunpack.c.h.b16 %v826
        %v1189 = vpack.c.b16 %v1187, %v1187
        %v1190 = vpack.c.b16 %v1188, %v1188
        %v1192 = vshrl.u32 %v1189, 16
        %v1194 = vrot.slane %v1192, 7
        %v1195 = vshll.u32 %v1189, 16
        %v1197 = vor.u32 %v1194, %v1195
        %v1198 = vrot.slane %v1194, 4
        %v1200 = vshrl.u32 %v1190, 16
        %v1202 = vrot.slane %v1200, 7
        %v1203 = vshll.u32 %v1190, 16
        %v1205 = vor.u32 %v1202, %v1203
        %v1206 = vsel %vm933, %v1198, %v1205
        %v1207 = vrot.slane %v1202, 4
        %s1211 = scalar_lea.vmem [#allocation2], 108
        %v1212 = vld [vmem:[%s1211] sm:$0xf]
        %v1213 = vsel %vm1096, %v1197, %v1212
        %1214 = vst [vmem:[%s1211] sm:$0xf] %v1213
        %1215 = vst.msk [vmem:[%s1211 + $0x4] sm:$0xf] %vm1100, %v1206
        %v1216 = vld [vmem:[%s1211 + $0x8] sm:$0x1]
        %v1217 = vsel %vm829, %v1207, %v1216
        %1218 = vst [vmem:[%s1211 + $0x8] sm:$0x1] %v1217
        %v1219 = vld [vmem:[#allocation2] sm:$0xf]
        %v1220 = vld [vmem:[#allocation2 + $0x4] sm:$0xf]
        %v1221 = vld [vmem:[#allocation2 + $0xc] sm:$0xf]
        %v1222 = vld [vmem:[#allocation2 + $0x10] sm:$0xf]
        %v1223 = vld [vmem:[#allocation2 + $0x18] sm:$0xf]
        %v1224 = vld [vmem:[#allocation2 + $0x1c] sm:$0xf]
        %v1225 = vld [vmem:[#allocation2 + $0x24] sm:$0xf]
        %v1226 = vld [vmem:[#allocation2 + $0x28] sm:$0xf]
        %v1227 = vld [vmem:[#allocation2 + $0x30] sm:$0xf]
        %v1228 = vld [vmem:[#allocation2 + $0x34] sm:$0xf]
        %v1229 = vld [vmem:[#allocation2 + $0x3c] sm:$0xf]
        %v1230 = vld [vmem:[#allocation2 + $0x40] sm:$0xf]
        %v1231 = vld [vmem:[#allocation2 + $0x48] sm:$0xf]
        %v1232 = vld [vmem:[#allocation2 + $0x4c] sm:$0xf]
        %v1233 = vld [vmem:[#allocation2 + $0x54] sm:$0xf]
        %v1234 = vld [vmem:[#allocation2 + $0x58] sm:$0xf]
        %v1251 = vunpack.c.l.b16 %v1219
        %v1252 = vunpack.c.l.b16 %v1220
        %v1253 = vunpack.c.l.b16 %v1221
        %v1254 = vunpack.c.l.b16 %v1222
        %v1255 = vunpack.c.l.b16 %v1223
        %v1256 = vunpack.c.l.b16 %v1224
        %v1257 = vunpack.c.l.b16 %v1225
        %v1258 = vunpack.c.l.b16 %v1226
        %v1259 = vunpack.c.l.b16 %v1227
        %v1260 = vunpack.c.l.b16 %v1228
        %v1261 = vunpack.c.l.b16 %v1229
        %v1262 = vunpack.c.l.b16 %v1230
        %v1263 = vunpack.c.l.b16 %v1231
        %v1264 = vunpack.c.l.b16 %v1232
        %v1265 = vunpack.c.l.b16 %v1233
        %v1266 = vunpack.c.l.b16 %v1234
        %v1267 = vpack.c.b16 %v1252, %v1251
        %v1268 = vpack.c.b16 %v1254, %v1253
        %v1269 = vpack.c.b16 %v1256, %v1255
        %v1270 = vpack.c.b16 %v1258, %v1257
        %v1271 = vpack.c.b16 %v1260, %v1259
        %v1272 = vpack.c.b16 %v1262, %v1261
        %v1273 = vpack.c.b16 %v1264, %v1263
        %v1274 = vpack.c.b16 %v1266, %v1265
        %vm1283 = vcmask 31744
        %1284 = vst.msk [vmem:[#allocation3] sm:$0xff] %vm1283, %v1267
        %1285 = vst.msk [vmem:[#allocation3 + $0x8] sm:$0xff] %vm1283, %v1268
        %1286 = vst.msk [vmem:[#allocation3 + $0x10] sm:$0xff] %vm1283, %v1269
        %1287 = vst.msk [vmem:[#allocation3 + $0x18] sm:$0xff] %vm1283, %v1270
        %1288 = vst.msk [vmem:[#allocation3 + $0x20] sm:$0xff] %vm1283, %v1271
        %1289 = vst.msk [vmem:[#allocation3 + $0x28] sm:$0xff] %vm1283, %v1272
        %1290 = vst.msk [vmem:[#allocation3 + $0x30] sm:$0xff] %vm1283, %v1273
        %1291 = vst.msk [vmem:[#allocation3 + $0x38] sm:$0xff] %vm1283, %v1274
        %v1292 = vld [vmem:[#allocation2] sm:$0xf]
        %v1293 = vld [vmem:[#allocation2 + $0x4] sm:$0xf]
        %v1294 = vld [vmem:[#allocation2 + $0x8] sm:$0x1]
        %v1295 = vld [vmem:[#allocation2 + $0xc] sm:$0xf]
        %v1296 = vld [vmem:[#allocation2 + $0x10] sm:$0xf]
        %v1297 = vld [vmem:[#allocation2 + $0x14] sm:$0x1]
        %v1298 = vld [vmem:[#allocation2 + $0x18] sm:$0xf]
        %v1299 = vld [vmem:[#allocation2 + $0x1c] sm:$0xf]
        %v1300 = vld [vmem:[#allocation2 + $0x20] sm:$0x1]
        %v1301 = vld [vmem:[#allocation2 + $0x24] sm:$0xf]
        %v1302 = vld [vmem:[#allocation2 + $0x28] sm:$0xf]
        %v1303 = vld [vmem:[#allocation2 + $0x2c] sm:$0x1]
        %v1304 = vld [vmem:[#allocation2 + $0x30] sm:$0xf]
        %v1305 = vld [vmem:[#allocation2 + $0x34] sm:$0xf]
        %v1306 = vld [vmem:[#allocation2 + $0x38] sm:$0x1]
        %v1307 = vld [vmem:[#allocation2 + $0x3c] sm:$0xf]
        %v1308 = vld [vmem:[#allocation2 + $0x40] sm:$0xf]
        %v1309 = vld [vmem:[#allocation2 + $0x44] sm:$0x1]
        %v1310 = vld [vmem:[#allocation2 + $0x48] sm:$0xf]
        %v1311 = vld [vmem:[#allocation2 + $0x4c] sm:$0xf]
        %v1312 = vld [vmem:[#allocation2 + $0x50] sm:$0x1]
        %v1313 = vld [vmem:[#allocation2 + $0x54] sm:$0xf]
        %v1314 = vld [vmem:[#allocation2 + $0x58] sm:$0xf]
        %v1315 = vld [vmem:[#allocation2 + $0x5c] sm:$0x1]
        %vm1316 = vsmask.f32 3328
        %vm1317 = vsmask.f32 7440
        %vm1318 = vmor %vm1316, %vm1317
        %v1320 = vshrl.u32 %v1292, 16
        %v1322 = vrot.slane %v1320, 4
        %v1323 = vshll.u32 %v1292, 16
        %v1325 = vrot.slane %v1323, 5
        %v1326 = vor.u32 %v1322, %v1325
        %v1327 = vrot.slane %v1326, 4
        %v1329 = vshll.u32 %v1293, 16
        %v1331 = vrot.slane %v1329, 5
        %v1332 = vsel %vm1318, %v1327, %v1331
        %v1333 = vshrl.u32 %v1293, 16
        %v1335 = vrot.slane %v1333, 4
        %v1336 = vor.u32 %v1335, %v1331
        %v1337 = vrot.slane %v1336, 4
        %v1339 = vshll.u32 %v1294, 16
        %v1341 = vrot.slane %v1339, 5
        %v1342 = vsel %vm1318, %v1337, %v1341
        %v1344 = vshrl.u32 %v1295, 16
        %v1346 = vrot.slane %v1344, 4
        %v1347 = vshll.u32 %v1295, 16
        %v1349 = vrot.slane %v1347, 5
        %v1350 = vor.u32 %v1346, %v1349
        %v1351 = vrot.slane %v1350, 4
        %v1353 = vshll.u32 %v1296, 16
        %v1355 = vrot.slane %v1353, 5
        %v1356 = vsel %vm1318, %v1351, %v1355
        %v1357 = vshrl.u32 %v1296, 16
        %v1359 = vrot.slane %v1357, 4
        %v1360 = vor.u32 %v1359, %v1355
        %v1361 = vrot.slane %v1360, 4
        %v1363 = vshll.u32 %v1297, 16
        %v1365 = vrot.slane %v1363, 5
        %v1366 = vsel %vm1318, %v1361, %v1365
        %v1368 = vshrl.u32 %v1298, 16
        %v1370 = vrot.slane %v1368, 4
        %v1371 = vshll.u32 %v1298, 16
        %v1373 = vrot.slane %v1371, 5
        %v1374 = vor.u32 %v1370, %v1373
        %v1375 = vrot.slane %v1374, 4
        %v1377 = vshll.u32 %v1299, 16
        %v1379 = vrot.slane %v1377, 5
        %v1380 = vsel %vm1318, %v1375, %v1379
        %v1381 = vshrl.u32 %v1299, 16
        %v1383 = vrot.slane %v1381, 4
        %v1384 = vor.u32 %v1383, %v1379
        %v1385 = vrot.slane %v1384, 4
        %v1387 = vshll.u32 %v1300, 16
        %v1389 = vrot.slane %v1387, 5
        %v1390 = vsel %vm1318, %v1385, %v1389
        %v1392 = vshrl.u32 %v1301, 16
        %v1394 = vrot.slane %v1392, 4
        %v1395 = vshll.u32 %v1301, 16
        %v1397 = vrot.slane %v1395, 5
        %v1398 = vor.u32 %v1394, %v1397
        %v1399 = vrot.slane %v1398, 4
        %v1401 = vshll.u32 %v1302, 16
        %v1403 = vrot.slane %v1401, 5
        %v1404 = vsel %vm1318, %v1399, %v1403
        %v1405 = vshrl.u32 %v1302, 16
        %v1407 = vrot.slane %v1405, 4
        %v1408 = vor.u32 %v1407, %v1403
        %v1409 = vrot.slane %v1408, 4
        %v1411 = vshll.u32 %v1303, 16
        %v1413 = vrot.slane %v1411, 5
        %v1414 = vsel %vm1318, %v1409, %v1413
        %v1416 = vshrl.u32 %v1304, 16
        %v1418 = vrot.slane %v1416, 4
        %v1419 = vshll.u32 %v1304, 16
        %v1421 = vrot.slane %v1419, 5
        %v1422 = vor.u32 %v1418, %v1421
        %v1423 = vrot.slane %v1422, 4
        %v1425 = vshll.u32 %v1305, 16
        %v1427 = vrot.slane %v1425, 5
        %v1428 = vsel %vm1318, %v1423, %v1427
        %v1429 = vshrl.u32 %v1305, 16
        %v1431 = vrot.slane %v1429, 4
        %v1432 = vor.u32 %v1431, %v1427
        %v1433 = vrot.slane %v1432, 4
        %v1435 = vshll.u32 %v1306, 16
        %v1437 = vrot.slane %v1435, 5
        %v1438 = vsel %vm1318, %v1433, %v1437
        %v1440 = vshrl.u32 %v1307, 16
        %v1442 = vrot.slane %v1440, 4
        %v1443 = vshll.u32 %v1307, 16
        %v1445 = vrot.slane %v1443, 5
        %v1446 = vor.u32 %v1442, %v1445
        %v1447 = vrot.slane %v1446, 4
        %v1449 = vshll.u32 %v1308, 16
        %v1451 = vrot.slane %v1449, 5
        %v1452 = vsel %vm1318, %v1447, %v1451
        %v1453 = vshrl.u32 %v1308, 16
        %v1455 = vrot.slane %v1453, 4
        %v1456 = vor.u32 %v1455, %v1451
        %v1457 = vrot.slane %v1456, 4
        %v1459 = vshll.u32 %v1309, 16
        %v1461 = vrot.slane %v1459, 5
        %v1462 = vsel %vm1318, %v1457, %v1461
        %v1464 = vshrl.u32 %v1310, 16
        %v1466 = vrot.slane %v1464, 4
        %v1467 = vshll.u32 %v1310, 16
        %v1469 = vrot.slane %v1467, 5
        %v1470 = vor.u32 %v1466, %v1469
        %v1471 = vrot.slane %v1470, 4
        %v1473 = vshll.u32 %v1311, 16
        %v1475 = vrot.slane %v1473, 5
        %v1476 = vsel %vm1318, %v1471, %v1475
        %v1477 = vshrl.u32 %v1311, 16
        %v1479 = vrot.slane %v1477, 4
        %v1480 = vor.u32 %v1479, %v1475
        %v1481 = vrot.slane %v1480, 4
        %v1483 = vshll.u32 %v1312, 16
        %v1485 = vrot.slane %v1483, 5
        %v1486 = vsel %vm1318, %v1481, %v1485
        %v1488 = vshrl.u32 %v1313, 16
        %v1490 = vrot.slane %v1488, 4
        %v1491 = vshll.u32 %v1313, 16
        %v1493 = vrot.slane %v1491, 5
        %v1494 = vor.u32 %v1490, %v1493
        %v1495 = vrot.slane %v1494, 4
        %v1497 = vshll.u32 %v1314, 16
        %v1499 = vrot.slane %v1497, 5
        %v1500 = vsel %vm1318, %v1495, %v1499
        %v1501 = vshrl.u32 %v1314, 16
        %v1503 = vrot.slane %v1501, 4
        %v1504 = vor.u32 %v1503, %v1499
        %v1505 = vrot.slane %v1504, 4
        %v1507 = vshll.u32 %v1315, 16
        %v1509 = vrot.slane %v1507, 5
        %v1510 = vsel %vm1318, %v1505, %v1509
        %v1511 = vunpack.c.l.b16 %v1332
        %v1512 = vunpack.c.l.b16 %v1342
        %v1513 = vunpack.c.l.b16 %v1356
        %v1514 = vunpack.c.l.b16 %v1366
        %v1515 = vunpack.c.l.b16 %v1380
        %v1516 = vunpack.c.l.b16 %v1390
        %v1517 = vunpack.c.l.b16 %v1404
        %v1518 = vunpack.c.l.b16 %v1414
        %v1519 = vunpack.c.l.b16 %v1428
        %v1520 = vunpack.c.l.b16 %v1438
        %v1521 = vunpack.c.l.b16 %v1452
        %v1522 = vunpack.c.l.b16 %v1462
        %v1523 = vunpack.c.l.b16 %v1476
        %v1524 = vunpack.c.l.b16 %v1486
        %v1525 = vunpack.c.l.b16 %v1500
        %v1526 = vunpack.c.l.b16 %v1510
        %v1527 = vpack.c.b16 %v1512, %v1511
        %v1528 = vpack.c.b16 %v1514, %v1513
        %v1529 = vpack.c.b16 %v1516, %v1515
        %v1530 = vpack.c.b16 %v1518, %v1517
        %v1531 = vpack.c.b16 %v1520, %v1519
        %v1532 = vpack.c.b16 %v1522, %v1521
        %v1533 = vpack.c.b16 %v1524, %v1523
        %v1534 = vpack.c.b16 %v1526, %v1525
        %1535 = vrot.lane.b32.xlu0 %v1527, 4
        %v1536 = vpop.permute.xlu0 %1535
        %1537 = vrot.lane.b32.xlu0 %v1528, 4
        %v1538 = vpop.permute.xlu0 %1537
        %1539 = vrot.lane.b32.xlu0 %v1529, 4
        %v1540 = vpop.permute.xlu0 %1539
        %1541 = vrot.lane.b32.xlu0 %v1530, 4
        %v1542 = vpop.permute.xlu0 %1541
        %1543 = vrot.lane.b32.xlu0 %v1531, 4
        %v1544 = vpop.permute.xlu0 %1543
        %1545 = vrot.lane.b32.xlu0 %v1532, 4
        %v1546 = vpop.permute.xlu0 %1545
        %1547 = vrot.lane.b32.xlu0 %v1533, 4
        %v1548 = vpop.permute.xlu0 %1547
        %1549 = vrot.lane.b32.xlu0 %v1534, 4
        %v1550 = vpop.permute.xlu0 %1549
        %vm1559 = vcmask 64544
        %1560 = vst.msk [vmem:[#allocation3] sm:$0xff] %vm1559, %v1536
        %1561 = vst.msk [vmem:[#allocation3 + $0x8] sm:$0xff] %vm1559, %v1538
        %1562 = vst.msk [vmem:[#allocation3 + $0x10] sm:$0xff] %vm1559, %v1540
        %1563 = vst.msk [vmem:[#allocation3 + $0x18] sm:$0xff] %vm1559, %v1542
        %1564 = vst.msk [vmem:[#allocation3 + $0x20] sm:$0xff] %vm1559, %v1544
        %1565 = vst.msk [vmem:[#allocation3 + $0x28] sm:$0xff] %vm1559, %v1546
        %1566 = vst.msk [vmem:[#allocation3 + $0x30] sm:$0xff] %vm1559, %v1548
        %1567 = vst.msk [vmem:[#allocation3 + $0x38] sm:$0xff] %vm1559, %v1550
        %v1568 = vld [vmem:[#allocation2] sm:$0xe]
        %v1569 = vld [vmem:[#allocation2 + $0x4] sm:$0xf]
        %v1570 = vld [vmem:[#allocation2 + $0x8] sm:$0x1]
        %v1571 = vld [vmem:[#allocation2 + $0xc] sm:$0xe]
        %v1572 = vld [vmem:[#allocation2 + $0x10] sm:$0xf]
        %v1573 = vld [vmem:[#allocation2 + $0x14] sm:$0x1]
        %v1574 = vld [vmem:[#allocation2 + $0x18] sm:$0xe]
        %v1575 = vld [vmem:[#allocation2 + $0x1c] sm:$0xf]
        %v1576 = vld [vmem:[#allocation2 + $0x20] sm:$0x1]
        %v1577 = vld [vmem:[#allocation2 + $0x24] sm:$0xe]
        %v1578 = vld [vmem:[#allocation2 + $0x28] sm:$0xf]
        %v1579 = vld [vmem:[#allocation2 + $0x2c] sm:$0x1]
        %v1580 = vld [vmem:[#allocation2 + $0x30] sm:$0xe]
        %v1581 = vld [vmem:[#allocation2 + $0x34] sm:$0xf]
        %v1582 = vld [vmem:[#allocation2 + $0x38] sm:$0x1]
        %v1583 = vld [vmem:[#allocation2 + $0x3c] sm:$0xe]
        %v1584 = vld [vmem:[#allocation2 + $0x40] sm:$0xf]
        %v1585 = vld [vmem:[#allocation2 + $0x44] sm:$0x1]
        %v1586 = vld [vmem:[#allocation2 + $0x48] sm:$0xe]
        %v1587 = vld [vmem:[#allocation2 + $0x4c] sm:$0xf]
        %v1588 = vld [vmem:[#allocation2 + $0x50] sm:$0x1]
        %v1589 = vld [vmem:[#allocation2 + $0x54] sm:$0xe]
        %v1590 = vld [vmem:[#allocation2 + $0x58] sm:$0xf]
        %v1591 = vld [vmem:[#allocation2 + $0x5c] sm:$0x1]
        %vm1616 = vcmask 1042432
        %vm1617 = vcmask 1046532
        %vm1618 = vmor %vm1616, %vm1617
        %v1619 = vrot.slane %v1568, 5
        %v1620 = vrot.slane %v1619, 4
        %v1621 = vrot.slane %v1569, 5
        %v1622 = vsel %vm1618, %v1620, %v1621
        %v1623 = vrot.slane %v1621, 4
        %v1624 = vrot.slane %v1570, 5
        %v1625 = vsel %vm1618, %v1623, %v1624
        %v1626 = vrot.slane %v1571, 5
        %v1627 = vrot.slane %v1626, 4
        %v1628 = vrot.slane %v1572, 5
        %v1629 = vsel %vm1618, %v1627, %v1628
        %v1630 = vrot.slane %v1628, 4
        %v1631 = vrot.slane %v1573, 5
        %v1632 = vsel %vm1618, %v1630, %v1631
        %v1633 = vrot.slane %v1574, 5
        %v1634 = vrot.slane %v1633, 4
        %v1635 = vrot.slane %v1575, 5
        %v1636 = vsel %vm1618, %v1634, %v1635
        %v1637 = vrot.slane %v1635, 4
        %v1638 = vrot.slane %v1576, 5
        %v1639 = vsel %vm1618, %v1637, %v1638
        %v1640 = vrot.slane %v1577, 5
        %v1641 = vrot.slane %v1640, 4
        %v1642 = vrot.slane %v1578, 5
        %v1643 = vsel %vm1618, %v1641, %v1642
        %v1644 = vrot.slane %v1642, 4
        %v1645 = vrot.slane %v1579, 5
        %v1646 = vsel %vm1618, %v1644, %v1645
        %v1647 = vrot.slane %v1580, 5
        %v1648 = vrot.slane %v1647, 4
        %v1649 = vrot.slane %v1581, 5
        %v1650 = vsel %vm1618, %v1648, %v1649
        %v1651 = vrot.slane %v1649, 4
        %v1652 = vrot.slane %v1582, 5
        %v1653 = vsel %vm1618, %v1651, %v1652
        %v1654 = vrot.slane %v1583, 5
        %v1655 = vrot.slane %v1654, 4
        %v1656 = vrot.slane %v1584, 5
        %v1657 = vsel %vm1618, %v1655, %v1656
        %v1658 = vrot.slane %v1656, 4
        %v1659 = vrot.slane %v1585, 5
        %v1660 = vsel %vm1618, %v1658, %v1659
        %v1661 = vrot.slane %v1586, 5
        %v1662 = vrot.slane %v1661, 4
        %v1663 = vrot.slane %v1587, 5
        %v1664 = vsel %vm1618, %v1662, %v1663
        %v1665 = vrot.slane %v1663, 4
        %v1666 = vrot.slane %v1588, 5
        %v1667 = vsel %vm1618, %v1665, %v1666
        %v1668 = vrot.slane %v1589, 5
        %v1669 = vrot.slane %v1668, 4
        %v1670 = vrot.slane %v1590, 5
        %v1671 = vsel %vm1618, %v1669, %v1670
        %v1672 = vrot.slane %v1670, 4
        %v1673 = vrot.slane %v1591, 5
        %v1674 = vsel %vm1618, %v1672, %v1673
        %v1675 = vunpack.c.l.b16 %v1622
        %v1676 = vunpack.c.l.b16 %v1625
        %v1677 = vunpack.c.l.b16 %v1629
        %v1678 = vunpack.c.l.b16 %v1632
        %v1679 = vunpack.c.l.b16 %v1636
        %v1680 = vunpack.c.l.b16 %v1639
        %v1681 = vunpack.c.l.b16 %v1643
        %v1682 = vunpack.c.l.b16 %v1646
        %v1683 = vunpack.c.l.b16 %v1650
        %v1684 = vunpack.c.l.b16 %v1653
        %v1685 = vunpack.c.l.b16 %v1657
        %v1686 = vunpack.c.l.b16 %v1660
        %v1687 = vunpack.c.l.b16 %v1664
        %v1688 = vunpack.c.l.b16 %v1667
        %v1689 = vunpack.c.l.b16 %v1671
        %v1690 = vunpack.c.l.b16 %v1674
        %v1691 = vpack.c.b16 %v1676, %v1675
        %v1692 = vpack.c.b16 %v1678, %v1677
        %v1693 = vpack.c.b16 %v1680, %v1679
        %v1694 = vpack.c.b16 %v1682, %v1681
        %v1695 = vpack.c.b16 %v1684, %v1683
        %v1696 = vpack.c.b16 %v1686, %v1685
        %v1697 = vpack.c.b16 %v1688, %v1687
        %v1698 = vpack.c.b16 %v1690, %v1689
        %1699 = vrot.lane.b32.xlu0 %v1691, 8
        %v1700 = vpop.permute.xlu0 %1699
        %1701 = vrot.lane.b32.xlu0 %v1692, 8
        %v1702 = vpop.permute.xlu0 %1701
        %1703 = vrot.lane.b32.xlu0 %v1693, 8
        %v1704 = vpop.permute.xlu0 %1703
        %1705 = vrot.lane.b32.xlu0 %v1694, 8
        %v1706 = vpop.permute.xlu0 %1705
        %1707 = vrot.lane.b32.xlu0 %v1695, 8
        %v1708 = vpop.permute.xlu0 %1707
        %1709 = vrot.lane.b32.xlu0 %v1696, 8
        %v1710 = vpop.permute.xlu0 %1709
        %1711 = vrot.lane.b32.xlu0 %v1697, 8
        %v1712 = vpop.permute.xlu0 %1711
        %1713 = vrot.lane.b32.xlu0 %v1698, 8
        %v1714 = vpop.permute.xlu0 %1713
        %vm1723 = vcmask 97344
        %1724 = vst.msk [vmem:[#allocation3] sm:$0xff] %vm1723, %v1700
        %1725 = vst.msk [vmem:[#allocation3 + $0x8] sm:$0xff] %vm1723, %v1702
        %1726 = vst.msk [vmem:[#allocation3 + $0x10] sm:$0xff] %vm1723, %v1704
        %1727 = vst.msk [vmem:[#allocation3 + $0x18] sm:$0xff] %vm1723, %v1706
        %1728 = vst.msk [vmem:[#allocation3 + $0x20] sm:$0xff] %vm1723, %v1708
        %1729 = vst.msk [vmem:[#allocation3 + $0x28] sm:$0xff] %vm1723, %v1710
        %1730 = vst.msk [vmem:[#allocation3 + $0x30] sm:$0xff] %vm1723, %v1712
        %1731 = vst.msk [vmem:[#allocation3 + $0x38] sm:$0xff] %vm1723, %v1714
        %v1732 = vld [vmem:[%s1094] sm:$0xf]
        %v1733 = vld [vmem:[%s1094 + $0x4] sm:$0xf]
        %v1734 = vld [vmem:[%s1094 + $0xc] sm:$0xf]
        %v1735 = vld [vmem:[%s1094 + $0x10] sm:$0xf]
        %v1736 = vld [vmem:[%s1094 + $0x18] sm:$0xf]
        %v1737 = vld [vmem:[%s1094 + $0x1c] sm:$0xf]
        %v1738 = vld [vmem:[%s1094 + $0x24] sm:$0xf]
        %v1739 = vld [vmem:[%s1094 + $0x28] sm:$0xf]
        %v1740 = vld [vmem:[%s1094 + $0x30] sm:$0xf]
        %v1741 = vld [vmem:[%s1094 + $0x34] sm:$0xf]
        %v1742 = vld [vmem:[%s1094 + $0x3c] sm:$0xf]
        %v1743 = vld [vmem:[%s1094 + $0x40] sm:$0xf]
        %v1744 = vld [vmem:[%s1094 + $0x48] sm:$0xf]
        %v1745 = vld [vmem:[%s1094 + $0x4c] sm:$0xf]
        %v1746 = vld [vmem:[%s1094 + $0x54] sm:$0xf]
        %v1747 = vld [vmem:[%s1094 + $0x58] sm:$0xf]
        %v1764 = vunpack.c.l.b16 %v1732
        %v1765 = vunpack.c.l.b16 %v1733
        %v1766 = vunpack.c.l.b16 %v1734
        %v1767 = vunpack.c.l.b16 %v1735
        %v1768 = vunpack.c.l.b16 %v1736
        %v1769 = vunpack.c.l.b16 %v1737
        %v1770 = vunpack.c.l.b16 %v1738
        %v1771 = vunpack.c.l.b16 %v1739
        %v1772 = vunpack.c.l.b16 %v1740
        %v1773 = vunpack.c.l.b16 %v1741
        %v1774 = vunpack.c.l.b16 %v1742
        %v1775 = vunpack.c.l.b16 %v1743
        %v1776 = vunpack.c.l.b16 %v1744
        %v1777 = vunpack.c.l.b16 %v1745
        %v1778 = vunpack.c.l.b16 %v1746
        %v1779 = vunpack.c.l.b16 %v1747
        %v1780 = vpack.c.b16 %v1765, %v1764
        %v1781 = vpack.c.b16 %v1767, %v1766
        %v1782 = vpack.c.b16 %v1769, %v1768
        %v1783 = vpack.c.b16 %v1771, %v1770
        %v1784 = vpack.c.b16 %v1773, %v1772
        %v1785 = vpack.c.b16 %v1775, %v1774
        %v1786 = vpack.c.b16 %v1777, %v1776
        %v1787 = vpack.c.b16 %v1779, %v1778
        %1788 = vrot.lane.b32.xlu0 %v1780, 12
        %v1789 = vpop.permute.xlu0 %1788
        %1790 = vrot.lane.b32.xlu0 %v1781, 12
        %v1791 = vpop.permute.xlu0 %1790
        %1792 = vrot.lane.b32.xlu0 %v1782, 12
        %v1793 = vpop.permute.xlu0 %1792
        %1794 = vrot.lane.b32.xlu0 %v1783, 12
        %v1795 = vpop.permute.xlu0 %1794
        %1796 = vrot.lane.b32.xlu0 %v1784, 12
        %v1797 = vpop.permute.xlu0 %1796
        %1798 = vrot.lane.b32.xlu0 %v1785, 12
        %v1799 = vpop.permute.xlu0 %1798
        %1800 = vrot.lane.b32.xlu0 %v1786, 12
        %v1801 = vpop.permute.xlu0 %1800
        %1802 = vrot.lane.b32.xlu0 %v1787, 12
        %v1803 = vpop.permute.xlu0 %1802
        %vm1812 = vcmask 130144
        %1813 = vst.msk [vmem:[#allocation3] sm:$0xff] %vm1812, %v1789
        %1814 = vst.msk [vmem:[#allocation3 + $0x8] sm:$0xff] %vm1812, %v1791
        %1815 = vst.msk [vmem:[#allocation3 + $0x10] sm:$0xff] %vm1812, %v1793
        %1816 = vst.msk [vmem:[#allocation3 + $0x18] sm:$0xff] %vm1812, %v1795
        %1817 = vst.msk [vmem:[#allocation3 + $0x20] sm:$0xff] %vm1812, %v1797
        %1818 = vst.msk [vmem:[#allocation3 + $0x28] sm:$0xff] %vm1812, %v1799
        %1819 = vst.msk [vmem:[#allocation3 + $0x30] sm:$0xff] %vm1812, %v1801
        %1820 = vst.msk [vmem:[#allocation3 + $0x38] sm:$0xff] %vm1812, %v1803
        %v1821 = vld [vmem:[%s1094] sm:$0xf]
        %v1822 = vld [vmem:[%s1094 + $0x4] sm:$0xf]
        %v1823 = vld [vmem:[%s1094 + $0x8] sm:$0x1]
        %v1824 = vld [vmem:[%s1094 + $0xc] sm:$0xf]
        %v1825 = vld [vmem:[%s1094 + $0x10] sm:$0xf]
        %v1826 = vld [vmem:[%s1094 + $0x14] sm:$0x1]
        %v1827 = vld [vmem:[%s1094 + $0x18] sm:$0xf]
        %v1828 = vld [vmem:[%s1094 + $0x1c] sm:$0xf]
        %v1829 = vld [vmem:[%s1094 + $0x20] sm:$0x1]
        %v1830 = vld [vmem:[%s1094 + $0x24] sm:$0xf]
        %v1831 = vld [vmem:[%s1094 + $0x28] sm:$0xf]
        %v1832 = vld [vmem:[%s1094 + $0x2c] sm:$0x1]
        %v1833 = vld [vmem:[%s1094 + $0x30] sm:$0xf]
        %v1834 = vld [vmem:[%s1094 + $0x34] sm:$0xf]
        %v1835 = vld [vmem:[%s1094 + $0x38] sm:$0x1]
        %v1836 = vld [vmem:[%s1094 + $0x3c] sm:$0xf]
        %v1837 = vld [vmem:[%s1094 + $0x40] sm:$0xf]
        %v1838 = vld [vmem:[%s1094 + $0x44] sm:$0x1]
        %v1839 = vld [vmem:[%s1094 + $0x48] sm:$0xf]
        %v1840 = vld [vmem:[%s1094 + $0x4c] sm:$0xf]
        %v1841 = vld [vmem:[%s1094 + $0x50] sm:$0x1]
        %v1842 = vld [vmem:[%s1094 + $0x54] sm:$0xf]
        %v1843 = vld [vmem:[%s1094 + $0x58] sm:$0xf]
        %v1844 = vld [vmem:[%s1094 + $0x5c] sm:$0x1]
        %v1846 = vshrl.u32 %v1821, 16
        %v1848 = vrot.slane %v1846, 4
        %v1849 = vshll.u32 %v1821, 16
        %v1851 = vrot.slane %v1849, 5
        %v1852 = vor.u32 %v1848, %v1851
        %v1853 = vrot.slane %v1852, 4
        %v1855 = vshll.u32 %v1822, 16
        %v1857 = vrot.slane %v1855, 5
        %v1858 = vsel %vm1318, %v1853, %v1857
        %v1859 = vshrl.u32 %v1822, 16
        %v1861 = vrot.slane %v1859, 4
        %v1862 = vor.u32 %v1861, %v1857
        %v1863 = vrot.slane %v1862, 4
        %v1865 = vshll.u32 %v1823, 16
        %v1867 = vrot.slane %v1865, 5
        %v1868 = vsel %vm1318, %v1863, %v1867
        %v1870 = vshrl.u32 %v1824, 16
        %v1872 = vrot.slane %v1870, 4
        %v1873 = vshll.u32 %v1824, 16
        %v1875 = vrot.slane %v1873, 5
        %v1876 = vor.u32 %v1872, %v1875
        %v1877 = vrot.slane %v1876, 4
        %v1879 = vshll.u32 %v1825, 16
        %v1881 = vrot.slane %v1879, 5
        %v1882 = vsel %vm1318, %v1877, %v1881
        %v1883 = vshrl.u32 %v1825, 16
        %v1885 = vrot.slane %v1883, 4
        %v1886 = vor.u32 %v1885, %v1881
        %v1887 = vrot.slane %v1886, 4
        %v1889 = vshll.u32 %v1826, 16
        %v1891 = vrot.slane %v1889, 5
        %v1892 = vsel %vm1318, %v1887, %v1891
        %v1894 = vshrl.u32 %v1827, 16
        %v1896 = vrot.slane %v1894, 4
        %v1897 = vshll.u32 %v1827, 16
        %v1899 = vrot.slane %v1897, 5
        %v1900 = vor.u32 %v1896, %v1899
        %v1901 = vrot.slane %v1900, 4
        %v1903 = vshll.u32 %v1828, 16
        %v1905 = vrot.slane %v1903, 5
        %v1906 = vsel %vm1318, %v1901, %v1905
        %v1907 = vshrl.u32 %v1828, 16
        %v1909 = vrot.slane %v1907, 4
        %v1910 = vor.u32 %v1909, %v1905
        %v1911 = vrot.slane %v1910, 4
        %v1913 = vshll.u32 %v1829, 16
        %v1915 = vrot.slane %v1913, 5
        %v1916 = vsel %vm1318, %v1911, %v1915
        %v1918 = vshrl.u32 %v1830, 16
        %v1920 = vrot.slane %v1918, 4
        %v1921 = vshll.u32 %v1830, 16
        %v1923 = vrot.slane %v1921, 5
        %v1924 = vor.u32 %v1920, %v1923
        %v1925 = vrot.slane %v1924, 4
        %v1927 = vshll.u32 %v1831, 16
        %v1929 = vrot.slane %v1927, 5
        %v1930 = vsel %vm1318, %v1925, %v1929
        %v1931 = vshrl.u32 %v1831, 16
        %v1933 = vrot.slane %v1931, 4
        %v1934 = vor.u32 %v1933, %v1929
        %v1935 = vrot.slane %v1934, 4
        %v1937 = vshll.u32 %v1832, 16
        %v1939 = vrot.slane %v1937, 5
        %v1940 = vsel %vm1318, %v1935, %v1939
        %v1942 = vshrl.u32 %v1833, 16
        %v1944 = vrot.slane %v1942, 4
        %v1945 = vshll.u32 %v1833, 16
        %v1947 = vrot.slane %v1945, 5
        %v1948 = vor.u32 %v1944, %v1947
        %v1949 = vrot.slane %v1948, 4
        %v1951 = vshll.u32 %v1834, 16
        %v1953 = vrot.slane %v1951, 5
        %v1954 = vsel %vm1318, %v1949, %v1953
        %v1955 = vshrl.u32 %v1834, 16
        %v1957 = vrot.slane %v1955, 4
        %v1958 = vor.u32 %v1957, %v1953
        %v1959 = vrot.slane %v1958, 4
        %v1961 = vshll.u32 %v1835, 16
        %v1963 = vrot.slane %v1961, 5
        %v1964 = vsel %vm1318, %v1959, %v1963
        %v1966 = vshrl.u32 %v1836, 16
        %v1968 = vrot.slane %v1966, 4
        %v1969 = vshll.u32 %v1836, 16
        %v1971 = vrot.slane %v1969, 5
        %v1972 = vor.u32 %v1968, %v1971
        %v1973 = vrot.slane %v1972, 4
        %v1975 = vshll.u32 %v1837, 16
        %v1977 = vrot.slane %v1975, 5
        %v1978 = vsel %vm1318, %v1973, %v1977
        %v1979 = vshrl.u32 %v1837, 16
        %v1981 = vrot.slane %v1979, 4
        %v1982 = vor.u32 %v1981, %v1977
        %v1983 = vrot.slane %v1982, 4
        %v1985 = vshll.u32 %v1838, 16
        %v1987 = vrot.slane %v1985, 5
        %v1988 = vsel %vm1318, %v1983, %v1987
        %v1990 = vshrl.u32 %v1839, 16
        %v1992 = vrot.slane %v1990, 4
        %v1993 = vshll.u32 %v1839, 16
        %v1995 = vrot.slane %v1993, 5
        %v1996 = vor.u32 %v1992, %v1995
        %v1997 = vrot.slane %v1996, 4
        %v1999 = vshll.u32 %v1840, 16
        %v2001 = vrot.slane %v1999, 5
        %v2002 = vsel %vm1318, %v1997, %v2001
        %v2003 = vshrl.u32 %v1840, 16
        %v2005 = vrot.slane %v2003, 4
        %v2006 = vor.u32 %v2005, %v2001
        %v2007 = vrot.slane %v2006, 4
        %v2009 = vshll.u32 %v1841, 16
        %v2011 = vrot.slane %v2009, 5
        %v2012 = vsel %vm1318, %v2007, %v2011
        %v2014 = vshrl.u32 %v1842, 16
        %v2016 = vrot.slane %v2014, 4
        %v2017 = vshll.u32 %v1842, 16
        %v2019 = vrot.slane %v2017, 5
        %v2020 = vor.u32 %v2016, %v2019
        %v2021 = vrot.slane %v2020, 4
        %v2023 = vshll.u32 %v1843, 16
        %v2025 = vrot.slane %v2023, 5
        %v2026 = vsel %vm1318, %v2021, %v2025
        %v2027 = vshrl.u32 %v1843, 16
        %v2029 = vrot.slane %v2027, 4
        %v2030 = vor.u32 %v2029, %v2025
        %v2031 = vrot.slane %v2030, 4
        %v2033 = vshll.u32 %v1844, 16
        %v2035 = vrot.slane %v2033, 5
        %v2036 = vsel %vm1318, %v2031, %v2035
        %v2037 = vunpack.c.l.b16 %v1858
        %v2038 = vunpack.c.l.b16 %v1868
        %v2039 = vunpack.c.l.b16 %v1882
        %v2040 = vunpack.c.l.b16 %v1892
        %v2041 = vunpack.c.l.b16 %v1906
        %v2042 = vunpack.c.l.b16 %v1916
        %v2043 = vunpack.c.l.b16 %v1930
        %v2044 = vunpack.c.l.b16 %v1940
        %v2045 = vunpack.c.l.b16 %v1954
        %v2046 = vunpack.c.l.b16 %v1964
        %v2047 = vunpack.c.l.b16 %v1978
        %v2048 = vunpack.c.l.b16 %v1988
        %v2049 = vunpack.c.l.b16 %v2002
        %v2050 = vunpack.c.l.b16 %v2012
        %v2051 = vunpack.c.l.b16 %v2026
        %v2052 = vunpack.c.l.b16 %v2036
        %v2053 = vpack.c.b16 %v2038, %v2037
        %v2054 = vpack.c.b16 %v2040, %v2039
        %v2055 = vpack.c.b16 %v2042, %v2041
        %v2056 = vpack.c.b16 %v2044, %v2043
        %v2057 = vpack.c.b16 %v2046, %v2045
        %v2058 = vpack.c.b16 %v2048, %v2047
        %v2059 = vpack.c.b16 %v2050, %v2049
        %v2060 = vpack.c.b16 %v2052, %v2051
        %2061 = vrot.lane.b32.xlu0 %v2053, 16
        %v2062 = vpop.permute.xlu0 %2061
        %2063 = vrot.lane.b32.xlu0 %v2054, 16
        %v2064 = vpop.permute.xlu0 %2063
        %2065 = vrot.lane.b32.xlu0 %v2055, 16
        %v2066 = vpop.permute.xlu0 %2065
        %2067 = vrot.lane.b32.xlu0 %v2056, 16
        %v2068 = vpop.permute.xlu0 %2067
        %2069 = vrot.lane.b32.xlu0 %v2057, 16
        %v2070 = vpop.permute.xlu0 %2069
        %2071 = vrot.lane.b32.xlu0 %v2058, 16
        %v2072 = vpop.permute.xlu0 %2071
        %2073 = vrot.lane.b32.xlu0 %v2059, 16
        %v2074 = vpop.permute.xlu0 %2073
        %2075 = vrot.lane.b32.xlu0 %v2060, 16
        %v2076 = vpop.permute.xlu0 %2075
        %vm2085 = vcmask 162944
        %2086 = vst.msk [vmem:[#allocation3] sm:$0xff] %vm2085, %v2062
        %2087 = vst.msk [vmem:[#allocation3 + $0x8] sm:$0xff] %vm2085, %v2064
        %2088 = vst.msk [vmem:[#allocation3 + $0x10] sm:$0xff] %vm2085, %v2066
        %2089 = vst.msk [vmem:[#allocation3 + $0x18] sm:$0xff] %vm2085, %v2068
        %2090 = vst.msk [vmem:[#allocation3 + $0x20] sm:$0xff] %vm2085, %v2070
        %2091 = vst.msk [vmem:[#allocation3 + $0x28] sm:$0xff] %vm2085, %v2072
        %2092 = vst.msk [vmem:[#allocation3 + $0x30] sm:$0xff] %vm2085, %v2074
        %2093 = vst.msk [vmem:[#allocation3 + $0x38] sm:$0xff] %vm2085, %v2076
        %v2094 = vld [vmem:[%s1094] sm:$0xe]
        %v2095 = vld [vmem:[%s1094 + $0x4] sm:$0xf]
        %v2096 = vld [vmem:[%s1094 + $0x8] sm:$0x1]
        %v2097 = vld [vmem:[%s1094 + $0xc] sm:$0xe]
        %v2098 = vld [vmem:[%s1094 + $0x10] sm:$0xf]
        %v2099 = vld [vmem:[%s1094 + $0x14] sm:$0x1]
        %v2100 = vld [vmem:[%s1094 + $0x18] sm:$0xe]
        %v2101 = vld [vmem:[%s1094 + $0x1c] sm:$0xf]
        %v2102 = vld [vmem:[%s1094 + $0x20] sm:$0x1]
        %v2103 = vld [vmem:[%s1094 + $0x24] sm:$0xe]
        %v2104 = vld [vmem:[%s1094 + $0x28] sm:$0xf]
        %v2105 = vld [vmem:[%s1094 + $0x2c] sm:$0x1]
        %v2106 = vld [vmem:[%s1094 + $0x30] sm:$0xe]
        %v2107 = vld [vmem:[%s1094 + $0x34] sm:$0xf]
        %v2108 = vld [vmem:[%s1094 + $0x38] sm:$0x1]
        %v2109 = vld [vmem:[%s1094 + $0x3c] sm:$0xe]
        %v2110 = vld [vmem:[%s1094 + $0x40] sm:$0xf]
        %v2111 = vld [vmem:[%s1094 + $0x44] sm:$0x1]
        %v2112 = vld [vmem:[%s1094 + $0x48] sm:$0xe]
        %v2113 = vld [vmem:[%s1094 + $0x4c] sm:$0xf]
        %v2114 = vld [vmem:[%s1094 + $0x50] sm:$0x1]
        %v2115 = vld [vmem:[%s1094 + $0x54] sm:$0xe]
        %v2116 = vld [vmem:[%s1094 + $0x58] sm:$0xf]
        %v2117 = vld [vmem:[%s1094 + $0x5c] sm:$0x1]
        %v2142 = vrot.slane %v2094, 5
        %v2143 = vrot.slane %v2142, 4
        %v2144 = vrot.slane %v2095, 5
        %v2145 = vsel %vm1618, %v2143, %v2144
        %v2146 = vrot.slane %v2144, 4
        %v2147 = vrot.slane %v2096, 5
        %v2148 = vsel %vm1618, %v2146, %v2147
        %v2149 = vrot.slane %v2097, 5
        %v2150 = vrot.slane %v2149, 4
        %v2151 = vrot.slane %v2098, 5
        %v2152 = vsel %vm1618, %v2150, %v2151
        %v2153 = vrot.slane %v2151, 4
        %v2154 = vrot.slane %v2099, 5
        %v2155 = vsel %vm1618, %v2153, %v2154
        %v2156 = vrot.slane %v2100, 5
        %v2157 = vrot.slane %v2156, 4
        %v2158 = vrot.slane %v2101, 5
        %v2159 = vsel %vm1618, %v2157, %v2158
        %v2160 = vrot.slane %v2158, 4
        %v2161 = vrot.slane %v2102, 5
        %v2162 = vsel %vm1618, %v2160, %v2161
        %v2163 = vrot.slane %v2103, 5
        %v2164 = vrot.slane %v2163, 4
        %v2165 = vrot.slane %v2104, 5
        %v2166 = vsel %vm1618, %v2164, %v2165
        %v2167 = vrot.slane %v2165, 4
        %v2168 = vrot.slane %v2105, 5
        %v2169 = vsel %vm1618, %v2167, %v2168
        %v2170 = vrot.slane %v2106, 5
        %v2171 = vrot.slane %v2170, 4
        %v2172 = vrot.slane %v2107, 5
        %v2173 = vsel %vm1618, %v2171, %v2172
        %v2174 = vrot.slane %v2172, 4
        %v2175 = vrot.slane %v2108, 5
        %v2176 = vsel %vm1618, %v2174, %v2175
        %v2177 = vrot.slane %v2109, 5
        %v2178 = vrot.slane %v2177, 4
        %v2179 = vrot.slane %v2110, 5
        %v2180 = vsel %vm1618, %v2178, %v2179
        %v2181 = vrot.slane %v2179, 4
        %v2182 = vrot.slane %v2111, 5
        %v2183 = vsel %vm1618, %v2181, %v2182
        %v2184 = vrot.slane %v2112, 5
        %v2185 = vrot.slane %v2184, 4
        %v2186 = vrot.slane %v2113, 5
        %v2187 = vsel %vm1618, %v2185, %v2186
        %v2188 = vrot.slane %v2186, 4
        %v2189 = vrot.slane %v2114, 5
        %v2190 = vsel %vm1618, %v2188, %v2189
        %v2191 = vrot.slane %v2115, 5
        %v2192 = vrot.slane %v2191, 4
        %v2193 = vrot.slane %v2116, 5
        %v2194 = vsel %vm1618, %v2192, %v2193
        %v2195 = vrot.slane %v2193, 4
        %v2196 = vrot.slane %v2117, 5
        %v2197 = vsel %vm1618, %v2195, %v2196
        %v2198 = vunpack.c.l.b16 %v2145
        %v2199 = vunpack.c.l.b16 %v2148
        %v2200 = vunpack.c.l.b16 %v2152
        %v2201 = vunpack.c.l.b16 %v2155
        %v2202 = vunpack.c.l.b16 %v2159
        %v2203 = vunpack.c.l.b16 %v2162
        %v2204 = vunpack.c.l.b16 %v2166
        %v2205 = vunpack.c.l.b16 %v2169
        %v2206 = vunpack.c.l.b16 %v2173
        %v2207 = vunpack.c.l.b16 %v2176
        %v2208 = vunpack.c.l.b16 %v2180
        %v2209 = vunpack.c.l.b16 %v2183
        %v2210 = vunpack.c.l.b16 %v2187
        %v2211 = vunpack.c.l.b16 %v2190
        %v2212 = vunpack.c.l.b16 %v2194
        %v2213 = vunpack.c.l.b16 %v2197
        %v2214 = vpack.c.b16 %v2199, %v2198
        %v2215 = vpack.c.b16 %v2201, %v2200
        %v2216 = vpack.c.b16 %v2203, %v2202
        %v2217 = vpack.c.b16 %v2205, %v2204
        %v2218 = vpack.c.b16 %v2207, %v2206
        %v2219 = vpack.c.b16 %v2209, %v2208
        %v2220 = vpack.c.b16 %v2211, %v2210
        %v2221 = vpack.c.b16 %v2213, %v2212
        %2222 = vrot.lane.b32.xlu0 %v2214, 20
        %v2223 = vpop.permute.xlu0 %2222
        %2224 = vrot.lane.b32.xlu0 %v2215, 20
        %v2225 = vpop.permute.xlu0 %2224
        %2226 = vrot.lane.b32.xlu0 %v2216, 20
        %v2227 = vpop.permute.xlu0 %2226
        %2228 = vrot.lane.b32.xlu0 %v2217, 20
        %v2229 = vpop.permute.xlu0 %2228
        %2230 = vrot.lane.b32.xlu0 %v2218, 20
        %v2231 = vpop.permute.xlu0 %2230
        %2232 = vrot.lane.b32.xlu0 %v2219, 20
        %v2233 = vpop.permute.xlu0 %2232
        %2234 = vrot.lane.b32.xlu0 %v2220, 20
        %v2235 = vpop.permute.xlu0 %2234
        %2236 = vrot.lane.b32.xlu0 %v2221, 20
        %v2237 = vpop.permute.xlu0 %2236
        %vm2246 = vcmask 195744
        %2247 = vst.msk [vmem:[#allocation3] sm:$0xff] %vm2246, %v2223
        %2248 = vst.msk [vmem:[#allocation3 + $0x8] sm:$0xff] %vm2246, %v2225
        %2249 = vst.msk [vmem:[#allocation3 + $0x10] sm:$0xff] %vm2246, %v2227
        %2250 = vst.msk [vmem:[#allocation3 + $0x18] sm:$0xff] %vm2246, %v2229
        %2251 = vst.msk [vmem:[#allocation3 + $0x20] sm:$0xff] %vm2246, %v2231
        %2252 = vst.msk [vmem:[#allocation3 + $0x28] sm:$0xff] %vm2246, %v2233
        %2253 = vst.msk [vmem:[#allocation3 + $0x30] sm:$0xff] %vm2246, %v2235
        %2254 = vst.msk [vmem:[#allocation3 + $0x38] sm:$0xff] %vm2246, %v2237
        %s2255 = scalar_lea.vmem [#allocation2], 24
        %v2256 = vld [vmem:[%s2255] sm:$0xf]
        %v2257 = vld [vmem:[%s2255 + $0x4] sm:$0xf]
        %v2258 = vld [vmem:[%s2255 + $0xc] sm:$0xf]
        %v2259 = vld [vmem:[%s2255 + $0x10] sm:$0xf]
        %v2260 = vld [vmem:[%s2255 + $0x18] sm:$0xf]
        %v2261 = vld [vmem:[%s2255 + $0x1c] sm:$0xf]
        %v2262 = vld [vmem:[%s2255 + $0x24] sm:$0xf]
        %v2263 = vld [vmem:[%s2255 + $0x28] sm:$0xf]
        %v2264 = vld [vmem:[%s2255 + $0x30] sm:$0xf]
        %v2265 = vld [vmem:[%s2255 + $0x34] sm:$0xf]
        %v2266 = vld [vmem:[%s2255 + $0x3c] sm:$0xf]
        %v2267 = vld [vmem:[%s2255 + $0x40] sm:$0xf]
        %v2268 = vld [vmem:[%s2255 + $0x48] sm:$0xf]
        %v2269 = vld [vmem:[%s2255 + $0x4c] sm:$0xf]
        %v2270 = vld [vmem:[%s2255 + $0x54] sm:$0xf]
        %v2271 = vld [vmem:[%s2255 + $0x58] sm:$0xf]
        %v2288 = vunpack.c.l.b16 %v2256
        %v2289 = vunpack.c.l.b16 %v2257
        %v2290 = vunpack.c.l.b16 %v2258
        %v2291 = vunpack.c.l.b16 %v2259
        %v2292 = vunpack.c.l.b16 %v2260
        %v2293 = vunpack.c.l.b16 %v2261
        %v2294 = vunpack.c.l.b16 %v2262
        %v2295 = vunpack.c.l.b16 %v2263
        %v2296 = vunpack.c.l.b16 %v2264
        %v2297 = vunpack.c.l.b16 %v2265
        %v2298 = vunpack.c.l.b16 %v2266
        %v2299 = vunpack.c.l.b16 %v2267
        %v2300 = vunpack.c.l.b16 %v2268
        %v2301 = vunpack.c.l.b16 %v2269
        %v2302 = vunpack.c.l.b16 %v2270
        %v2303 = vunpack.c.l.b16 %v2271
        %v2304 = vpack.c.b16 %v2289, %v2288
        %v2305 = vpack.c.b16 %v2291, %v2290
        %v2306 = vpack.c.b16 %v2293, %v2292
        %v2307 = vpack.c.b16 %v2295, %v2294
        %v2308 = vpack.c.b16 %v2297, %v2296
        %v2309 = vpack.c.b16 %v2299, %v2298
        %v2310 = vpack.c.b16 %v2301, %v2300
        %v2311 = vpack.c.b16 %v2303, %v2302
        %2312 = vrot.lane.b32.xlu0 %v2304, 24
        %v2313 = vpop.permute.xlu0 %2312
        %2314 = vrot.lane.b32.xlu0 %v2305, 24
        %v2315 = vpop.permute.xlu0 %2314
        %2316 = vrot.lane.b32.xlu0 %v2306, 24
        %v2317 = vpop.permute.xlu0 %2316
        %2318 = vrot.lane.b32.xlu0 %v2307, 24
        %v2319 = vpop.permute.xlu0 %2318
        %2320 = vrot.lane.b32.xlu0 %v2308, 24
        %v2321 = vpop.permute.xlu0 %2320
        %2322 = vrot.lane.b32.xlu0 %v2309, 24
        %v2323 = vpop.permute.xlu0 %2322
        %2324 = vrot.lane.b32.xlu0 %v2310, 24
        %v2325 = vpop.permute.xlu0 %2324
        %2326 = vrot.lane.b32.xlu0 %v2311, 24
        %v2327 = vpop.permute.xlu0 %2326
        %vm2336 = vcmask 228544
        %2337 = vst.msk [vmem:[#allocation3] sm:$0xff] %vm2336, %v2313
        %2338 = vst.msk [vmem:[#allocation3 + $0x8] sm:$0xff] %vm2336, %v2315
        %2339 = vst.msk [vmem:[#allocation3 + $0x10] sm:$0xff] %vm2336, %v2317
        %2340 = vst.msk [vmem:[#allocation3 + $0x18] sm:$0xff] %vm2336, %v2319
        %2341 = vst.msk [vmem:[#allocation3 + $0x20] sm:$0xff] %vm2336, %v2321
        %2342 = vst.msk [vmem:[#allocation3 + $0x28] sm:$0xff] %vm2336, %v2323
        %2343 = vst.msk [vmem:[#allocation3 + $0x30] sm:$0xff] %vm2336, %v2325
        %2344 = vst.msk [vmem:[#allocation3 + $0x38] sm:$0xff] %vm2336, %v2327
        %v2345 = vld [vmem:[%s2255] sm:$0xf]
        %v2346 = vld [vmem:[%s2255 + $0x4] sm:$0xf]
        %v2347 = vld [vmem:[%s2255 + $0x8] sm:$0x1]
        %v2348 = vld [vmem:[%s2255 + $0xc] sm:$0xf]
        %v2349 = vld [vmem:[%s2255 + $0x10] sm:$0xf]
        %v2350 = vld [vmem:[%s2255 + $0x14] sm:$0x1]
        %v2351 = vld [vmem:[%s2255 + $0x18] sm:$0xf]
        %v2352 = vld [vmem:[%s2255 + $0x1c] sm:$0xf]
        %v2353 = vld [vmem:[%s2255 + $0x20] sm:$0x1]
        %v2354 = vld [vmem:[%s2255 + $0x24] sm:$0xf]
        %v2355 = vld [vmem:[%s2255 + $0x28] sm:$0xf]
        %v2356 = vld [vmem:[%s2255 + $0x2c] sm:$0x1]
        %v2357 = vld [vmem:[%s2255 + $0x30] sm:$0xf]
        %v2358 = vld [vmem:[%s2255 + $0x34] sm:$0xf]
        %v2359 = vld [vmem:[%s2255 + $0x38] sm:$0x1]
        %v2360 = vld [vmem:[%s2255 + $0x3c] sm:$0xf]
        %v2361 = vld [vmem:[%s2255 + $0x40] sm:$0xf]
        %v2362 = vld [vmem:[%s2255 + $0x44] sm:$0x1]
        %v2363 = vld [vmem:[%s2255 + $0x48] sm:$0xf]
        %v2364 = vld [vmem:[%s2255 + $0x4c] sm:$0xf]
        %v2365 = vld [vmem:[%s2255 + $0x50] sm:$0x1]
        %v2366 = vld [vmem:[%s2255 + $0x54] sm:$0xf]
        %v2367 = vld [vmem:[%s2255 + $0x58] sm:$0xf]
        %v2368 = vld [vmem:[%s2255 + $0x5c] sm:$0x1]
        %v2370 = vshrl.u32 %v2345, 16
        %v2372 = vrot.slane %v2370, 4
        %v2373 = vshll.u32 %v2345, 16
        %v2375 = vrot.slane %v2373, 5
        %v2376 = vor.u32 %v2372, %v2375
        %v2377 = vrot.slane %v2376, 4
        %v2379 = vshll.u32 %v2346, 16
        %v2381 = vrot.slane %v2379, 5
        %v2382 = vsel %vm1318, %v2377, %v2381
        %v2383 = vshrl.u32 %v2346, 16
        %v2385 = vrot.slane %v2383, 4
        %v2386 = vor.u32 %v2385, %v2381
        %v2387 = vrot.slane %v2386, 4
        %v2389 = vshll.u32 %v2347, 16
        %v2391 = vrot.slane %v2389, 5
        %v2392 = vsel %vm1318, %v2387, %v2391
        %v2394 = vshrl.u32 %v2348, 16
        %v2396 = vrot.slane %v2394, 4
        %v2397 = vshll.u32 %v2348, 16
        %v2399 = vrot.slane %v2397, 5
        %v2400 = vor.u32 %v2396, %v2399
        %v2401 = vrot.slane %v2400, 4
        %v2403 = vshll.u32 %v2349, 16
        %v2405 = vrot.slane %v2403, 5
        %v2406 = vsel %vm1318, %v2401, %v2405
        %v2407 = vshrl.u32 %v2349, 16
        %v2409 = vrot.slane %v2407, 4
        %v2410 = vor.u32 %v2409, %v2405
        %v2411 = vrot.slane %v2410, 4
        %v2413 = vshll.u32 %v2350, 16
        %v2415 = vrot.slane %v2413, 5
        %v2416 = vsel %vm1318, %v2411, %v2415
        %v2418 = vshrl.u32 %v2351, 16
        %v2420 = vrot.slane %v2418, 4
        %v2421 = vshll.u32 %v2351, 16
        %v2423 = vrot.slane %v2421, 5
        %v2424 = vor.u32 %v2420, %v2423
        %v2425 = vrot.slane %v2424, 4
        %v2427 = vshll.u32 %v2352, 16
        %v2429 = vrot.slane %v2427, 5
        %v2430 = vsel %vm1318, %v2425, %v2429
        %v2431 = vshrl.u32 %v2352, 16
        %v2433 = vrot.slane %v2431, 4
        %v2434 = vor.u32 %v2433, %v2429
        %v2435 = vrot.slane %v2434, 4
        %v2437 = vshll.u32 %v2353, 16
        %v2439 = vrot.slane %v2437, 5
        %v2440 = vsel %vm1318, %v2435, %v2439
        %v2442 = vshrl.u32 %v2354, 16
        %v2444 = vrot.slane %v2442, 4
        %v2445 = vshll.u32 %v2354, 16
        %v2447 = vrot.slane %v2445, 5
        %v2448 = vor.u32 %v2444, %v2447
        %v2449 = vrot.slane %v2448, 4
        %v2451 = vshll.u32 %v2355, 16
        %v2453 = vrot.slane %v2451, 5
        %v2454 = vsel %vm1318, %v2449, %v2453
        %v2455 = vshrl.u32 %v2355, 16
        %v2457 = vrot.slane %v2455, 4
        %v2458 = vor.u32 %v2457, %v2453
        %v2459 = vrot.slane %v2458, 4
        %v2461 = vshll.u32 %v2356, 16
        %v2463 = vrot.slane %v2461, 5
        %v2464 = vsel %vm1318, %v2459, %v2463
        %v2466 = vshrl.u32 %v2357, 16
        %v2468 = vrot.slane %v2466, 4
        %v2469 = vshll.u32 %v2357, 16
        %v2471 = vrot.slane %v2469, 5
        %v2472 = vor.u32 %v2468, %v2471
        %v2473 = vrot.slane %v2472, 4
        %v2475 = vshll.u32 %v2358, 16
        %v2477 = vrot.slane %v2475, 5
        %v2478 = vsel %vm1318, %v2473, %v2477
        %v2479 = vshrl.u32 %v2358, 16
        %v2481 = vrot.slane %v2479, 4
        %v2482 = vor.u32 %v2481, %v2477
        %v2483 = vrot.slane %v2482, 4
        %v2485 = vshll.u32 %v2359, 16
        %v2487 = vrot.slane %v2485, 5
        %v2488 = vsel %vm1318, %v2483, %v2487
        %v2490 = vshrl.u32 %v2360, 16
        %v2492 = vrot.slane %v2490, 4
        %v2493 = vshll.u32 %v2360, 16
        %v2495 = vrot.slane %v2493, 5
        %v2496 = vor.u32 %v2492, %v2495
        %v2497 = vrot.slane %v2496, 4
        %v2499 = vshll.u32 %v2361, 16
        %v2501 = vrot.slane %v2499, 5
        %v2502 = vsel %vm1318, %v2497, %v2501
        %v2503 = vshrl.u32 %v2361, 16
        %v2505 = vrot.slane %v2503, 4
        %v2506 = vor.u32 %v2505, %v2501
        %v2507 = vrot.slane %v2506, 4
        %v2509 = vshll.u32 %v2362, 16
        %v2511 = vrot.slane %v2509, 5
        %v2512 = vsel %vm1318, %v2507, %v2511
        %v2514 = vshrl.u32 %v2363, 16
        %v2516 = vrot.slane %v2514, 4
        %v2517 = vshll.u32 %v2363, 16
        %v2519 = vrot.slane %v2517, 5
        %v2520 = vor.u32 %v2516, %v2519
        %v2521 = vrot.slane %v2520, 4
        %v2523 = vshll.u32 %v2364, 16
        %v2525 = vrot.slane %v2523, 5
        %v2526 = vsel %vm1318, %v2521, %v2525
        %v2527 = vshrl.u32 %v2364, 16
        %v2529 = vrot.slane %v2527, 4
        %v2530 = vor.u32 %v2529, %v2525
        %v2531 = vrot.slane %v2530, 4
        %v2533 = vshll.u32 %v2365, 16
        %v2535 = vrot.slane %v2533, 5
        %v2536 = vsel %vm1318, %v2531, %v2535
        %v2538 = vshrl.u32 %v2366, 16
        %v2540 = vrot.slane %v2538, 4
        %v2541 = vshll.u32 %v2366, 16
        %v2543 = vrot.slane %v2541, 5
        %v2544 = vor.u32 %v2540, %v2543
        %v2545 = vrot.slane %v2544, 4
        %v2547 = vshll.u32 %v2367, 16
        %v2549 = vrot.slane %v2547, 5
        %v2550 = vsel %vm1318, %v2545, %v2549
        %v2551 = vshrl.u32 %v2367, 16
        %v2553 = vrot.slane %v2551, 4
        %v2554 = vor.u32 %v2553, %v2549
        %v2555 = vrot.slane %v2554, 4
        %v2557 = vshll.u32 %v2368, 16
        %v2559 = vrot.slane %v2557, 5
        %v2560 = vsel %vm1318, %v2555, %v2559
        %v2561 = vunpack.c.l.b16 %v2382
        %v2562 = vunpack.c.l.b16 %v2392
        %v2563 = vunpack.c.l.b16 %v2406
        %v2564 = vunpack.c.l.b16 %v2416
        %v2565 = vunpack.c.l.b16 %v2430
        %v2566 = vunpack.c.l.b16 %v2440
        %v2567 = vunpack.c.l.b16 %v2454
        %v2568 = vunpack.c.l.b16 %v2464
        %v2569 = vunpack.c.l.b16 %v2478
        %v2570 = vunpack.c.l.b16 %v2488
        %v2571 = vunpack.c.l.b16 %v2502
        %v2572 = vunpack.c.l.b16 %v2512
        %v2573 = vunpack.c.l.b16 %v2526
        %v2574 = vunpack.c.l.b16 %v2536
        %v2575 = vunpack.c.l.b16 %v2550
        %v2576 = vunpack.c.l.b16 %v2560
        %v2577 = vpack.c.b16 %v2562, %v2561
        %v2578 = vpack.c.b16 %v2564, %v2563
        %v2579 = vpack.c.b16 %v2566, %v2565
        %v2580 = vpack.c.b16 %v2568, %v2567
        %v2581 = vpack.c.b16 %v2570, %v2569
        %v2582 = vpack.c.b16 %v2572, %v2571
        %v2583 = vpack.c.b16 %v2574, %v2573
        %v2584 = vpack.c.b16 %v2576, %v2575
        %2585 = vrot.lane.b32.xlu0 %v2577, 28
        %v2586 = vpop.permute.xlu0 %2585
        %2587 = vrot.lane.b32.xlu0 %v2578, 28
        %v2588 = vpop.permute.xlu0 %2587
        %2589 = vrot.lane.b32.xlu0 %v2579, 28
        %v2590 = vpop.permute.xlu0 %2589
        %2591 = vrot.lane.b32.xlu0 %v2580, 28
        %v2592 = vpop.permute.xlu0 %2591
        %2593 = vrot.lane.b32.xlu0 %v2581, 28
        %v2594 = vpop.permute.xlu0 %2593
        %2595 = vrot.lane.b32.xlu0 %v2582, 28
        %v2596 = vpop.permute.xlu0 %2595
        %2597 = vrot.lane.b32.xlu0 %v2583, 28
        %v2598 = vpop.permute.xlu0 %2597
        %2599 = vrot.lane.b32.xlu0 %v2584, 28
        %v2600 = vpop.permute.xlu0 %2599
        %vm2609 = vcmask 261344
        %2610 = vst.msk [vmem:[#allocation3] sm:$0xff] %vm2609, %v2586
        %2611 = vst.msk [vmem:[#allocation3 + $0x8] sm:$0xff] %vm2609, %v2588
        %2612 = vst.msk [vmem:[#allocation3 + $0x10] sm:$0xff] %vm2609, %v2590
        %2613 = vst.msk [vmem:[#allocation3 + $0x18] sm:$0xff] %vm2609, %v2592
        %2614 = vst.msk [vmem:[#allocation3 + $0x20] sm:$0xff] %vm2609, %v2594
        %2615 = vst.msk [vmem:[#allocation3 + $0x28] sm:$0xff] %vm2609, %v2596
        %2616 = vst.msk [vmem:[#allocation3 + $0x30] sm:$0xff] %vm2609, %v2598
        %2617 = vst.msk [vmem:[#allocation3 + $0x38] sm:$0xff] %vm2609, %v2600
        %v2618 = vld [vmem:[%s2255] sm:$0xe]
        %v2619 = vld [vmem:[%s2255 + $0x4] sm:$0xf]
        %v2620 = vld [vmem:[%s2255 + $0x8] sm:$0x1]
        %v2621 = vld [vmem:[%s2255 + $0xc] sm:$0xe]
        %v2622 = vld [vmem:[%s2255 + $0x10] sm:$0xf]
        %v2623 = vld [vmem:[%s2255 + $0x14] sm:$0x1]
        %v2624 = vld [vmem:[%s2255 + $0x18] sm:$0xe]
        %v2625 = vld [vmem:[%s2255 + $0x1c] sm:$0xf]
        %v2626 = vld [vmem:[%s2255 + $0x20] sm:$0x1]
        %v2627 = vld [vmem:[%s2255 + $0x24] sm:$0xe]
        %v2628 = vld [vmem:[%s2255 + $0x28] sm:$0xf]
        %v2629 = vld [vmem:[%s2255 + $0x2c] sm:$0x1]
        %v2630 = vld [vmem:[%s2255 + $0x30] sm:$0xe]
        %v2631 = vld [vmem:[%s2255 + $0x34] sm:$0xf]
        %v2632 = vld [vmem:[%s2255 + $0x38] sm:$0x1]
        %v2633 = vld [vmem:[%s2255 + $0x3c] sm:$0xe]
        %v2634 = vld [vmem:[%s2255 + $0x40] sm:$0xf]
        %v2635 = vld [vmem:[%s2255 + $0x44] sm:$0x1]
        %v2636 = vld [vmem:[%s2255 + $0x48] sm:$0xe]
        %v2637 = vld [vmem:[%s2255 + $0x4c] sm:$0xf]
        %v2638 = vld [vmem:[%s2255 + $0x50] sm:$0x1]
        %v2639 = vld [vmem:[%s2255 + $0x54] sm:$0xe]
        %v2640 = vld [vmem:[%s2255 + $0x58] sm:$0xf]
        %v2641 = vld [vmem:[%s2255 + $0x5c] sm:$0x1]
        %v2666 = vrot.slane %v2618, 5
        %v2667 = vrot.slane %v2666, 4
        %v2668 = vrot.slane %v2619, 5
        %v2669 = vsel %vm1618, %v2667, %v2668
        %v2670 = vrot.slane %v2668, 4
        %v2671 = vrot.slane %v2620, 5
        %v2672 = vsel %vm1618, %v2670, %v2671
        %v2673 = vrot.slane %v2621, 5
        %v2674 = vrot.slane %v2673, 4
        %v2675 = vrot.slane %v2622, 5
        %v2676 = vsel %vm1618, %v2674, %v2675
        %v2677 = vrot.slane %v2675, 4
        %v2678 = vrot.slane %v2623, 5
        %v2679 = vsel %vm1618, %v2677, %v2678
        %v2680 = vrot.slane %v2624, 5
        %v2681 = vrot.slane %v2680, 4
        %v2682 = vrot.slane %v2625, 5
        %v2683 = vsel %vm1618, %v2681, %v2682
        %v2684 = vrot.slane %v2682, 4
        %v2685 = vrot.slane %v2626, 5
        %v2686 = vsel %vm1618, %v2684, %v2685
        %v2687 = vrot.slane %v2627, 5
        %v2688 = vrot.slane %v2687, 4
        %v2689 = vrot.slane %v2628, 5
        %v2690 = vsel %vm1618, %v2688, %v2689
        %v2691 = vrot.slane %v2689, 4
        %v2692 = vrot.slane %v2629, 5
        %v2693 = vsel %vm1618, %v2691, %v2692
        %v2694 = vrot.slane %v2630, 5
        %v2695 = vrot.slane %v2694, 4
        %v2696 = vrot.slane %v2631, 5
        %v2697 = vsel %vm1618, %v2695, %v2696
        %v2698 = vrot.slane %v2696, 4
        %v2699 = vrot.slane %v2632, 5
        %v2700 = vsel %vm1618, %v2698, %v2699
        %v2701 = vrot.slane %v2633, 5
        %v2702 = vrot.slane %v2701, 4
        %v2703 = vrot.slane %v2634, 5
        %v2704 = vsel %vm1618, %v2702, %v2703
        %v2705 = vrot.slane %v2703, 4
        %v2706 = vrot.slane %v2635, 5
        %v2707 = vsel %vm1618, %v2705, %v2706
        %v2708 = vrot.slane %v2636, 5
        %v2709 = vrot.slane %v2708, 4
        %v2710 = vrot.slane %v2637, 5
        %v2711 = vsel %vm1618, %v2709, %v2710
        %v2712 = vrot.slane %v2710, 4
        %v2713 = vrot.slane %v2638, 5
        %v2714 = vsel %vm1618, %v2712, %v2713
        %v2715 = vrot.slane %v2639, 5
        %v2716 = vrot.slane %v2715, 4
        %v2717 = vrot.slane %v2640, 5
        %v2718 = vsel %vm1618, %v2716, %v2717
        %v2719 = vrot.slane %v2717, 4
        %v2720 = vrot.slane %v2641, 5
        %v2721 = vsel %vm1618, %v2719, %v2720
        %v2722 = vunpack.c.l.b16 %v2669
        %v2723 = vunpack.c.l.b16 %v2672
        %v2724 = vunpack.c.l.b16 %v2676
        %v2725 = vunpack.c.l.b16 %v2679
        %v2726 = vunpack.c.l.b16 %v2683
        %v2727 = vunpack.c.l.b16 %v2686
        %v2728 = vunpack.c.l.b16 %v2690
        %v2729 = vunpack.c.l.b16 %v2693
        %v2730 = vunpack.c.l.b16 %v2697
        %v2731 = vunpack.c.l.b16 %v2700
        %v2732 = vunpack.c.l.b16 %v2704
        %v2733 = vunpack.c.l.b16 %v2707
        %v2734 = vunpack.c.l.b16 %v2711
        %v2735 = vunpack.c.l.b16 %v2714
        %v2736 = vunpack.c.l.b16 %v2718
        %v2737 = vunpack.c.l.b16 %v2721
        %v2738 = vpack.c.b16 %v2723, %v2722
        %v2739 = vpack.c.b16 %v2725, %v2724
        %v2740 = vpack.c.b16 %v2727, %v2726
        %v2741 = vpack.c.b16 %v2729, %v2728
        %v2742 = vpack.c.b16 %v2731, %v2730
        %v2743 = vpack.c.b16 %v2733, %v2732
        %v2744 = vpack.c.b16 %v2735, %v2734
        %v2745 = vpack.c.b16 %v2737, %v2736
        %2746 = vrot.lane.b32.xlu0 %v2738, 32
        %v2747 = vpop.permute.xlu0 %2746
        %2748 = vrot.lane.b32.xlu0 %v2739, 32
        %v2749 = vpop.permute.xlu0 %2748
        %2750 = vrot.lane.b32.xlu0 %v2740, 32
        %v2751 = vpop.permute.xlu0 %2750
        %2752 = vrot.lane.b32.xlu0 %v2741, 32
        %v2753 = vpop.permute.xlu0 %2752
        %2754 = vrot.lane.b32.xlu0 %v2742, 32
        %v2755 = vpop.permute.xlu0 %2754
        %2756 = vrot.lane.b32.xlu0 %v2743, 32
        %v2757 = vpop.permute.xlu0 %2756
        %2758 = vrot.lane.b32.xlu0 %v2744, 32
        %v2759 = vpop.permute.xlu0 %2758
        %2760 = vrot.lane.b32.xlu0 %v2745, 32
        %v2761 = vpop.permute.xlu0 %2760
        %vm2770 = vcmask 294144
        %2771 = vst.msk [vmem:[#allocation3] sm:$0xff] %vm2770, %v2747
        %2772 = vst.msk [vmem:[#allocation3 + $0x8] sm:$0xff] %vm2770, %v2749
        %2773 = vst.msk [vmem:[#allocation3 + $0x10] sm:$0xff] %vm2770, %v2751
        %2774 = vst.msk [vmem:[#allocation3 + $0x18] sm:$0xff] %vm2770, %v2753
        %2775 = vst.msk [vmem:[#allocation3 + $0x20] sm:$0xff] %vm2770, %v2755
        %2776 = vst.msk [vmem:[#allocation3 + $0x28] sm:$0xff] %vm2770, %v2757
        %2777 = vst.msk [vmem:[#allocation3 + $0x30] sm:$0xff] %vm2770, %v2759
        %2778 = vst.msk [vmem:[#allocation3 + $0x38] sm:$0xff] %vm2770, %v2761
        %v2779 = vld [vmem:[#allocation3] sm:$0xff]
        %v2780 = vld [vmem:[#allocation3 + $0x8] sm:$0xff]
        %v2781 = vld [vmem:[#allocation3 + $0x10] sm:$0xff]
        %v2782 = vld [vmem:[#allocation3 + $0x18] sm:$0xff]
        %v2783 = vld [vmem:[#allocation3 + $0x20] sm:$0xff]
        %v2784 = vld [vmem:[#allocation3 + $0x28] sm:$0xff]
        %v2785 = vld [vmem:[#allocation3 + $0x30] sm:$0xff]
        %v2786 = vld [vmem:[#allocation3 + $0x38] sm:$0xff]
        %v2787 = vld [vmem:[%s5] sm:$0xf]
        %v2788 = vld [vmem:[%s5 + $0x4] sm:$0xf]
        %v2789 = vld [vmem:[%s5 + $0x8] sm:$0xf]
        %v2790 = vld [vmem:[%s5 + $0xc] sm:$0xf]
        %v2791 = vld [vmem:[%s5 + $0x10] sm:$0x3]
        %v2792 = vld [vmem:[%s6] sm:$0x1]
        %v2794 = vlaneseq
        %v2795 = vshrl.u32 %v2794, 7
        %v2796 = vsub.s32 0, %v2795
        %v2797 = vrot.slane %v2792, %v2796
        %v2804 = vunpack.c.l.b16 %v2787
        %v2805 = vunpack.c.l.b16 %v2788
        %v2806 = vunpack.c.l.b16 %v2789
        %v2807 = vunpack.c.l.b16 %v2790
        %v2808 = vunpack.c.l.b16 %v2791
        %v2809 = vpack.c.b16 %v2805, %v2804
        %v2810 = vpack.c.b16 %v2807, %v2806
        %v2811 = vpack.c.b16 %v2808, %v2808
        %vm2814 = vcmask 293888
        %v2816 = vsel %vm2814, %v2779, 0
        %v2819 = vsel %vm2814, %v2780, 0
        %v2822 = vsel %vm2814, %v2781, 0
        %v2825 = vsel %vm2814, %v2782, 0
        %v2828 = vsel %vm2814, %v2783, 0
        %v2831 = vsel %vm2814, %v2784, 0
        %v2834 = vsel %vm2814, %v2785, 0
        %v2837 = vsel %vm2814, %v2786, 0
        %vm2839 = vcmask 1041408
        %v2841 = vsel %vm2839, %v2811, 0
        %2843 = vmatprep.subr.bf16.mxu0 0
        %2844 = vmatpush1.bf16.msra.mxu0 %v2809
        %2845 = vmatprep.subr.bf16.mxu0 0
        %2846 = vmatpush1.bf16.msra.mxu0 %v2810
        %2847 = vmatprep.subr.bf16.mxu0 0
        %2848 = vmatpush1.bf16.msra.mxu0 %v2841
        %2849 = vmatprep.subr.bf16.mxu0 0
        %2850 = vmatpush1.bf16.msra.mxu0 0
        %2851 = vmatprep.subr.bf16.mxu0 0
        %2852 = vmatpush1.bf16.msra.mxu0 0
        %2853 = vmatprep.subr.bf16.mxu0 0
        %2854 = vmatpush1.bf16.msra.mxu0 0
        %2855 = vmatprep.subr.bf16.mxu0 0
        %2856 = vmatpush1.bf16.msra.mxu0 0
        %2857 = vmatprep.subr.bf16.mxu0 0
        %2858 = vmatpush1.bf16.msra.mxu0 0
        %2859 = vmatprep.subr.bf16.mxu0 0
        %2860 = vmatpush1.bf16.msra.mxu0 0
        %2861 = vmatprep.subr.bf16.mxu0 0
        %2862 = vmatpush1.bf16.msra.mxu0 0
        %2863 = vmatprep.subr.bf16.mxu0 0
        %2864 = vmatpush1.bf16.msra.mxu0 0
        %2865 = vmatprep.subr.bf16.mxu0 0
        %2866 = vmatpush1.bf16.msra.mxu0 0
        %2867 = vmatprep.subr.bf16.mxu0 0
        %2868 = vmatpush1.bf16.msra.mxu0 0
        %2869 = vmatprep.subr.bf16.mxu0 0
        %2870 = vmatpush1.bf16.msra.mxu0 0
        %2871 = vmatprep.subr.bf16.mxu0 0
        %2872 = vmatpush1.bf16.msra.mxu0 0
        %2873 = vmatprep.subr.bf16.mxu0 0
        %2874 = vmatpush1.bf16.msra.mxu0 0
        %2875 = vmatprep.mubr.bf16.mxu0 0
        %2876 = vmatmul.mubr.bf16.gmra.mrb[0].mxu0 %v2816
        %v2877 = vpop.f32.mrb[0].mxu0
        %v2878 = vadd.f32 %v2797, %v2877
        %v2879 = vpop.f32.mrb[0].mxu0
        %v2880 = vpop.f32.mrb[0].mxu0
        %v2881 = vadd.f32 %v2797, %v2880
        %v2882 = vpop.f32.mrb[0].mxu0
        %2883 = vmatprep.mubr.bf16.mxu0 0
        %2884 = vmatmul.mubr.bf16.gmra.mrb[0].mxu0 %v2819
        %v2885 = vpop.f32.mrb[0].mxu0
        %v2886 = vadd.f32 %v2797, %v2885
        %v2887 = vpop.f32.mrb[0].mxu0
        %v2888 = vpop.f32.mrb[0].mxu0
        %v2889 = vadd.f32 %v2797, %v2888
        %v2890 = vpop.f32.mrb[0].mxu0
        %2891 = vmatprep.mubr.bf16.mxu0 0
        %2892 = vmatmul.mubr.bf16.gmra.mrb[0].mxu0 %v2822
        %v2893 = vpop.f32.mrb[0].mxu0
        %v2894 = vadd.f32 %v2797, %v2893
        %v2895 = vpop.f32.mrb[0].mxu0
        %v2896 = vpop.f32.mrb[0].mxu0
        %v2897 = vadd.f32 %v2797, %v2896
        %v2898 = vpop.f32.mrb[0].mxu0
        %2899 = vmatprep.mubr.bf16.mxu0 0
        %2900 = vmatmul.mubr.bf16.gmra.mrb[0].mxu0 %v2825
        %v2901 = vpop.f32.mrb[0].mxu0
        %v2902 = vadd.f32 %v2797, %v2901
        %v2903 = vpop.f32.mrb[0].mxu0
        %v2904 = vpop.f32.mrb[0].mxu0
        %v2905 = vadd.f32 %v2797, %v2904
        %v2906 = vpop.f32.mrb[0].mxu0
        %2907 = vmatprep.mubr.bf16.mxu0 0
        %2908 = vmatmul.mubr.bf16.gmra.mrb[0].mxu0 %v2828
        %v2909 = vpop.f32.mrb[0].mxu0
        %v2910 = vadd.f32 %v2797, %v2909
        %v2911 = vpop.f32.mrb[0].mxu0
        %v2912 = vpop.f32.mrb[0].mxu0
        %v2913 = vadd.f32 %v2797, %v2912
        %v2914 = vpop.f32.mrb[0].mxu0
        %2915 = vmatprep.mubr.bf16.mxu0 0
        %2916 = vmatmul.mubr.bf16.gmra.mrb[0].mxu0 %v2831
        %v2917 = vpop.f32.mrb[0].mxu0
        %v2918 = vadd.f32 %v2797, %v2917
        %v2919 = vpop.f32.mrb[0].mxu0
        %v2920 = vpop.f32.mrb[0].mxu0
        %v2921 = vadd.f32 %v2797, %v2920
        %v2922 = vpop.f32.mrb[0].mxu0
        %2923 = vmatprep.mubr.bf16.mxu0 0
        %2924 = vmatmul.mubr.bf16.gmra.mrb[0].mxu0 %v2834
        %v2925 = vpop.f32.mrb[0].mxu0
        %v2926 = vadd.f32 %v2797, %v2925
        %v2927 = vpop.f32.mrb[0].mxu0
        %v2928 = vpop.f32.mrb[0].mxu0
        %v2929 = vadd.f32 %v2797, %v2928
        %v2930 = vpop.f32.mrb[0].mxu0
        %2931 = vmatprep.mubr.bf16.mxu0 0
        %2932 = vmatmul.mubr.bf16.gmra.mrb[0].mxu0 %v2837
        %v2933 = vpop.f32.mrb[0].mxu0
        %v2934 = vadd.f32 %v2797, %v2933
        %v2935 = vpop.f32.mrb[0].mxu0
        %v2936 = vpop.f32.mrb[0].mxu0
        %v2937 = vadd.f32 %v2797, %v2936
        %v2938 = vpop.f32.mrb[0].mxu0
        %2939 = vdwg.mxu0
        %v2940 = vmax.f32 %v2878, 0.0
        %v2941 = vmax.f32 %v2881, 0.0
        %v2942 = vmax.f32 %v2886, 0.0
        %v2943 = vmax.f32 %v2889, 0.0
        %v2944 = vmax.f32 %v2894, 0.0
        %v2945 = vmax.f32 %v2897, 0.0
        %v2946 = vmax.f32 %v2902, 0.0
        %v2947 = vmax.f32 %v2905, 0.0
        %v2948 = vmax.f32 %v2910, 0.0
        %v2949 = vmax.f32 %v2913, 0.0
        %v2950 = vmax.f32 %v2918, 0.0
        %v2951 = vmax.f32 %v2921, 0.0
        %v2952 = vmax.f32 %v2926, 0.0
        %v2953 = vmax.f32 %v2929, 0.0
        %v2954 = vmax.f32 %v2934, 0.0
        %v2955 = vmax.f32 %v2937, 0.0
        %v2956 = vpack.c.bf16 %v2941, %v2940
        %v2957 = vpack.c.bf16 %v2943, %v2942
        %v2958 = vpack.c.bf16 %v2945, %v2944
        %v2959 = vpack.c.bf16 %v2947, %v2946
        %v2960 = vpack.c.bf16 %v2949, %v2948
        %v2961 = vpack.c.bf16 %v2951, %v2950
        %v2962 = vpack.c.bf16 %v2953, %v2952
        %v2963 = vpack.c.bf16 %v2955, %v2954
        %v2964 = vld [vmem:[%s7] sm:$0x3]
        %v2965 = vld [vmem:[%s8] sm:$0x1]
        %v2967 = vlaneseq
        %v2968 = vshrl.u32 %v2967, 7
        %v2969 = vsub.s32 0, %v2968
        %v2970 = vrot.slane %v2965, %v2969
        %v2973 = vsel %vm1283, %v2956, 0
        %v2976 = vsel %vm1283, %v2957, 0
        %v2979 = vsel %vm1283, %v2958, 0
        %v2982 = vsel %vm1283, %v2959, 0
        %v2985 = vsel %vm1283, %v2960, 0
        %v2988 = vsel %vm1283, %v2961, 0
        %v2991 = vsel %vm1283, %v2962, 0
        %v2994 = vsel %vm1283, %v2963, 0
        %v2997 = vsel %vm2839, %v2964, 0
        %2999 = vmatprep.subr.bf16.mxu0 0
        %3000 = vmatpush1.bf16.msra.mxu0 %v2997
        %3001 = vmatprep.subr.bf16.mxu0 0
        %3002 = vmatpush1.bf16.msra.mxu0 0
        %3003 = vmatprep.subr.bf16.mxu0 0
        %3004 = vmatpush1.bf16.msra.mxu0 0
        %3005 = vmatprep.subr.bf16.mxu0 0
        %3006 = vmatpush1.bf16.msra.mxu0 0
        %3007 = vmatprep.subr.bf16.mxu0 0
        %3008 = vmatpush1.bf16.msra.mxu0 0
        %3009 = vmatprep.subr.bf16.mxu0 0
        %3010 = vmatpush1.bf16.msra.mxu0 0
        %3011 = vmatprep.subr.bf16.mxu0 0
        %3012 = vmatpush1.bf16.msra.mxu0 0
        %3013 = vmatprep.subr.bf16.mxu0 0
        %3014 = vmatpush1.bf16.msra.mxu0 0
        %3015 = vmatprep.subr.bf16.mxu0 0
        %3016 = vmatpush1.bf16.msra.mxu0 0
        %3017 = vmatprep.subr.bf16.mxu0 0
        %3018 = vmatpush1.bf16.msra.mxu0 0
        %3019 = vmatprep.subr.bf16.mxu0 0
        %3020 = vmatpush1.bf16.msra.mxu0 0
        %3021 = vmatprep.subr.bf16.mxu0 0
        %3022 = vmatpush1.bf16.msra.mxu0 0
        %3023 = vmatprep.subr.bf16.mxu0 0
        %3024 = vmatpush1.bf16.msra.mxu0 0
        %3025 = vmatprep.subr.bf16.mxu0 0
        %3026 = vmatpush1.bf16.msra.mxu0 0
        %3027 = vmatprep.subr.bf16.mxu0 0
        %3028 = vmatpush1.bf16.msra.mxu0 0
        %3029 = vmatprep.subr.bf16.mxu0 0
        %3030 = vmatpush1.bf16.msra.mxu0 0
        %3031 = vmatprep.mubr.bf16.mxu0 0
        %3032 = vmatmul.mubr.bf16.gmra.mrb[0].mxu0 %v2973
        %v3033 = vpop.f32.mrb[0].mxu0
        %v3034 = vadd.f32 %v2970, %v3033
        %v3035 = vpop.f32.mrb[0].mxu0
        %v3036 = vpop.f32.mrb[0].mxu0
        %v3037 = vadd.f32 %v2970, %v3036
        %v3038 = vpop.f32.mrb[0].mxu0
        %3039 = vmatprep.mubr.bf16.mxu0 0
        %3040 = vmatmul.mubr.bf16.gmra.mrb[0].mxu0 %v2976
        %v3041 = vpop.f32.mrb[0].mxu0
        %v3042 = vadd.f32 %v2970, %v3041
        %v3043 = vpop.f32.mrb[0].mxu0
        %v3044 = vpop.f32.mrb[0].mxu0
        %v3045 = vadd.f32 %v2970, %v3044
        %v3046 = vpop.f32.mrb[0].mxu0
        %3047 = vmatprep.mubr.bf16.mxu0 0
        %3048 = vmatmul.mubr.bf16.gmra.mrb[0].mxu0 %v2979
        %v3049 = vpop.f32.mrb[0].mxu0
        %v3050 = vadd.f32 %v2970, %v3049
        %v3051 = vpop.f32.mrb[0].mxu0
        %v3052 = vpop.f32.mrb[0].mxu0
        %v3053 = vadd.f32 %v2970, %v3052
        %v3054 = vpop.f32.mrb[0].mxu0
        %3055 = vmatprep.mubr.bf16.mxu0 0
        %3056 = vmatmul.mubr.bf16.gmra.mrb[0].mxu0 %v2982
        %v3057 = vpop.f32.mrb[0].mxu0
        %v3058 = vadd.f32 %v2970, %v3057
        %v3059 = vpop.f32.mrb[0].mxu0
        %v3060 = vpop.f32.mrb[0].mxu0
        %v3061 = vadd.f32 %v2970, %v3060
        %v3062 = vpop.f32.mrb[0].mxu0
        %3063 = vmatprep.mubr.bf16.mxu0 0
        %3064 = vmatmul.mubr.bf16.gmra.mrb[0].mxu0 %v2985
        %v3065 = vpop.f32.mrb[0].mxu0
        %v3066 = vadd.f32 %v2970, %v3065
        %v3067 = vpop.f32.mrb[0].mxu0
        %v3068 = vpop.f32.mrb[0].mxu0
        %v3069 = vadd.f32 %v2970, %v3068
        %v3070 = vpop.f32.mrb[0].mxu0
        %3071 = vmatprep.mubr.bf16.mxu0 0
        %3072 = vmatmul.mubr.bf16.gmra.mrb[0].mxu0 %v2988
        %v3073 = vpop.f32.mrb[0].mxu0
        %v3074 = vadd.f32 %v2970, %v3073
        %v3075 = vpop.f32.mrb[0].mxu0
        %v3076 = vpop.f32.mrb[0].mxu0
        %v3077 = vadd.f32 %v2970, %v3076
        %v3078 = vpop.f32.mrb[0].mxu0
        %3079 = vmatprep.mubr.bf16.mxu0 0
        %3080 = vmatmul.mubr.bf16.gmra.mrb[0].mxu0 %v2991
        %v3081 = vpop.f32.mrb[0].mxu0
        %v3082 = vadd.f32 %v2970, %v3081
        %v3083 = vpop.f32.mrb[0].mxu0
        %v3084 = vpop.f32.mrb[0].mxu0
        %v3085 = vadd.f32 %v2970, %v3084
        %v3086 = vpop.f32.mrb[0].mxu0
        %3087 = vmatprep.mubr.bf16.mxu0 0
        %3088 = vmatmul.mubr.bf16.gmra.mrb[0].mxu0 %v2994
        %v3089 = vpop.f32.mrb[0].mxu0
        %v3090 = vadd.f32 %v2970, %v3089
        %v3091 = vpop.f32.mrb[0].mxu0
        %v3092 = vpop.f32.mrb[0].mxu0
        %v3093 = vadd.f32 %v2970, %v3092
        %v3094 = vpop.f32.mrb[0].mxu0
        %3095 = vdwg.mxu0
        %v3096 = vunpack.c.l.bf16 %v493
        %v3097 = vunpack.c.l.bf16 %v494
        %v3098 = vunpack.c.l.bf16 %v495
        %v3099 = vunpack.c.l.bf16 %v496
        %v3100 = vunpack.c.l.bf16 %v497
        %v3101 = vunpack.c.l.bf16 %v498
        %v3102 = vunpack.c.l.bf16 %v499
        %v3103 = vunpack.c.l.bf16 %v500
        %v3104 = vunpack.c.l.bf16 %v501
        %v3105 = vunpack.c.l.bf16 %v502
        %v3106 = vunpack.c.l.bf16 %v503
        %v3107 = vunpack.c.l.bf16 %v504
        %v3108 = vunpack.c.l.bf16 %v505
        %v3109 = vunpack.c.l.bf16 %v506
        %v3110 = vunpack.c.l.bf16 %v507
        %v3111 = vunpack.c.l.bf16 %v508
        %v3112 = vadd.f32 %v3034, %v3096
        %v3113 = vadd.f32 %v3037, %v3097
        %v3114 = vadd.f32 %v3042, %v3098
        %v3115 = vadd.f32 %v3045, %v3099
        %v3116 = vadd.f32 %v3050, %v3100
        %v3117 = vadd.f32 %v3053, %v3101
        %v3118 = vadd.f32 %v3058, %v3102
        %v3119 = vadd.f32 %v3061, %v3103
        %v3120 = vadd.f32 %v3066, %v3104
        %v3121 = vadd.f32 %v3069, %v3105
        %v3122 = vadd.f32 %v3074, %v3106
        %v3123 = vadd.f32 %v3077, %v3107
        %v3124 = vadd.f32 %v3082, %v3108
        %v3125 = vadd.f32 %v3085, %v3109
        %v3126 = vadd.f32 %v3090, %v3110
        %v3127 = vadd.f32 %v3093, %v3111
        %v3128 = vmax.f32 %v3112, 0.0
        %v3129 = vmax.f32 %v3113, 0.0
        %v3130 = vmax.f32 %v3114, 0.0
        %v3131 = vmax.f32 %v3115, 0.0
        %v3132 = vmax.f32 %v3116, 0.0
        %v3133 = vmax.f32 %v3117, 0.0
        %v3134 = vmax.f32 %v3118, 0.0
        %v3135 = vmax.f32 %v3119, 0.0
        %v3136 = vmax.f32 %v3120, 0.0
        %v3137 = vmax.f32 %v3121, 0.0
        %v3138 = vmax.f32 %v3122, 0.0
        %v3139 = vmax.f32 %v3123, 0.0
        %v3140 = vmax.f32 %v3124, 0.0
        %v3141 = vmax.f32 %v3125, 0.0
        %v3142 = vmax.f32 %v3126, 0.0
        %v3143 = vmax.f32 %v3127, 0.0
        %3144 = vst.msk [vmem:[%s442] sm:$0xff] %vm561, %v3128
        %3145 = vst.msk [vmem:[%s442 + $0x8] sm:$0xff] %vm561, %v3129
        %3146 = vst.msk [vmem:[%s442 + $0x10] sm:$0xff] %vm561, %v3130
        %3147 = vst.msk [vmem:[%s442 + $0x18] sm:$0xff] %vm561, %v3131
        %3148 = vst.msk [vmem:[%s442 + $0x20] sm:$0xff] %vm561, %v3132
        %3149 = vst.msk [vmem:[%s442 + $0x28] sm:$0xff] %vm561, %v3133
        %3150 = vst.msk [vmem:[%s442 + $0x30] sm:$0xff] %vm561, %v3134
        %3151 = vst.msk [vmem:[%s442 + $0x38] sm:$0xff] %vm561, %v3135
        %3152 = vst.msk [vmem:[%s442 + $0x40] sm:$0xff] %vm561, %v3136
        %3153 = vst.msk [vmem:[%s442 + $0x48] sm:$0xff] %vm561, %v3137
        %3154 = vst.msk [vmem:[%s442 + $0x50] sm:$0xff] %vm561, %v3138
        %3155 = vst.msk [vmem:[%s442 + $0x58] sm:$0xff] %vm561, %v3139
        %3156 = vst.msk [vmem:[%s442 + $0x60] sm:$0xff] %vm561, %v3140
        %3157 = vst.msk [vmem:[%s442 + $0x68] sm:$0xff] %vm561, %v3141
        %3158 = vst.msk [vmem:[%s442 + $0x70] sm:$0xff] %vm561, %v3142
        %3159 = vst.msk [vmem:[%s442 + $0x78] sm:$0xff] %vm561, %v3143
        %s3160 = sand.u32 %s271, 1
        %s3161 = scalar_lea.sflag [#allocation5], %s3160
        %s3162 = sand.u32 %s271, 1
        %s3163 = smul.addr %s3162, 128
        %s3164 = scalar_lea.vmem [#allocation4], %s3163
        // Predicated region
        $region57: #{bottleneck_forward_nhwc.1} parent=55 // pred_check
          %p3165 = pneg %p281
        $region58: #{bottleneck_forward_nhwc.1} parent=55 // pred_check_branch
          %3167 = sbr.rel (%p3165) target = $region60
        $region59: #{bottleneck_forward_nhwc.1} parent=55 // pred_region
          %s3168 = smul.u32 8, %s28
          %s3170 = ssub.s32 2048, 2048
          %3171 = vsyncadd %s3161, %s3170
          %s3172 = smul.addr %s3168, 2
          %s3173 = smul.addr %s27, 32
          %s3174 = sadd.s32 %s3172, %s3173
          %s3175 = smul.addr %s3174, 128
          %s3176 = scalar_lea.hbm %s9, %s3175
          %s3177 = sshll.u32 %s3164, 4
          %s3178 = int_to_ptr.vmem [resolvable:$true] %s3177
          %3183 = dma.vmem_to_hbm [thread:$0]  %s3178, 2048, %s3176, %s3161, 128, 128, 8
        $region60: #{bottleneck_forward_nhwc.1} parent=55 // pred_fallthru
          _
      $region56: #{bottleneck_forward_nhwc.1} parent=5 // pred_fallthru
        _
      %p3184 = scmp.le.s32.totalorder 2, %s18
      // Predicated region
      $region61: #{bottleneck_forward_nhwc.1} parent=5 // pred_check
        %p3185 = pneg %p3184
      $region62: #{bottleneck_forward_nhwc.1} parent=5 // pred_check_branch
        %3187 = sbr.rel (%p3185) target = $region64
      $region63: #{bottleneck_forward_nhwc.1} parent=5 // pred_region
        %s3188 = ssub.s32 %s18, 2
        // Predicated region
        $region65: #{bottleneck_forward_nhwc.1} parent=63 // pred_check
          %p3189 = pneg %p287
        $region66: #{bottleneck_forward_nhwc.1} parent=63 // pred_check_branch
          %3191 = sbr.rel (%p3189) target = $region68
        $region67: #{bottleneck_forward_nhwc.1} parent=63 // pred_region
          %s3192 = sand.u32 %s272, 1
          %s3193 = scalar_lea.sflag [#allocation5], %s3192
          %s3194 = sand.u32 %s272, 1
          %s3195 = smul.addr %s3194, 128
          %s3196 = scalar_lea.vmem [#allocation4], %s3195
          %3197 = dma.done %s3193, 2048
        $region68: #{bottleneck_forward_nhwc.1} parent=63 // pred_fallthru
          _
      $region64: #{bottleneck_forward_nhwc.1} parent=5 // pred_fallthru
        _
    $region6: #{bottleneck_forward_nhwc.1} parent=1 // loop_footer
      %s22 = sadd.s32 1, %s18
    $region7: #{bottleneck_forward_nhwc.1} parent=1 // loop_footer_branch
      %17 = sbr.rel target = $region3
    $region8: #{bottleneck_forward_nhwc.1} parent=1 // loop_exit
      _
    %3198 = vsyncpa [#allocation5], 1
    %s3199 = scalar_lea.sflag [#allocation5], 1
    %3200 = vsyncpa %s3199, 1

</llo_original>
